<compile_context>
chip_gen: v5e
topology: v5e:2x2
jax: 0.10.0
libtpu: 0.0.40
codegen_flags: <defaults>
</compile_context>

<pallas_src>
import numpy as np
import jax
import jax.numpy as jnp
from jax.experimental import pallas as pl
from jax.experimental.pallas import tpu as pltpu

# ----------------------------- configuration --------------------------------
N_RAYS = 256         # number of rays N
TB = 128             # rays per kernel block
S = 8                # fixed samples per ray
M = S * TB           # samples per block (lane dim of all big matmuls)
NX = NY = NZ = 8     # world_size
LOG2_NZ = 3
K0_DIM = 12          # rgbnet_dim
GC = 16              # fused grid channels: 1 density + 12 features + 3 pad
VIEWBASE_PE = 4
RGBNET_WIDTH = 128
DIM_VIEW = 3 + 3 * VIEWBASE_PE * 2      # 27
DIM_K0VIEW = K0_DIM - 3                 # 9 (rgbnet_direct = False)
DIM0 = DIM_K0VIEW + DIM_VIEW            # 36
DV_PAD = 32                             # view-embedding rows: 27 + 1(bias) + 4 pad

XYZ_MIN = (-1.0, -1.0, -1.0)
XYZ_MAX = (1.0, 1.0, 1.0)
DX = (XYZ_MAX[0] - XYZ_MIN[0]) / (NX - 1)       # voxel_size
ALPHA_INIT = 1e-2
ACT_SHIFT = float(np.log(1.0 / (1.0 - ALPHA_INIT) - 1.0))
STEPSIZE = 0.5
NEAR = 0.1
BG = 1.0
DELTA = 0.1 * STEPSIZE * (DX / DX)              # voxel_size / voxel_size_base == 1

assert NZ == (1 << LOG2_NZ)


def _softplus(x):
    # numerically-stable softplus, identical formula in kernel & reference
    return jnp.maximum(x, 0.0) + jnp.log(1.0 + jnp.exp(-jnp.abs(x)))


# ------------------------------- Pallas kernel ------------------------------
def dvgo_kernel(pts_ref, vemb_ref, gr_ref, w0kT_ref, w0vT_ref,
                w1T_ref, b1_ref, w2T_ref, b2_ref, psamp_ref, pray_ref):
    p = pts_ref[...]                       # [3, M] f32 (samples along lanes)
    px = p[0:1, :]
    py = p[1:2, :]
    pz = p[2:3, :]

    sx = (NX - 1) / (XYZ_MAX[0] - XYZ_MIN[0])
    sy = (NY - 1) / (XYZ_MAX[1] - XYZ_MIN[1])
    sz = (NZ - 1) / (XYZ_MAX[2] - XYZ_MIN[2])

    gx = (px - XYZ_MIN[0]) * sx            # [1, M] grid coordinates
    gy = (py - XYZ_MIN[1]) * sy
    gz = (pz - XYZ_MIN[2]) * sz
    fgx = jnp.floor(gx); fx = gx - fgx; ix = fgx.astype(jnp.int32)
    fgy = jnp.floor(gy); fy = gy - fgy; iy = fgy.astype(jnp.int32)
    fgz = jnp.floor(gz); fz = gz - fgz; iz = fgz.astype(jnp.int32)

    # ---- (y,z) one-hot interpolation matrix [NY*NZ, M], batched over all S
    # steps.  Indices outside the grid never match a row -> implicit zero
    # padding (reproduces grid_sample zero padding).
    rj = jax.lax.broadcasted_iota(jnp.int32, (NY * NZ, M), 0) >> LOG2_NZ   # y row
    rk = jax.lax.broadcasted_iota(jnp.int32, (NZ, M), 0)                   # z row
    wy64 = (jnp.where(rj == iy, 1.0 - fy, 0.0) +
            jnp.where(rj == iy + 1, fy, 0.0))                              # [64, M]
    wz8 = (jnp.where(rk == iz, 1.0 - fz, 0.0) +
           jnp.where(rk == iz + 1, fz, 0.0))                               # [8, M]
    wz64 = jnp.concatenate([wz8] * NY, axis=0)     # aligned 8-row tile copies
    ayz = (wy64 * wz64).astype(jnp.bfloat16)                               # [64, M]

    # (y,z) contraction on the MXU: [NX*GC, 64] @ [64, M] -> [NX*GC, M]
    t1 = jnp.dot(gr_ref[...], ayz, preferred_element_type=jnp.float32)

    # x contraction on the VPU: 8 iterations on aligned [GC, M] slices
    feat = jnp.zeros((GC, M), jnp.float32)
    for i in range(NX):
        wx = (jnp.where(ix == i, 1.0 - fx, 0.0) +
              jnp.where(ix == i - 1, fx, 0.0))                             # [1, M]
        feat = feat + wx * t1[i * GC:(i + 1) * GC, :]

    density = feat[0:1, :]                                                 # [1, M]
    k0_diff = feat[1:4, :]                                                 # [3, M]
    # Raw2Alpha: alpha = 1 - exp(-softplus(density + shift) * delta)
    alpha = 1.0 - jnp.exp(-_softplus(density + ACT_SHIFT) * DELTA)         # [1, M]

    # ---- rgbnet MLP, batched over all S*TB samples of the block.
    # Layer 0 = k0 term + view term; the view term uses the pre-replicated
    # view embedding (b0 folded in via its ones-row) -> no in-kernel replica.
    h = (jnp.dot(w0kT_ref[...], feat.astype(jnp.bfloat16),
                 preferred_element_type=jnp.float32) +
         jnp.dot(w0vT_ref[...], vemb_ref[...],
                 preferred_element_type=jnp.float32))                      # [128, M]
    h = jnp.maximum(h, 0.0)
    h = jnp.dot(w1T_ref[...], h.astype(jnp.bfloat16),
                preferred_element_type=jnp.float32) + b1_ref[...]
    h = jnp.maximum(h, 0.0)
    logit = jnp.dot(w2T_ref[...], h.astype(jnp.bfloat16),
                    preferred_element_type=jnp.float32) + b2_ref[...]      # [3, M]
    rgb = 1.0 / (1.0 + jnp.exp(-(logit + k0_diff)))    # sigmoid(logit + k0_diffuse)

    # ---- per-sample rows that do NOT depend on the transmittance recursion
    # (direct row-range stores, no sublane concatenation)
    zero3 = jnp.zeros((3, TB), jnp.float32)
    for s in range(S):
        lo = s * TB
        psamp_ref[s, 1:2, :] = alpha[:, lo:lo + TB]
        psamp_ref[s, 2:5, :] = rgb[:, lo:lo + TB]
        psamp_ref[s, 5:8, :] = zero3

    # ---- Alphas2Weights transmittance recursion (serial over S) + compositing
    trans = jnp.ones((1, TB), jnp.float32)
    rgb_m = jnp.zeros((3, TB), jnp.float32)
    depth = jnp.zeros((1, TB), jnp.float32)
    for s in range(S):
        lo = s * TB
        a_s = alpha[:, lo:lo + TB]                                         # [1, TB]
        w_s = a_s * trans
        psamp_ref[s, 0:1, :] = w_s
        rgb_m = rgb_m + w_s * rgb[:, lo:lo + TB]
        depth = depth + w_s * float(s)
        trans = trans * (1.0 - a_s)

    # packed per-ray channels: [rgb_marched(3), alphainv_last, depth, 0, 0, 0]
    pray_ref[0:3, :] = rgb_m + trans * BG
    pray_ref[3:4, :] = trans
    pray_ref[4:5, :] = depth
    pray_ref[5:8, :] = zero3


# --------------------------------- wrapper -----------------------------------
def dvgo_forward(density_grid, feature_grid, xyz_min, xyz_max,
                 rays_o, rays_d, viewdirs, params,
                 near=NEAR, stepsize=STEPSIZE, bg=BG, render_depth=True):
    assert np.allclose(np.asarray(xyz_min), XYZ_MIN)
    assert np.allclose(np.asarray(xyz_max), XYZ_MAX)
    assert bg == BG
    N = rays_o.shape[0]
    assert N % TB == 0
    NB = N // TB

    # fixed-step ray sampling (stand-in for sample_pts_on_rays)
    stepdist = stepsize * DX
    t = near + stepdist * jnp.arange(S, dtype=jnp.float32)                 # [S]
    pts_sm = rays_o[None, :, :] + rays_d[None, :, :] * t[:, None, None]    # [S,N,3]
    # per ray-block, samples along the lane axis (step-major within the block)
    ptsT = (pts_sm.reshape(S, NB, TB, 3)
                  .transpose(1, 3, 0, 2)
                  .reshape(NB, 3, M))                                      # [NB,3,M]

    # view-direction positional embedding, replicated over the S steps of each
    # block (step-major lanes), with a ones-row (bias) and zero padding to 32.
    viewfreq = jnp.asarray([2.0 ** i for i in range(VIEWBASE_PE)], jnp.float32)
    emb = (viewdirs[..., None] * viewfreq).reshape(N, 3 * VIEWBASE_PE)
    vemb = jnp.concatenate([viewdirs, jnp.sin(emb), jnp.cos(emb)], axis=-1)  # [N,27]
    vemb_b = vemb.reshape(NB, TB, DIM_VIEW).transpose(0, 2, 1)               # [NB,27,TB]
    vemb_b = jnp.concatenate(
        [vemb_b,
         jnp.ones((NB, 1, TB), jnp.float32),
         jnp.zeros((NB, DV_PAD - DIM_VIEW - 1, TB), jnp.float32)], axis=1)   # [NB,32,TB]
    vembM = jnp.tile(vemb_b, (1, 1, S)).astype(jnp.bfloat16)                 # [NB,32,M]

    # fused grid: channel 0 = density, 1..12 = k0 features, 13..15 = zero pad,
    # laid out [(x, channel), (y, z)] for the in-kernel (y,z) MXU contraction
    d = density_grid[0, 0]                                                 # [8,8,8]
    f = feature_grid[0]                                                    # [12,8,8,8]
    gcat = jnp.concatenate(
        [d[None], f, jnp.zeros((GC - 1 - K0_DIM, NX, NY, NZ), jnp.float32)], axis=0)
    gr = (jnp.transpose(gcat, (1, 0, 2, 3))
             .reshape(NX * GC, NY * NZ)
             .astype(jnp.bfloat16))                                        # [128, 64]

    # MLP weights: transposed, bf16 for the MXU.  k0-part of W0 padded so it
    # contracts directly against the fused 16-channel interpolation result;
    # view-part of W0 widened to 32 columns with b0 folded in (ones row).
    W0 = params["W0"]
    w0kT = jnp.concatenate(
        [jnp.zeros((RGBNET_WIDTH, 4), jnp.float32),
         W0[:DIM_K0VIEW].T,
         jnp.zeros((RGBNET_WIDTH, GC - 4 - DIM_K0VIEW), jnp.float32)],
        axis=1).astype(jnp.bfloat16)                                       # [128, 16]
    w0vT = jnp.concatenate(
        [W0[DIM_K0VIEW:].T,                                                # [128, 27]
         jnp.reshape(params["b0"], (RGBNET_WIDTH, 1)),                     # bias row
         jnp.zeros((RGBNET_WIDTH, DV_PAD - DIM_VIEW - 1), jnp.float32)],
        axis=1).astype(jnp.bfloat16)                                       # [128, 32]
    w1T = params["W1"].T.astype(jnp.bfloat16)                              # [128,128]
    b1T = jnp.reshape(params["b1"], (RGBNET_WIDTH, 1)).astype(jnp.float32)
    w2T = params["W2"].T.astype(jnp.bfloat16)                              # [3, 128]
    b2T = jnp.reshape(params["b2"], (3, 1)).astype(jnp.float32)

    out_shapes = (
        jax.ShapeDtypeStruct((NB, S, 8, TB), jnp.float32),   # packed per-sample
        jax.ShapeDtypeStruct((NB, 8, TB), jnp.float32),      # packed per-ray
    )
    in_specs = [
        pl.BlockSpec((None, 3, M), lambda i: (i, 0, 0)),                  # pts
        pl.BlockSpec((None, DV_PAD, M), lambda i: (i, 0, 0)),             # view emb
        pl.BlockSpec((NX * GC, NY * NZ), lambda i: (0, 0)),               # fused grid
        pl.BlockSpec((RGBNET_WIDTH, GC), lambda i: (0, 0)),               # W0 (k0)
        pl.BlockSpec((RGBNET_WIDTH, DV_PAD), lambda i: (0, 0)),           # W0 (view)+b0
        pl.BlockSpec((RGBNET_WIDTH, RGBNET_WIDTH), lambda i: (0, 0)),     # W1
        pl.BlockSpec((RGBNET_WIDTH, 1), lambda i: (0, 0)),                # b1
        pl.BlockSpec((3, RGBNET_WIDTH), lambda i: (0, 0)),                # W2
        pl.BlockSpec((3, 1), lambda i: (0, 0)),                           # b2
    ]
    out_specs = (
        pl.BlockSpec((None, S, 8, TB), lambda i: (i, 0, 0, 0)),
        pl.BlockSpec((None, 8, TB), lambda i: (i, 0, 0)),
    )

    flops = 2 * N * S * ((NX * GC) * (NY * NZ)
                         + RGBNET_WIDTH * (GC + DV_PAD)
                         + RGBNET_WIDTH * RGBNET_WIDTH
                         + 3 * RGBNET_WIDTH)
    transcendentals = 5 * N * S
    bytes_accessed = int(
        sum(int(np.prod(a.shape)) * a.dtype.itemsize
            for a in (ptsT, vembM, gr, w0kT, w0vT, w1T, b1T, w2T, b2T))
        + NB * S * 8 * TB * 4 + NB * 8 * TB * 4)

    psamp, pray = pl.pallas_call(
        dvgo_kernel,
        out_shape=out_shapes,
        grid=(NB,),
        in_specs=in_specs,
        out_specs=out_specs,
        compiler_params=pltpu.CompilerParams(dimension_semantics=("parallel",)),
        cost_estimate=pl.CostEstimate(flops=flops,
                                      transcendentals=transcendentals,
                                      bytes_accessed=bytes_accessed),
    )(ptsT, vembM, gr, w0kT, w0vT, w1T, b1T, w2T, b2T)

    # unpack block-major slabs into the flat ray-major (torch) ordering
    weights = jnp.transpose(psamp[:, :, 0, :], (0, 2, 1)).reshape(N * S)
    raw_alpha = jnp.transpose(psamp[:, :, 1, :], (0, 2, 1)).reshape(N * S)
    raw_rgb = jnp.transpose(psamp[:, :, 2:5, :], (0, 3, 1, 2)).reshape(N * S, 3)
    rgb_marched = jnp.transpose(pray[:, 0:3, :], (0, 2, 1)).reshape(N, 3)
    alphainv_last = pray[:, 3, :].reshape(N)
    depth = pray[:, 4, :].reshape(N)

    ray_id = jnp.repeat(jnp.arange(N, dtype=jnp.int32), S)
    step_id = jnp.tile(jnp.arange(S, dtype=jnp.int32), N)

    ret = {
        "alphainv_last": alphainv_last,
        "weights": weights,
        "rgb_marched": rgb_marched,
        "raw_alpha": raw_alpha,
        "raw_rgb": raw_rgb,
        "ray_id": ray_id,
        "step_id": step_id,
    }
    if render_depth:
        ret["depth"] = depth
    return ret


# ----------------------- pure-JAX reference (for checking) -------------------
def reference_forward(density_grid, feature_grid, rays_o, rays_d, viewdirs, params):
    N = rays_o.shape[0]
    NVOX = NX * NY * NZ
    stepdist = STEPSIZE * DX
    t = NEAR + stepdist * jnp.arange(S, dtype=jnp.float32)
    pts = (rays_o[:, None, :] + rays_d[:, None, :] * t[None, :, None]).reshape(N * S, 3)
    dflat = jnp.transpose(density_grid[0], (1, 2, 3, 0)).reshape(NVOX, 1)
    fflat = jnp.transpose(feature_grid[0], (1, 2, 3, 0)).reshape(NVOX, K0_DIM)

    def interp(gridf, p):
        mn = jnp.asarray(XYZ_MIN)
        mx = jnp.asarray(XYZ_MAX)
        uvw = (p - mn) / (mx - mn) * jnp.asarray([NX - 1, NY - 1, NZ - 1], jnp.float32)
        i0 = jnp.floor(uvw)
        fr = uvw - i0
        i0 = i0.astype(jnp.int32)
        dims = jnp.asarray([NX, NY, NZ])
        out = jnp.zeros((p.shape[0], gridf.shape[1]), jnp.float32)
        for a in (0, 1):
            for b in (0, 1):
                for c in (0, 1):
                    off = jnp.asarray([a, b, c])
                    ci = i0 + off
                    wgt = jnp.prod(jnp.where(off == 1, fr, 1.0 - fr), axis=-1)
                    valid = jnp.all((ci >= 0) & (ci < dims), axis=-1)
                    cic = jnp.clip(ci, 0, dims - 1)
                    flat = cic[:, 0] * (NY * NZ) + cic[:, 1] * NZ + cic[:, 2]
                    out = out + (wgt * valid)[:, None] * gridf[flat]
        return out

    density = interp(dflat, pts)[:, 0]
    alpha = 1.0 - jnp.exp(-_softplus(density + ACT_SHIFT) * DELTA)
    alpha_rs = alpha.reshape(N, S)
    one_minus = 1.0 - alpha_rs
    Tcum = jnp.concatenate(
        [jnp.ones((N, 1)), jnp.cumprod(one_minus, axis=1)[:, :-1]], axis=1)
    weights = alpha_rs * Tcum
    alphainv_last = jnp.prod(one_minus, axis=1)

    k0 = interp(fflat, pts)
    viewfreq = jnp.asarray([2.0 ** i for i in range(VIEWBASE_PE)], jnp.float32)
    emb = (viewdirs[..., None] * viewfreq).reshape(N, -1)
    vemb = jnp.concatenate([viewdirs, jnp.sin(emb), jnp.cos(emb)], -1)
    vemb_pts = jnp.repeat(vemb, S, axis=0)
    rgb_feat = jnp.concatenate([k0[:, 3:], vemb_pts], -1)
    h = jnp.maximum(rgb_feat @ params["W0"] + params["b0"], 0.0)
    h = jnp.maximum(h @ params["W1"] + params["b1"], 0.0)
    logit = h @ params["W2"] + params["b2"]
    rgb = 1.0 / (1.0 + jnp.exp(-(logit + k0[:, :3])))
    rgb_rs = rgb.reshape(N, S, 3)
    rgb_marched = jnp.sum(weights[..., None] * rgb_rs, axis=1) + alphainv_last[:, None] * BG
    depth = jnp.sum(weights * jnp.arange(S, dtype=jnp.float32)[None, :], axis=1)
    return rgb_marched, alphainv_last, weights.reshape(-1), rgb.reshape(-1, 3), depth


# ----------------------------------- main ------------------------------------
if __name__ == "__main__":
    key = jax.random.PRNGKey(0)
    keys = jax.random.split(key, 10)

    density_grid = jax.random.normal(keys[0], (1, 1, NX, NY, NZ), jnp.float32)
    feature_grid = 0.5 * jax.random.normal(keys[1], (1, K0_DIM, NX, NY, NZ), jnp.float32)
    rays_o = jax.random.uniform(keys[2], (N_RAYS, 3), jnp.float32, -0.3, 0.3)
    rays_d = jax.random.normal(keys[3], (N_RAYS, 3), jnp.float32)
    rays_d = rays_d / jnp.linalg.norm(rays_d, axis=-1, keepdims=True)
    viewdirs = rays_d

    params = {
        "W0": jax.random.normal(keys[4], (DIM0, RGBNET_WIDTH), jnp.float32) / np.sqrt(DIM0),
        "b0": 0.01 * jax.random.normal(keys[5], (1, RGBNET_WIDTH), jnp.float32),
        "W1": jax.random.normal(keys[6], (RGBNET_WIDTH, RGBNET_WIDTH), jnp.float32) / np.sqrt(RGBNET_WIDTH),
        "b1": 0.01 * jax.random.normal(keys[7], (1, RGBNET_WIDTH), jnp.float32),
        "W2": jax.random.normal(keys[8], (RGBNET_WIDTH, 3), jnp.float32) / np.sqrt(RGBNET_WIDTH),
        "b2": jnp.zeros((1, 3), jnp.float32),   # nn.init.constant_(rgbnet[-1].bias, 0)
    }

    xyz_min = jnp.asarray(XYZ_MIN, jnp.float32)
    xyz_max = jnp.asarray(XYZ_MAX, jnp.float32)

    ret = dvgo_forward(density_grid, feature_grid, xyz_min, xyz_max,
                       rays_o, rays_d, viewdirs, params, render_depth=True)
    jax.block_until_ready(ret)

    rm_ref, al_ref, w_ref, rgb_ref, d_ref = reference_forward(
        density_grid, feature_grid, rays_o, rays_d, viewdirs, params)

    tol = dict(atol=2e-2, rtol=2e-2)
    assert np.allclose(np.asarray(ret["rgb_marched"]), np.asarray(rm_ref), **tol)
    assert np.allclose(np.asarray(ret["alphainv_last"]), np.asarray(al_ref), **tol)
    assert np.allclose(np.asarray(ret["weights"]), np.asarray(w_ref), **tol)
    assert np.allclose(np.asarray(ret["raw_rgb"]), np.asarray(rgb_ref), **tol)
    assert np.allclose(np.asarray(ret["depth"]), np.asarray(d_ref), **tol)

    print("KERNEL_OK")
</pallas_src>

<mosaic_0001>
module attributes {stable_mosaic.version = 11 : i64} {
  func.func @dvgo_kernel(%arg0: i32, %arg1: memref<1x3x1024xf32, #tpu.memory_space<vmem>>, %arg2: memref<1x32x1024xbf16, #tpu.memory_space<vmem>>, %arg3: memref<128x64xbf16, #tpu.memory_space<vmem>>, %arg4: memref<128x16xbf16, #tpu.memory_space<vmem>>, %arg5: memref<128x32xbf16, #tpu.memory_space<vmem>>, %arg6: memref<128x128xbf16, #tpu.memory_space<vmem>>, %arg7: memref<128x1xf32, #tpu.memory_space<vmem>>, %arg8: memref<3x128xbf16, #tpu.memory_space<vmem>>, %arg9: memref<3x1xf32, #tpu.memory_space<vmem>>, %arg10: memref<1x8x8x128xf32, #tpu.memory_space<vmem>>, %arg11: memref<1x8x128xf32, #tpu.memory_space<vmem>>) attributes {dimension_semantics = [#tpu.dimension_semantics<parallel>], iteration_bounds = array<i64: 2>, scalar_prefetch = 0 : i64, scratch_operands = 0 : i64, tpu.core_type = #tpu.core_type<tc>, window_params = [{transform_indices = @transform_0, window_bounds = array<i64: 1, 3, 1024>}, {transform_indices = @transform_1, window_bounds = array<i64: 1, 32, 1024>}, {pipeline_mode = #tpu.pipeline_mode<synchronous>, transform_indices = @transform_2, window_bounds = array<i64: 128, 64>}, {pipeline_mode = #tpu.pipeline_mode<synchronous>, transform_indices = @transform_3, window_bounds = array<i64: 128, 16>}, {pipeline_mode = #tpu.pipeline_mode<synchronous>, transform_indices = @transform_4, window_bounds = array<i64: 128, 32>}, {pipeline_mode = #tpu.pipeline_mode<synchronous>, transform_indices = @transform_5, window_bounds = array<i64: 128, 128>}, {pipeline_mode = #tpu.pipeline_mode<synchronous>, transform_indices = @transform_6, window_bounds = array<i64: 128, 1>}, {pipeline_mode = #tpu.pipeline_mode<synchronous>, transform_indices = @transform_7, window_bounds = array<i64: 3, 128>}, {pipeline_mode = #tpu.pipeline_mode<synchronous>, transform_indices = @transform_8, window_bounds = array<i64: 3, 1>}, {transform_indices = @transform_9, window_bounds = array<i64: 1, 8, 8, 128>}, {transform_indices = @transform_10, window_bounds = array<i64: 1, 8, 128>}]} {
    %c0 = arith.constant 0 : index
    %c0_0 = arith.constant 0 : index
    %c0_1 = arith.constant 0 : index
    %0 = vector.load %arg1[%c0, %c0_0, %c0_1] : memref<1x3x1024xf32, #tpu.memory_space<vmem>>, vector<1x3x1024xf32>
    %1 = vector.shape_cast %0 : vector<1x3x1024xf32> to vector<3x1024xf32>
    %2 = vector.extract_strided_slice %1 {offsets = [0, 0], sizes = [1, 1024], strides = [1, 1]} : vector<3x1024xf32> to vector<1x1024xf32>
    %3 = vector.extract_strided_slice %1 {offsets = [1, 0], sizes = [1, 1024], strides = [1, 1]} : vector<3x1024xf32> to vector<1x1024xf32>
    %4 = vector.extract_strided_slice %1 {offsets = [2, 0], sizes = [1, 1024], strides = [1, 1]} : vector<3x1024xf32> to vector<1x1024xf32>
    %cst = arith.constant -1.000000e+00 : f32
    %5 = vector.broadcast %cst : f32 to vector<1x1024xf32>
    %6 = arith.subf %2, %5 : vector<1x1024xf32>
    %cst_2 = arith.constant 3.500000e+00 : f32
    %7 = vector.broadcast %cst_2 : f32 to vector<1x1024xf32>
    %8 = arith.mulf %6, %7 : vector<1x1024xf32>
    %cst_3 = arith.constant -1.000000e+00 : f32
    %9 = vector.broadcast %cst_3 : f32 to vector<1x1024xf32>
    %10 = arith.subf %3, %9 : vector<1x1024xf32>
    %cst_4 = arith.constant 3.500000e+00 : f32
    %11 = vector.broadcast %cst_4 : f32 to vector<1x1024xf32>
    %12 = arith.mulf %10, %11 : vector<1x1024xf32>
    %cst_5 = arith.constant -1.000000e+00 : f32
    %13 = vector.broadcast %cst_5 : f32 to vector<1x1024xf32>
    %14 = arith.subf %4, %13 : vector<1x1024xf32>
    %cst_6 = arith.constant 3.500000e+00 : f32
    %15 = vector.broadcast %cst_6 : f32 to vector<1x1024xf32>
    %16 = arith.mulf %14, %15 : vector<1x1024xf32>
    %17 = math.floor %8 : vector<1x1024xf32>
    %18 = arith.subf %8, %17 : vector<1x1024xf32>
    %19 = arith.fptosi %17 : vector<1x1024xf32> to vector<1x1024xi32>
    %20 = math.floor %12 : vector<1x1024xf32>
    %21 = arith.subf %12, %20 : vector<1x1024xf32>
    %22 = arith.fptosi %20 : vector<1x1024xf32> to vector<1x1024xi32>
    %23 = math.floor %16 : vector<1x1024xf32>
    %24 = arith.subf %16, %23 : vector<1x1024xf32>
    %25 = arith.fptosi %23 : vector<1x1024xf32> to vector<1x1024xi32>
    %26 = tpu.iota {dimensions = array<i32: 0>} : vector<64x1024xi32>
    %c3_i32 = arith.constant 3 : i32
    %27 = vector.broadcast %c3_i32 : i32 to vector<64x1024xi32>
    %28 = arith.shrsi %26, %27 : vector<64x1024xi32>
    %29 = tpu.iota {dimensions = array<i32: 0>} : vector<8x1024xi32>
    %30 = vector.broadcast %22 : vector<1x1024xi32> to vector<64x1024xi32>
    %31 = arith.cmpi eq, %28, %30 : vector<64x1024xi32>
    %cst_7 = arith.constant 1.000000e+00 : f32
    %32 = vector.broadcast %cst_7 : f32 to vector<1x1024xf32>
    %33 = arith.subf %32, %21 : vector<1x1024xf32>
    %cst_8 = arith.constant 0.000000e+00 : f32
    %34 = vector.shape_cast %33 : vector<1x1024xf32> to vector<1x1024xf32>
    %35 = vector.broadcast %34 : vector<1x1024xf32> to vector<64x1024xf32>
    %36 = vector.broadcast %cst_8 : f32 to vector<64x1024xf32>
    %37 = arith.select %31, %35, %36 : vector<64x1024xi1>, vector<64x1024xf32>
    %c1_i32 = arith.constant 1 : i32
    %38 = vector.broadcast %c1_i32 : i32 to vector<1x1024xi32>
    %39 = arith.addi %22, %38 : vector<1x1024xi32>
    %40 = vector.broadcast %39 : vector<1x1024xi32> to vector<64x1024xi32>
    %41 = arith.cmpi eq, %28, %40 : vector<64x1024xi32>
    %cst_9 = arith.constant 0.000000e+00 : f32
    %42 = vector.shape_cast %21 : vector<1x1024xf32> to vector<1x1024xf32>
    %43 = vector.broadcast %42 : vector<1x1024xf32> to vector<64x1024xf32>
    %44 = vector.broadcast %cst_9 : f32 to vector<64x1024xf32>
    %45 = arith.select %41, %43, %44 : vector<64x1024xi1>, vector<64x1024xf32>
    %46 = arith.addf %37, %45 : vector<64x1024xf32>
    %47 = vector.broadcast %25 : vector<1x1024xi32> to vector<8x1024xi32>
    %48 = arith.cmpi eq, %29, %47 : vector<8x1024xi32>
    %cst_10 = arith.constant 1.000000e+00 : f32
    %49 = vector.broadcast %cst_10 : f32 to vector<1x1024xf32>
    %50 = arith.subf %49, %24 : vector<1x1024xf32>
    %cst_11 = arith.constant 0.000000e+00 : f32
    %51 = vector.shape_cast %50 : vector<1x1024xf32> to vector<1x1024xf32>
    %52 = vector.broadcast %51 : vector<1x1024xf32> to vector<8x1024xf32>
    %53 = vector.broadcast %cst_11 : f32 to vector<8x1024xf32>
    %54 = arith.select %48, %52, %53 : vector<8x1024xi1>, vector<8x1024xf32>
    %c1_i32_12 = arith.constant 1 : i32
    %55 = vector.broadcast %c1_i32_12 : i32 to vector<1x1024xi32>
    %56 = arith.addi %25, %55 : vector<1x1024xi32>
    %57 = vector.broadcast %56 : vector<1x1024xi32> to vector<8x1024xi32>
    %58 = arith.cmpi eq, %29, %57 : vector<8x1024xi32>
    %cst_13 = arith.constant 0.000000e+00 : f32
    %59 = vector.shape_cast %24 : vector<1x1024xf32> to vector<1x1024xf32>
    %60 = vector.broadcast %59 : vector<1x1024xf32> to vector<8x1024xf32>
    %61 = vector.broadcast %cst_13 : f32 to vector<8x1024xf32>
    %62 = arith.select %58, %60, %61 : vector<8x1024xi1>, vector<8x1024xf32>
    %63 = arith.addf %54, %62 : vector<8x1024xf32>
    %64 = tpu.concatenate %63, %63, %63, %63, %63, %63, %63, %63 in 0 : vector<8x1024xf32>, vector<8x1024xf32>, vector<8x1024xf32>, vector<8x1024xf32>, vector<8x1024xf32>, vector<8x1024xf32>, vector<8x1024xf32>, vector<8x1024xf32> -> vector<64x1024xf32>
    %65 = arith.mulf %46, %64 : vector<64x1024xf32>
    %66 = arith.truncf %65 : vector<64x1024xf32> to vector<64x1024xbf16>
    %c0_14 = arith.constant 0 : index
    %c0_15 = arith.constant 0 : index
    %67 = vector.load %arg3[%c0_14, %c0_15] : memref<128x64xbf16, #tpu.memory_space<vmem>>, vector<128x64xbf16>
    %cst_16 = arith.constant dense<0.000000e+00> : vector<128x1024xf32>
    %68 = tpu.matmul %67, %66, %cst_16 {dimension_numbers = #tpu.dot_dimension_numbers<[1], [0], [0], [1], [0, 0, 1, 1], [], []>} : vector<128x64xbf16>, vector<64x1024xbf16>, vector<128x1024xf32> -> vector<128x1024xf32>
    %cst_17 = arith.constant 0.000000e+00 : f32
    %69 = vector.broadcast %cst_17 : f32 to vector<16x1024xf32>
    %c0_i32 = arith.constant 0 : i32
    %70 = vector.broadcast %c0_i32 : i32 to vector<1x1024xi32>
    %71 = arith.cmpi eq, %19, %70 : vector<1x1024xi32>
    %cst_18 = arith.constant 1.000000e+00 : f32
    %72 = vector.broadcast %cst_18 : f32 to vector<1x1024xf32>
    %73 = arith.subf %72, %18 : vector<1x1024xf32>
    %cst_19 = arith.constant 0.000000e+00 : f32
    %74 = vector.broadcast %cst_19 : f32 to vector<1x1024xf32>
    %75 = arith.select %71, %73, %74 : vector<1x1024xi1>, vector<1x1024xf32>
    %c-1_i32 = arith.constant -1 : i32
    %76 = vector.broadcast %c-1_i32 : i32 to vector<1x1024xi32>
    %77 = arith.cmpi eq, %19, %76 : vector<1x1024xi32>
    %cst_20 = arith.constant 0.000000e+00 : f32
    %78 = vector.broadcast %cst_20 : f32 to vector<1x1024xf32>
    %79 = arith.select %77, %18, %78 : vector<1x1024xi1>, vector<1x1024xf32>
    %80 = arith.addf %75, %79 : vector<1x1024xf32>
    %81 = vector.extract_strided_slice %68 {offsets = [0, 0], sizes = [16, 1024], strides = [1, 1]} : vector<128x1024xf32> to vector<16x1024xf32>
    %82 = vector.broadcast %80 : vector<1x1024xf32> to vector<16x1024xf32>
    %83 = arith.mulf %82, %81 : vector<16x1024xf32>
    %84 = arith.addf %69, %83 : vector<16x1024xf32>
    %c1_i32_21 = arith.constant 1 : i32
    %85 = vector.broadcast %c1_i32_21 : i32 to vector<1x1024xi32>
    %86 = arith.cmpi eq, %19, %85 : vector<1x1024xi32>
    %cst_22 = arith.constant 1.000000e+00 : f32
    %87 = vector.broadcast %cst_22 : f32 to vector<1x1024xf32>
    %88 = arith.subf %87, %18 : vector<1x1024xf32>
    %cst_23 = arith.constant 0.000000e+00 : f32
    %89 = vector.broadcast %cst_23 : f32 to vector<1x1024xf32>
    %90 = arith.select %86, %88, %89 : vector<1x1024xi1>, vector<1x1024xf32>
    %c0_i32_24 = arith.constant 0 : i32
    %91 = vector.broadcast %c0_i32_24 : i32 to vector<1x1024xi32>
    %92 = arith.cmpi eq, %19, %91 : vector<1x1024xi32>
    %cst_25 = arith.constant 0.000000e+00 : f32
    %93 = vector.broadcast %cst_25 : f32 to vector<1x1024xf32>
    %94 = arith.select %92, %18, %93 : vector<1x1024xi1>, vector<1x1024xf32>
    %95 = arith.addf %90, %94 : vector<1x1024xf32>
    %96 = vector.extract_strided_slice %68 {offsets = [16, 0], sizes = [16, 1024], strides = [1, 1]} : vector<128x1024xf32> to vector<16x1024xf32>
    %97 = vector.broadcast %95 : vector<1x1024xf32> to vector<16x1024xf32>
    %98 = arith.mulf %97, %96 : vector<16x1024xf32>
    %99 = arith.addf %84, %98 : vector<16x1024xf32>
    %c2_i32 = arith.constant 2 : i32
    %100 = vector.broadcast %c2_i32 : i32 to vector<1x1024xi32>
    %101 = arith.cmpi eq, %19, %100 : vector<1x1024xi32>
    %cst_26 = arith.constant 1.000000e+00 : f32
    %102 = vector.broadcast %cst_26 : f32 to vector<1x1024xf32>
    %103 = arith.subf %102, %18 : vector<1x1024xf32>
    %cst_27 = arith.constant 0.000000e+00 : f32
    %104 = vector.broadcast %cst_27 : f32 to vector<1x1024xf32>
    %105 = arith.select %101, %103, %104 : vector<1x1024xi1>, vector<1x1024xf32>
    %c1_i32_28 = arith.constant 1 : i32
    %106 = vector.broadcast %c1_i32_28 : i32 to vector<1x1024xi32>
    %107 = arith.cmpi eq, %19, %106 : vector<1x1024xi32>
    %cst_29 = arith.constant 0.000000e+00 : f32
    %108 = vector.broadcast %cst_29 : f32 to vector<1x1024xf32>
    %109 = arith.select %107, %18, %108 : vector<1x1024xi1>, vector<1x1024xf32>
    %110 = arith.addf %105, %109 : vector<1x1024xf32>
    %111 = vector.extract_strided_slice %68 {offsets = [32, 0], sizes = [16, 1024], strides = [1, 1]} : vector<128x1024xf32> to vector<16x1024xf32>
    %112 = vector.broadcast %110 : vector<1x1024xf32> to vector<16x1024xf32>
    %113 = arith.mulf %112, %111 : vector<16x1024xf32>
    %114 = arith.addf %99, %113 : vector<16x1024xf32>
    %c3_i32_30 = arith.constant 3 : i32
    %115 = vector.broadcast %c3_i32_30 : i32 to vector<1x1024xi32>
    %116 = arith.cmpi eq, %19, %115 : vector<1x1024xi32>
    %cst_31 = arith.constant 1.000000e+00 : f32
    %117 = vector.broadcast %cst_31 : f32 to vector<1x1024xf32>
    %118 = arith.subf %117, %18 : vector<1x1024xf32>
    %cst_32 = arith.constant 0.000000e+00 : f32
    %119 = vector.broadcast %cst_32 : f32 to vector<1x1024xf32>
    %120 = arith.select %116, %118, %119 : vector<1x1024xi1>, vector<1x1024xf32>
    %c2_i32_33 = arith.constant 2 : i32
    %121 = vector.broadcast %c2_i32_33 : i32 to vector<1x1024xi32>
    %122 = arith.cmpi eq, %19, %121 : vector<1x1024xi32>
    %cst_34 = arith.constant 0.000000e+00 : f32
    %123 = vector.broadcast %cst_34 : f32 to vector<1x1024xf32>
    %124 = arith.select %122, %18, %123 : vector<1x1024xi1>, vector<1x1024xf32>
    %125 = arith.addf %120, %124 : vector<1x1024xf32>
    %126 = vector.extract_strided_slice %68 {offsets = [48, 0], sizes = [16, 1024], strides = [1, 1]} : vector<128x1024xf32> to vector<16x1024xf32>
    %127 = vector.broadcast %125 : vector<1x1024xf32> to vector<16x1024xf32>
    %128 = arith.mulf %127, %126 : vector<16x1024xf32>
    %129 = arith.addf %114, %128 : vector<16x1024xf32>
    %c4_i32 = arith.constant 4 : i32
    %130 = vector.broadcast %c4_i32 : i32 to vector<1x1024xi32>
    %131 = arith.cmpi eq, %19, %130 : vector<1x1024xi32>
    %cst_35 = arith.constant 1.000000e+00 : f32
    %132 = vector.broadcast %cst_35 : f32 to vector<1x1024xf32>
    %133 = arith.subf %132, %18 : vector<1x1024xf32>
    %cst_36 = arith.constant 0.000000e+00 : f32
    %134 = vector.broadcast %cst_36 : f32 to vector<1x1024xf32>
    %135 = arith.select %131, %133, %134 : vector<1x1024xi1>, vector<1x1024xf32>
    %c3_i32_37 = arith.constant 3 : i32
    %136 = vector.broadcast %c3_i32_37 : i32 to vector<1x1024xi32>
    %137 = arith.cmpi eq, %19, %136 : vector<1x1024xi32>
    %cst_38 = arith.constant 0.000000e+00 : f32
    %138 = vector.broadcast %cst_38 : f32 to vector<1x1024xf32>
    %139 = arith.select %137, %18, %138 : vector<1x1024xi1>, vector<1x1024xf32>
    %140 = arith.addf %135, %139 : vector<1x1024xf32>
    %141 = vector.extract_strided_slice %68 {offsets = [64, 0], sizes = [16, 1024], strides = [1, 1]} : vector<128x1024xf32> to vector<16x1024xf32>
    %142 = vector.broadcast %140 : vector<1x1024xf32> to vector<16x1024xf32>
    %143 = arith.mulf %142, %141 : vector<16x1024xf32>
    %144 = arith.addf %129, %143 : vector<16x1024xf32>
    %c5_i32 = arith.constant 5 : i32
    %145 = vector.broadcast %c5_i32 : i32 to vector<1x1024xi32>
    %146 = arith.cmpi eq, %19, %145 : vector<1x1024xi32>
    %cst_39 = arith.constant 1.000000e+00 : f32
    %147 = vector.broadcast %cst_39 : f32 to vector<1x1024xf32>
    %148 = arith.subf %147, %18 : vector<1x1024xf32>
    %cst_40 = arith.constant 0.000000e+00 : f32
    %149 = vector.broadcast %cst_40 : f32 to vector<1x1024xf32>
    %150 = arith.select %146, %148, %149 : vector<1x1024xi1>, vector<1x1024xf32>
    %c4_i32_41 = arith.constant 4 : i32
    %151 = vector.broadcast %c4_i32_41 : i32 to vector<1x1024xi32>
    %152 = arith.cmpi eq, %19, %151 : vector<1x1024xi32>
    %cst_42 = arith.constant 0.000000e+00 : f32
    %153 = vector.broadcast %cst_42 : f32 to vector<1x1024xf32>
    %154 = arith.select %152, %18, %153 : vector<1x1024xi1>, vector<1x1024xf32>
    %155 = arith.addf %150, %154 : vector<1x1024xf32>
    %156 = vector.extract_strided_slice %68 {offsets = [80, 0], sizes = [16, 1024], strides = [1, 1]} : vector<128x1024xf32> to vector<16x1024xf32>
    %157 = vector.broadcast %155 : vector<1x1024xf32> to vector<16x1024xf32>
    %158 = arith.mulf %157, %156 : vector<16x1024xf32>
    %159 = arith.addf %144, %158 : vector<16x1024xf32>
    %c6_i32 = arith.constant 6 : i32
    %160 = vector.broadcast %c6_i32 : i32 to vector<1x1024xi32>
    %161 = arith.cmpi eq, %19, %160 : vector<1x1024xi32>
    %cst_43 = arith.constant 1.000000e+00 : f32
    %162 = vector.broadcast %cst_43 : f32 to vector<1x1024xf32>
    %163 = arith.subf %162, %18 : vector<1x1024xf32>
    %cst_44 = arith.constant 0.000000e+00 : f32
    %164 = vector.broadcast %cst_44 : f32 to vector<1x1024xf32>
    %165 = arith.select %161, %163, %164 : vector<1x1024xi1>, vector<1x1024xf32>
    %c5_i32_45 = arith.constant 5 : i32
    %166 = vector.broadcast %c5_i32_45 : i32 to vector<1x1024xi32>
    %167 = arith.cmpi eq, %19, %166 : vector<1x1024xi32>
    %cst_46 = arith.constant 0.000000e+00 : f32
    %168 = vector.broadcast %cst_46 : f32 to vector<1x1024xf32>
    %169 = arith.select %167, %18, %168 : vector<1x1024xi1>, vector<1x1024xf32>
    %170 = arith.addf %165, %169 : vector<1x1024xf32>
    %171 = vector.extract_strided_slice %68 {offsets = [96, 0], sizes = [16, 1024], strides = [1, 1]} : vector<128x1024xf32> to vector<16x1024xf32>
    %172 = vector.broadcast %170 : vector<1x1024xf32> to vector<16x1024xf32>
    %173 = arith.mulf %172, %171 : vector<16x1024xf32>
    %174 = arith.addf %159, %173 : vector<16x1024xf32>
    %c7_i32 = arith.constant 7 : i32
    %175 = vector.broadcast %c7_i32 : i32 to vector<1x1024xi32>
    %176 = arith.cmpi eq, %19, %175 : vector<1x1024xi32>
    %cst_47 = arith.constant 1.000000e+00 : f32
    %177 = vector.broadcast %cst_47 : f32 to vector<1x1024xf32>
    %178 = arith.subf %177, %18 : vector<1x1024xf32>
    %cst_48 = arith.constant 0.000000e+00 : f32
    %179 = vector.broadcast %cst_48 : f32 to vector<1x1024xf32>
    %180 = arith.select %176, %178, %179 : vector<1x1024xi1>, vector<1x1024xf32>
    %c6_i32_49 = arith.constant 6 : i32
    %181 = vector.broadcast %c6_i32_49 : i32 to vector<1x1024xi32>
    %182 = arith.cmpi eq, %19, %181 : vector<1x1024xi32>
    %cst_50 = arith.constant 0.000000e+00 : f32
    %183 = vector.broadcast %cst_50 : f32 to vector<1x1024xf32>
    %184 = arith.select %182, %18, %183 : vector<1x1024xi1>, vector<1x1024xf32>
    %185 = arith.addf %180, %184 : vector<1x1024xf32>
    %186 = vector.extract_strided_slice %68 {offsets = [112, 0], sizes = [16, 1024], strides = [1, 1]} : vector<128x1024xf32> to vector<16x1024xf32>
    %187 = vector.broadcast %185 : vector<1x1024xf32> to vector<16x1024xf32>
    %188 = arith.mulf %187, %186 : vector<16x1024xf32>
    %189 = arith.addf %174, %188 : vector<16x1024xf32>
    %190 = vector.extract_strided_slice %189 {offsets = [0, 0], sizes = [1, 1024], strides = [1, 1]} : vector<16x1024xf32> to vector<1x1024xf32>
    %191 = vector.extract_strided_slice %189 {offsets = [1, 0], sizes = [3, 1024], strides = [1, 1]} : vector<16x1024xf32> to vector<3x1024xf32>
    %cst_51 = arith.constant -4.595120e+00 : f32
    %192 = vector.broadcast %cst_51 : f32 to vector<1x1024xf32>
    %193 = arith.addf %190, %192 : vector<1x1024xf32>
    %cst_52 = arith.constant 0.000000e+00 : f32
    %194 = vector.broadcast %cst_52 : f32 to vector<1x1024xf32>
    %195 = arith.maximumf %193, %194 : vector<1x1024xf32>
    %196 = math.absf %193 : vector<1x1024xf32>
    %cst_53 = arith.constant 0.000000e+00 : f32
    %197 = vector.broadcast %cst_53 : f32 to vector<1x1024xf32>
    %198 = arith.subf %197, %196 : vector<1x1024xf32>
    %199 = math.exp %198 : vector<1x1024xf32>
    %cst_54 = arith.constant 1.000000e+00 : f32
    %200 = vector.broadcast %cst_54 : f32 to vector<1x1024xf32>
    %201 = arith.addf %200, %199 : vector<1x1024xf32>
    %202 = math.log %201 : vector<1x1024xf32>
    %203 = arith.addf %195, %202 : vector<1x1024xf32>
    %cst_55 = arith.constant 0.000000e+00 : f32
    %204 = vector.broadcast %cst_55 : f32 to vector<1x1024xf32>
    %205 = arith.subf %204, %203 : vector<1x1024xf32>
    %cst_56 = arith.constant 5.000000e-02 : f32
    %206 = vector.broadcast %cst_56 : f32 to vector<1x1024xf32>
    %207 = arith.mulf %205, %206 : vector<1x1024xf32>
    %208 = math.exp %207 : vector<1x1024xf32>
    %cst_57 = arith.constant 1.000000e+00 : f32
    %209 = vector.broadcast %cst_57 : f32 to vector<1x1024xf32>
    %210 = arith.subf %209, %208 : vector<1x1024xf32>
    %c0_58 = arith.constant 0 : index
    %c0_59 = arith.constant 0 : index
    %211 = vector.load %arg4[%c0_58, %c0_59] : memref<128x16xbf16, #tpu.memory_space<vmem>>, vector<128x16xbf16>
    %212 = arith.truncf %189 : vector<16x1024xf32> to vector<16x1024xbf16>
    %cst_60 = arith.constant dense<0.000000e+00> : vector<128x1024xf32>
    %213 = tpu.matmul %211, %212, %cst_60 {dimension_numbers = #tpu.dot_dimension_numbers<[1], [0], [0], [1], [0, 0, 1, 1], [], []>} : vector<128x16xbf16>, vector<16x1024xbf16>, vector<128x1024xf32> -> vector<128x1024xf32>
    %c0_61 = arith.constant 0 : index
    %c0_62 = arith.constant 0 : index
    %214 = vector.load %arg5[%c0_61, %c0_62] : memref<128x32xbf16, #tpu.memory_space<vmem>>, vector<128x32xbf16>
    %c0_63 = arith.constant 0 : index
    %c0_64 = arith.constant 0 : index
    %c0_65 = arith.constant 0 : index
    %215 = vector.load %arg2[%c0_63, %c0_64, %c0_65] : memref<1x32x1024xbf16, #tpu.memory_space<vmem>>, vector<1x32x1024xbf16>
    %216 = vector.shape_cast %215 : vector<1x32x1024xbf16> to vector<32x1024xbf16>
    %cst_66 = arith.constant dense<0.000000e+00> : vector<128x1024xf32>
    %217 = tpu.matmul %214, %216, %cst_66 {dimension_numbers = #tpu.dot_dimension_numbers<[1], [0], [0], [1], [0, 0, 1, 1], [], []>} : vector<128x32xbf16>, vector<32x1024xbf16>, vector<128x1024xf32> -> vector<128x1024xf32>
    %218 = arith.addf %213, %217 : vector<128x1024xf32>
    %cst_67 = arith.constant 0.000000e+00 : f32
    %219 = vector.broadcast %cst_67 : f32 to vector<128x1024xf32>
    %220 = arith.maximumf %218, %219 : vector<128x1024xf32>
    %c0_68 = arith.constant 0 : index
    %c0_69 = arith.constant 0 : index
    %221 = vector.load %arg6[%c0_68, %c0_69] : memref<128x128xbf16, #tpu.memory_space<vmem>>, vector<128x128xbf16>
    %222 = arith.truncf %220 : vector<128x1024xf32> to vector<128x1024xbf16>
    %cst_70 = arith.constant dense<0.000000e+00> : vector<128x1024xf32>
    %223 = tpu.matmul %221, %222, %cst_70 {dimension_numbers = #tpu.dot_dimension_numbers<[1], [0], [0], [1], [0, 0, 1, 1], [], []>} : vector<128x128xbf16>, vector<128x1024xbf16>, vector<128x1024xf32> -> vector<128x1024xf32>
    %c0_71 = arith.constant 0 : index
    %c0_72 = arith.constant 0 : index
    %224 = vector.load %arg7[%c0_71, %c0_72] : memref<128x1xf32, #tpu.memory_space<vmem>>, vector<128x1xf32>
    %225 = vector.broadcast %224 : vector<128x1xf32> to vector<128x1024xf32>
    %226 = arith.addf %223, %225 : vector<128x1024xf32>
    %cst_73 = arith.constant 0.000000e+00 : f32
    %227 = vector.broadcast %cst_73 : f32 to vector<128x1024xf32>
    %228 = arith.maximumf %226, %227 : vector<128x1024xf32>
    %c0_74 = arith.constant 0 : index
    %c0_75 = arith.constant 0 : index
    %229 = vector.load %arg8[%c0_74, %c0_75] : memref<3x128xbf16, #tpu.memory_space<vmem>>, vector<3x128xbf16>
    %230 = arith.truncf %228 : vector<128x1024xf32> to vector<128x1024xbf16>
    %cst_76 = arith.constant dense<0.000000e+00> : vector<3x1024xf32>
    %231 = tpu.matmul %229, %230, %cst_76 {dimension_numbers = #tpu.dot_dimension_numbers<[1], [0], [0], [1], [0, 0, 1, 1], [], []>} : vector<3x128xbf16>, vector<128x1024xbf16>, vector<3x1024xf32> -> vector<3x1024xf32>
    %c0_77 = arith.constant 0 : index
    %c0_78 = arith.constant 0 : index
    %232 = vector.load %arg9[%c0_77, %c0_78] : memref<3x1xf32, #tpu.memory_space<vmem>>, vector<3x1xf32>
    %233 = vector.broadcast %232 : vector<3x1xf32> to vector<3x1024xf32>
    %234 = arith.addf %231, %233 : vector<3x1024xf32>
    %235 = arith.addf %234, %191 : vector<3x1024xf32>
    %cst_79 = arith.constant 0.000000e+00 : f32
    %236 = vector.broadcast %cst_79 : f32 to vector<3x1024xf32>
    %237 = arith.subf %236, %235 : vector<3x1024xf32>
    %238 = math.exp %237 : vector<3x1024xf32>
    %cst_80 = arith.constant 1.000000e+00 : f32
    %239 = vector.broadcast %cst_80 : f32 to vector<3x1024xf32>
    %240 = arith.addf %239, %238 : vector<3x1024xf32>
    %cst_81 = arith.constant 1.000000e+00 : f32
    %241 = vector.broadcast %cst_81 : f32 to vector<3x1024xf32>
    %242 = arith.divf %241, %240 : vector<3x1024xf32>
    %cst_82 = arith.constant 0.000000e+00 : f32
    %243 = vector.broadcast %cst_82 : f32 to vector<3x128xf32>
    %244 = vector.extract_strided_slice %210 {offsets = [0, 0], sizes = [1, 128], strides = [1, 1]} : vector<1x1024xf32> to vector<1x128xf32>
    %c0_83 = arith.constant 0 : index
    %c0_84 = arith.constant 0 : index
    %c1 = arith.constant 1 : index
    %c0_85 = arith.constant 0 : index
    %245 = vector.load %arg10[%c0_83, %c0_84, %c1, %c0_85] : memref<1x8x8x128xf32, #tpu.memory_space<vmem>>, vector<1x1x1x128xf32>
    %246 = vector.shape_cast %245 : vector<1x1x1x128xf32> to vector<1x128xf32>
    %247 = vector.shape_cast %244 : vector<1x128xf32> to vector<1x1x1x128xf32>
    tpu.vector_store %arg10[%c0_83, %c0_84, %c1, %c0_85], %247 {strides = array<i32>} : memref<1x8x8x128xf32, #tpu.memory_space<vmem>>, vector<1x1x1x128xf32>,
    %248 = vector.extract_strided_slice %242 {offsets = [0, 0], sizes = [3, 128], strides = [1, 1]} : vector<3x1024xf32> to vector<3x128xf32>
    %c0_86 = arith.constant 0 : index
    %c0_87 = arith.constant 0 : index
    %c2 = arith.constant 2 : index
    %c0_88 = arith.constant 0 : index
    %249 = vector.load %arg10[%c0_86, %c0_87, %c2, %c0_88] : memref<1x8x8x128xf32, #tpu.memory_space<vmem>>, vector<1x1x3x128xf32>
    %250 = vector.shape_cast %249 : vector<1x1x3x128xf32> to vector<3x128xf32>
    %251 = vector.shape_cast %248 : vector<3x128xf32> to vector<1x1x3x128xf32>
    tpu.vector_store %arg10[%c0_86, %c0_87, %c2, %c0_88], %251 {strides = array<i32>} : memref<1x8x8x128xf32, #tpu.memory_space<vmem>>, vector<1x1x3x128xf32>,
    %c0_89 = arith.constant 0 : index
    %c0_90 = arith.constant 0 : index
    %c5 = arith.constant 5 : index
    %c0_91 = arith.constant 0 : index
    %252 = vector.load %arg10[%c0_89, %c0_90, %c5, %c0_91] : memref<1x8x8x128xf32, #tpu.memory_space<vmem>>, vector<1x1x3x128xf32>
    %253 = vector.shape_cast %252 : vector<1x1x3x128xf32> to vector<3x128xf32>
    %254 = vector.shape_cast %243 : vector<3x128xf32> to vector<1x1x3x128xf32>
    tpu.vector_store %arg10[%c0_89, %c0_90, %c5, %c0_91], %254 {strides = array<i32>} : memref<1x8x8x128xf32, #tpu.memory_space<vmem>>, vector<1x1x3x128xf32>,
    %255 = vector.extract_strided_slice %210 {offsets = [0, 128], sizes = [1, 128], strides = [1, 1]} : vector<1x1024xf32> to vector<1x128xf32>
    %c0_92 = arith.constant 0 : index
    %c1_93 = arith.constant 1 : index
    %c1_94 = arith.constant 1 : index
    %c0_95 = arith.constant 0 : index
    %256 = vector.load %arg10[%c0_92, %c1_93, %c1_94, %c0_95] : memref<1x8x8x128xf32, #tpu.memory_space<vmem>>, vector<1x1x1x128xf32>
    %257 = vector.shape_cast %256 : vector<1x1x1x128xf32> to vector<1x128xf32>
    %258 = vector.shape_cast %255 : vector<1x128xf32> to vector<1x1x1x128xf32>
    tpu.vector_store %arg10[%c0_92, %c1_93, %c1_94, %c0_95], %258 {strides = array<i32>} : memref<1x8x8x128xf32, #tpu.memory_space<vmem>>, vector<1x1x1x128xf32>,
    %259 = vector.extract_strided_slice %242 {offsets = [0, 128], sizes = [3, 128], strides = [1, 1]} : vector<3x1024xf32> to vector<3x128xf32>
    %c0_96 = arith.constant 0 : index
    %c1_97 = arith.constant 1 : index
    %c2_98 = arith.constant 2 : index
    %c0_99 = arith.constant 0 : index
    %260 = vector.load %arg10[%c0_96, %c1_97, %c2_98, %c0_99] : memref<1x8x8x128xf32, #tpu.memory_space<vmem>>, vector<1x1x3x128xf32>
    %261 = vector.shape_cast %260 : vector<1x1x3x128xf32> to vector<3x128xf32>
    %262 = vector.shape_cast %259 : vector<3x128xf32> to vector<1x1x3x128xf32>
    tpu.vector_store %arg10[%c0_96, %c1_97, %c2_98, %c0_99], %262 {strides = array<i32>} : memref<1x8x8x128xf32, #tpu.memory_space<vmem>>, vector<1x1x3x128xf32>,
    %c0_100 = arith.constant 0 : index
    %c1_101 = arith.constant 1 : index
    %c5_102 = arith.constant 5 : index
    %c0_103 = arith.constant 0 : index
    %263 = vector.load %arg10[%c0_100, %c1_101, %c5_102, %c0_103] : memref<1x8x8x128xf32, #tpu.memory_space<vmem>>, vector<1x1x3x128xf32>
    %264 = vector.shape_cast %263 : vector<1x1x3x128xf32> to vector<3x128xf32>
    %265 = vector.shape_cast %243 : vector<3x128xf32> to vector<1x1x3x128xf32>
    tpu.vector_store %arg10[%c0_100, %c1_101, %c5_102, %c0_103], %265 {strides = array<i32>} : memref<1x8x8x128xf32, #tpu.memory_space<vmem>>, vector<1x1x3x128xf32>,
    %266 = vector.extract_strided_slice %210 {offsets = [0, 256], sizes = [1, 128], strides = [1, 1]} : vector<1x1024xf32> to vector<1x128xf32>
    %c0_104 = arith.constant 0 : index
    %c2_105 = arith.constant 2 : index
    %c1_106 = arith.constant 1 : index
    %c0_107 = arith.constant 0 : index
    %267 = vector.load %arg10[%c0_104, %c2_105, %c1_106, %c0_107] : memref<1x8x8x128xf32, #tpu.memory_space<vmem>>, vector<1x1x1x128xf32>
    %268 = vector.shape_cast %267 : vector<1x1x1x128xf32> to vector<1x128xf32>
    %269 = vector.shape_cast %266 : vector<1x128xf32> to vector<1x1x1x128xf32>
    tpu.vector_store %arg10[%c0_104, %c2_105, %c1_106, %c0_107], %269 {strides = array<i32>} : memref<1x8x8x128xf32, #tpu.memory_space<vmem>>, vector<1x1x1x128xf32>,
    %270 = vector.extract_strided_slice %242 {offsets = [0, 256], sizes = [3, 128], strides = [1, 1]} : vector<3x1024xf32> to vector<3x128xf32>
    %c0_108 = arith.constant 0 : index
    %c2_109 = arith.constant 2 : index
    %c2_110 = arith.constant 2 : index
    %c0_111 = arith.constant 0 : index
    %271 = vector.load %arg10[%c0_108, %c2_109, %c2_110, %c0_111] : memref<1x8x8x128xf32, #tpu.memory_space<vmem>>, vector<1x1x3x128xf32>
    %272 = vector.shape_cast %271 : vector<1x1x3x128xf32> to vector<3x128xf32>
    %273 = vector.shape_cast %270 : vector<3x128xf32> to vector<1x1x3x128xf32>
    tpu.vector_store %arg10[%c0_108, %c2_109, %c2_110, %c0_111], %273 {strides = array<i32>} : memref<1x8x8x128xf32, #tpu.memory_space<vmem>>, vector<1x1x3x128xf32>,
    %c0_112 = arith.constant 0 : index
    %c2_113 = arith.constant 2 : index
    %c5_114 = arith.constant 5 : index
    %c0_115 = arith.constant 0 : index
    %274 = vector.load %arg10[%c0_112, %c2_113, %c5_114, %c0_115] : memref<1x8x8x128xf32, #tpu.memory_space<vmem>>, vector<1x1x3x128xf32>
    %275 = vector.shape_cast %274 : vector<1x1x3x128xf32> to vector<3x128xf32>
    %276 = vector.shape_cast %243 : vector<3x128xf32> to vector<1x1x3x128xf32>
    tpu.vector_store %arg10[%c0_112, %c2_113, %c5_114, %c0_115], %276 {strides = array<i32>} : memref<1x8x8x128xf32, #tpu.memory_space<vmem>>, vector<1x1x3x128xf32>,
    %277 = vector.extract_strided_slice %210 {offsets = [0, 384], sizes = [1, 128], strides = [1, 1]} : vector<1x1024xf32> to vector<1x128xf32>
    %c0_116 = arith.constant 0 : index
    %c3 = arith.constant 3 : index
    %c1_117 = arith.constant 1 : index
    %c0_118 = arith.constant 0 : index
    %278 = vector.load %arg10[%c0_116, %c3, %c1_117, %c0_118] : memref<1x8x8x128xf32, #tpu.memory_space<vmem>>, vector<1x1x1x128xf32>
    %279 = vector.shape_cast %278 : vector<1x1x1x128xf32> to vector<1x128xf32>
    %280 = vector.shape_cast %277 : vector<1x128xf32> to vector<1x1x1x128xf32>
    tpu.vector_store %arg10[%c0_116, %c3, %c1_117, %c0_118], %280 {strides = array<i32>} : memref<1x8x8x128xf32, #tpu.memory_space<vmem>>, vector<1x1x1x128xf32>,
    %281 = vector.extract_strided_slice %242 {offsets = [0, 384], sizes = [3, 128], strides = [1, 1]} : vector<3x1024xf32> to vector<3x128xf32>
    %c0_119 = arith.constant 0 : index
    %c3_120 = arith.constant 3 : index
    %c2_121 = arith.constant 2 : index
    %c0_122 = arith.constant 0 : index
    %282 = vector.load %arg10[%c0_119, %c3_120, %c2_121, %c0_122] : memref<1x8x8x128xf32, #tpu.memory_space<vmem>>, vector<1x1x3x128xf32>
    %283 = vector.shape_cast %282 : vector<1x1x3x128xf32> to vector<3x128xf32>
    %284 = vector.shape_cast %281 : vector<3x128xf32> to vector<1x1x3x128xf32>
    tpu.vector_store %arg10[%c0_119, %c3_120, %c2_121, %c0_122], %284 {strides = array<i32>} : memref<1x8x8x128xf32, #tpu.memory_space<vmem>>, vector<1x1x3x128xf32>,
    %c0_123 = arith.constant 0 : index
    %c3_124 = arith.constant 3 : index
    %c5_125 = arith.constant 5 : index
    %c0_126 = arith.constant 0 : index
    %285 = vector.load %arg10[%c0_123, %c3_124, %c5_125, %c0_126] : memref<1x8x8x128xf32, #tpu.memory_space<vmem>>, vector<1x1x3x128xf32>
    %286 = vector.shape_cast %285 : vector<1x1x3x128xf32> to vector<3x128xf32>
    %287 = vector.shape_cast %243 : vector<3x128xf32> to vector<1x1x3x128xf32>
    tpu.vector_store %arg10[%c0_123, %c3_124, %c5_125, %c0_126], %287 {strides = array<i32>} : memref<1x8x8x128xf32, #tpu.memory_space<vmem>>, vector<1x1x3x128xf32>,
    %288 = vector.extract_strided_slice %210 {offsets = [0, 512], sizes = [1, 128], strides = [1, 1]} : vector<1x1024xf32> to vector<1x128xf32>
    %c0_127 = arith.constant 0 : index
    %c4 = arith.constant 4 : index
    %c1_128 = arith.constant 1 : index
    %c0_129 = arith.constant 0 : index
    %289 = vector.load %arg10[%c0_127, %c4, %c1_128, %c0_129] : memref<1x8x8x128xf32, #tpu.memory_space<vmem>>, vector<1x1x1x128xf32>
    %290 = vector.shape_cast %289 : vector<1x1x1x128xf32> to vector<1x128xf32>
    %291 = vector.shape_cast %288 : vector<1x128xf32> to vector<1x1x1x128xf32>
    tpu.vector_store %arg10[%c0_127, %c4, %c1_128, %c0_129], %291 {strides = array<i32>} : memref<1x8x8x128xf32, #tpu.memory_space<vmem>>, vector<1x1x1x128xf32>,
    %292 = vector.extract_strided_slice %242 {offsets = [0, 512], sizes = [3, 128], strides = [1, 1]} : vector<3x1024xf32> to vector<3x128xf32>
    %c0_130 = arith.constant 0 : index
    %c4_131 = arith.constant 4 : index
    %c2_132 = arith.constant 2 : index
    %c0_133 = arith.constant 0 : index
    %293 = vector.load %arg10[%c0_130, %c4_131, %c2_132, %c0_133] : memref<1x8x8x128xf32, #tpu.memory_space<vmem>>, vector<1x1x3x128xf32>
    %294 = vector.shape_cast %293 : vector<1x1x3x128xf32> to vector<3x128xf32>
    %295 = vector.shape_cast %292 : vector<3x128xf32> to vector<1x1x3x128xf32>
    tpu.vector_store %arg10[%c0_130, %c4_131, %c2_132, %c0_133], %295 {strides = array<i32>} : memref<1x8x8x128xf32, #tpu.memory_space<vmem>>, vector<1x1x3x128xf32>,
    %c0_134 = arith.constant 0 : index
    %c4_135 = arith.constant 4 : index
    %c5_136 = arith.constant 5 : index
    %c0_137 = arith.constant 0 : index
    %296 = vector.load %arg10[%c0_134, %c4_135, %c5_136, %c0_137] : memref<1x8x8x128xf32, #tpu.memory_space<vmem>>, vector<1x1x3x128xf32>
    %297 = vector.shape_cast %296 : vector<1x1x3x128xf32> to vector<3x128xf32>
    %298 = vector.shape_cast %243 : vector<3x128xf32> to vector<1x1x3x128xf32>
    tpu.vector_store %arg10[%c0_134, %c4_135, %c5_136, %c0_137], %298 {strides = array<i32>} : memref<1x8x8x128xf32, #tpu.memory_space<vmem>>, vector<1x1x3x128xf32>,
    %299 = vector.extract_strided_slice %210 {offsets = [0, 640], sizes = [1, 128], strides = [1, 1]} : vector<1x1024xf32> to vector<1x128xf32>
    %c0_138 = arith.constant 0 : index
    %c5_139 = arith.constant 5 : index
    %c1_140 = arith.constant 1 : index
    %c0_141 = arith.constant 0 : index
    %300 = vector.load %arg10[%c0_138, %c5_139, %c1_140, %c0_141] : memref<1x8x8x128xf32, #tpu.memory_space<vmem>>, vector<1x1x1x128xf32>
    %301 = vector.shape_cast %300 : vector<1x1x1x128xf32> to vector<1x128xf32>
    %302 = vector.shape_cast %299 : vector<1x128xf32> to vector<1x1x1x128xf32>
    tpu.vector_store %arg10[%c0_138, %c5_139, %c1_140, %c0_141], %302 {strides = array<i32>} : memref<1x8x8x128xf32, #tpu.memory_space<vmem>>, vector<1x1x1x128xf32>,
    %303 = vector.extract_strided_slice %242 {offsets = [0, 640], sizes = [3, 128], strides = [1, 1]} : vector<3x1024xf32> to vector<3x128xf32>
    %c0_142 = arith.constant 0 : index
    %c5_143 = arith.constant 5 : index
    %c2_144 = arith.constant 2 : index
    %c0_145 = arith.constant 0 : index
    %304 = vector.load %arg10[%c0_142, %c5_143, %c2_144, %c0_145] : memref<1x8x8x128xf32, #tpu.memory_space<vmem>>, vector<1x1x3x128xf32>
    %305 = vector.shape_cast %304 : vector<1x1x3x128xf32> to vector<3x128xf32>
    %306 = vector.shape_cast %303 : vector<3x128xf32> to vector<1x1x3x128xf32>
    tpu.vector_store %arg10[%c0_142, %c5_143, %c2_144, %c0_145], %306 {strides = array<i32>} : memref<1x8x8x128xf32, #tpu.memory_space<vmem>>, vector<1x1x3x128xf32>,
    %c0_146 = arith.constant 0 : index
    %c5_147 = arith.constant 5 : index
    %c5_148 = arith.constant 5 : index
    %c0_149 = arith.constant 0 : index
    %307 = vector.load %arg10[%c0_146, %c5_147, %c5_148, %c0_149] : memref<1x8x8x128xf32, #tpu.memory_space<vmem>>, vector<1x1x3x128xf32>
    %308 = vector.shape_cast %307 : vector<1x1x3x128xf32> to vector<3x128xf32>
    %309 = vector.shape_cast %243 : vector<3x128xf32> to vector<1x1x3x128xf32>
    tpu.vector_store %arg10[%c0_146, %c5_147, %c5_148, %c0_149], %309 {strides = array<i32>} : memref<1x8x8x128xf32, #tpu.memory_space<vmem>>, vector<1x1x3x128xf32>,
    %310 = vector.extract_strided_slice %210 {offsets = [0, 768], sizes = [1, 128], strides = [1, 1]} : vector<1x1024xf32> to vector<1x128xf32>
    %c0_150 = arith.constant 0 : index
    %c6 = arith.constant 6 : index
    %c1_151 = arith.constant 1 : index
    %c0_152 = arith.constant 0 : index
    %311 = vector.load %arg10[%c0_150, %c6, %c1_151, %c0_152] : memref<1x8x8x128xf32, #tpu.memory_space<vmem>>, vector<1x1x1x128xf32>
    %312 = vector.shape_cast %311 : vector<1x1x1x128xf32> to vector<1x128xf32>
    %313 = vector.shape_cast %310 : vector<1x128xf32> to vector<1x1x1x128xf32>
    tpu.vector_store %arg10[%c0_150, %c6, %c1_151, %c0_152], %313 {strides = array<i32>} : memref<1x8x8x128xf32, #tpu.memory_space<vmem>>, vector<1x1x1x128xf32>,
    %314 = vector.extract_strided_slice %242 {offsets = [0, 768], sizes = [3, 128], strides = [1, 1]} : vector<3x1024xf32> to vector<3x128xf32>
    %c0_153 = arith.constant 0 : index
    %c6_154 = arith.constant 6 : index
    %c2_155 = arith.constant 2 : index
    %c0_156 = arith.constant 0 : index
    %315 = vector.load %arg10[%c0_153, %c6_154, %c2_155, %c0_156] : memref<1x8x8x128xf32, #tpu.memory_space<vmem>>, vector<1x1x3x128xf32>
    %316 = vector.shape_cast %315 : vector<1x1x3x128xf32> to vector<3x128xf32>
    %317 = vector.shape_cast %314 : vector<3x128xf32> to vector<1x1x3x128xf32>
    tpu.vector_store %arg10[%c0_153, %c6_154, %c2_155, %c0_156], %317 {strides = array<i32>} : memref<1x8x8x128xf32, #tpu.memory_space<vmem>>, vector<1x1x3x128xf32>,
    %c0_157 = arith.constant 0 : index
    %c6_158 = arith.constant 6 : index
    %c5_159 = arith.constant 5 : index
    %c0_160 = arith.constant 0 : index
    %318 = vector.load %arg10[%c0_157, %c6_158, %c5_159, %c0_160] : memref<1x8x8x128xf32, #tpu.memory_space<vmem>>, vector<1x1x3x128xf32>
    %319 = vector.shape_cast %318 : vector<1x1x3x128xf32> to vector<3x128xf32>
    %320 = vector.shape_cast %243 : vector<3x128xf32> to vector<1x1x3x128xf32>
    tpu.vector_store %arg10[%c0_157, %c6_158, %c5_159, %c0_160], %320 {strides = array<i32>} : memref<1x8x8x128xf32, #tpu.memory_space<vmem>>, vector<1x1x3x128xf32>,
    %321 = vector.extract_strided_slice %210 {offsets = [0, 896], sizes = [1, 128], strides = [1, 1]} : vector<1x1024xf32> to vector<1x128xf32>
    %c0_161 = arith.constant 0 : index
    %c7 = arith.constant 7 : index
    %c1_162 = arith.constant 1 : index
    %c0_163 = arith.constant 0 : index
    %322 = vector.load %arg10[%c0_161, %c7, %c1_162, %c0_163] : memref<1x8x8x128xf32, #tpu.memory_space<vmem>>, vector<1x1x1x128xf32>
    %323 = vector.shape_cast %322 : vector<1x1x1x128xf32> to vector<1x128xf32>
    %324 = vector.shape_cast %321 : vector<1x128xf32> to vector<1x1x1x128xf32>
    tpu.vector_store %arg10[%c0_161, %c7, %c1_162, %c0_163], %324 {strides = array<i32>} : memref<1x8x8x128xf32, #tpu.memory_space<vmem>>, vector<1x1x1x128xf32>,
    %325 = vector.extract_strided_slice %242 {offsets = [0, 896], sizes = [3, 128], strides = [1, 1]} : vector<3x1024xf32> to vector<3x128xf32>
    %c0_164 = arith.constant 0 : index
    %c7_165 = arith.constant 7 : index
    %c2_166 = arith.constant 2 : index
    %c0_167 = arith.constant 0 : index
    %326 = vector.load %arg10[%c0_164, %c7_165, %c2_166, %c0_167] : memref<1x8x8x128xf32, #tpu.memory_space<vmem>>, vector<1x1x3x128xf32>
    %327 = vector.shape_cast %326 : vector<1x1x3x128xf32> to vector<3x128xf32>
    %328 = vector.shape_cast %325 : vector<3x128xf32> to vector<1x1x3x128xf32>
    tpu.vector_store %arg10[%c0_164, %c7_165, %c2_166, %c0_167], %328 {strides = array<i32>} : memref<1x8x8x128xf32, #tpu.memory_space<vmem>>, vector<1x1x3x128xf32>,
    %c0_168 = arith.constant 0 : index
    %c7_169 = arith.constant 7 : index
    %c5_170 = arith.constant 5 : index
    %c0_171 = arith.constant 0 : index
    %329 = vector.load %arg10[%c0_168, %c7_169, %c5_170, %c0_171] : memref<1x8x8x128xf32, #tpu.memory_space<vmem>>, vector<1x1x3x128xf32>
    %330 = vector.shape_cast %329 : vector<1x1x3x128xf32> to vector<3x128xf32>
    %331 = vector.shape_cast %243 : vector<3x128xf32> to vector<1x1x3x128xf32>
    tpu.vector_store %arg10[%c0_168, %c7_169, %c5_170, %c0_171], %331 {strides = array<i32>} : memref<1x8x8x128xf32, #tpu.memory_space<vmem>>, vector<1x1x3x128xf32>,
    %cst_172 = arith.constant 1.000000e+00 : f32
    %332 = vector.broadcast %cst_172 : f32 to vector<1x128xf32>
    %cst_173 = arith.constant 0.000000e+00 : f32
    %333 = vector.broadcast %cst_173 : f32 to vector<3x128xf32>
    %cst_174 = arith.constant 0.000000e+00 : f32
    %334 = vector.broadcast %cst_174 : f32 to vector<1x128xf32>
    %335 = vector.extract_strided_slice %210 {offsets = [0, 0], sizes = [1, 128], strides = [1, 1]} : vector<1x1024xf32> to vector<1x128xf32>
    %336 = arith.mulf %335, %332 : vector<1x128xf32>
    %c0_175 = arith.constant 0 : index
    %c0_176 = arith.constant 0 : index
    %c0_177 = arith.constant 0 : index
    %c0_178 = arith.constant 0 : index
    %337 = vector.load %arg10[%c0_175, %c0_176, %c0_177, %c0_178] : memref<1x8x8x128xf32, #tpu.memory_space<vmem>>, vector<1x1x1x128xf32>
    %338 = vector.shape_cast %337 : vector<1x1x1x128xf32> to vector<1x128xf32>
    %339 = vector.shape_cast %336 : vector<1x128xf32> to vector<1x1x1x128xf32>
    tpu.vector_store %arg10[%c0_175, %c0_176, %c0_177, %c0_178], %339 {strides = array<i32>} : memref<1x8x8x128xf32, #tpu.memory_space<vmem>>, vector<1x1x1x128xf32>,
    %340 = vector.extract_strided_slice %242 {offsets = [0, 0], sizes = [3, 128], strides = [1, 1]} : vector<3x1024xf32> to vector<3x128xf32>
    %341 = vector.broadcast %336 : vector<1x128xf32> to vector<3x128xf32>
    %342 = arith.mulf %341, %340 : vector<3x128xf32>
    %343 = arith.addf %333, %342 : vector<3x128xf32>
    %cst_179 = arith.constant 0.000000e+00 : f32
    %344 = vector.broadcast %cst_179 : f32 to vector<1x128xf32>
    %345 = arith.mulf %336, %344 : vector<1x128xf32>
    %346 = arith.addf %334, %345 : vector<1x128xf32>
    %cst_180 = arith.constant 1.000000e+00 : f32
    %347 = vector.broadcast %cst_180 : f32 to vector<1x128xf32>
    %348 = arith.subf %347, %335 : vector<1x128xf32>
    %349 = arith.mulf %332, %348 : vector<1x128xf32>
    %350 = vector.extract_strided_slice %210 {offsets = [0, 128], sizes = [1, 128], strides = [1, 1]} : vector<1x1024xf32> to vector<1x128xf32>
    %351 = arith.mulf %350, %349 : vector<1x128xf32>
    %c0_181 = arith.constant 0 : index
    %c1_182 = arith.constant 1 : index
    %c0_183 = arith.constant 0 : index
    %c0_184 = arith.constant 0 : index
    %352 = vector.load %arg10[%c0_181, %c1_182, %c0_183, %c0_184] : memref<1x8x8x128xf32, #tpu.memory_space<vmem>>, vector<1x1x1x128xf32>
    %353 = vector.shape_cast %352 : vector<1x1x1x128xf32> to vector<1x128xf32>
    %354 = vector.shape_cast %351 : vector<1x128xf32> to vector<1x1x1x128xf32>
    tpu.vector_store %arg10[%c0_181, %c1_182, %c0_183, %c0_184], %354 {strides = array<i32>} : memref<1x8x8x128xf32, #tpu.memory_space<vmem>>, vector<1x1x1x128xf32>,
    %355 = vector.extract_strided_slice %242 {offsets = [0, 128], sizes = [3, 128], strides = [1, 1]} : vector<3x1024xf32> to vector<3x128xf32>
    %356 = vector.broadcast %351 : vector<1x128xf32> to vector<3x128xf32>
    %357 = arith.mulf %356, %355 : vector<3x128xf32>
    %358 = arith.addf %343, %357 : vector<3x128xf32>
    %cst_185 = arith.constant 1.000000e+00 : f32
    %359 = vector.broadcast %cst_185 : f32 to vector<1x128xf32>
    %360 = arith.mulf %351, %359 : vector<1x128xf32>
    %361 = arith.addf %346, %360 : vector<1x128xf32>
    %cst_186 = arith.constant 1.000000e+00 : f32
    %362 = vector.broadcast %cst_186 : f32 to vector<1x128xf32>
    %363 = arith.subf %362, %350 : vector<1x128xf32>
    %364 = arith.mulf %349, %363 : vector<1x128xf32>
    %365 = vector.extract_strided_slice %210 {offsets = [0, 256], sizes = [1, 128], strides = [1, 1]} : vector<1x1024xf32> to vector<1x128xf32>
    %366 = arith.mulf %365, %364 : vector<1x128xf32>
    %c0_187 = arith.constant 0 : index
    %c2_188 = arith.constant 2 : index
    %c0_189 = arith.constant 0 : index
    %c0_190 = arith.constant 0 : index
    %367 = vector.load %arg10[%c0_187, %c2_188, %c0_189, %c0_190] : memref<1x8x8x128xf32, #tpu.memory_space<vmem>>, vector<1x1x1x128xf32>
    %368 = vector.shape_cast %367 : vector<1x1x1x128xf32> to vector<1x128xf32>
    %369 = vector.shape_cast %366 : vector<1x128xf32> to vector<1x1x1x128xf32>
    tpu.vector_store %arg10[%c0_187, %c2_188, %c0_189, %c0_190], %369 {strides = array<i32>} : memref<1x8x8x128xf32, #tpu.memory_space<vmem>>, vector<1x1x1x128xf32>,
    %370 = vector.extract_strided_slice %242 {offsets = [0, 256], sizes = [3, 128], strides = [1, 1]} : vector<3x1024xf32> to vector<3x128xf32>
    %371 = vector.broadcast %366 : vector<1x128xf32> to vector<3x128xf32>
    %372 = arith.mulf %371, %370 : vector<3x128xf32>
    %373 = arith.addf %358, %372 : vector<3x128xf32>
    %cst_191 = arith.constant 2.000000e+00 : f32
    %374 = vector.broadcast %cst_191 : f32 to vector<1x128xf32>
    %375 = arith.mulf %366, %374 : vector<1x128xf32>
    %376 = arith.addf %361, %375 : vector<1x128xf32>
    %cst_192 = arith.constant 1.000000e+00 : f32
    %377 = vector.broadcast %cst_192 : f32 to vector<1x128xf32>
    %378 = arith.subf %377, %365 : vector<1x128xf32>
    %379 = arith.mulf %364, %378 : vector<1x128xf32>
    %380 = vector.extract_strided_slice %210 {offsets = [0, 384], sizes = [1, 128], strides = [1, 1]} : vector<1x1024xf32> to vector<1x128xf32>
    %381 = arith.mulf %380, %379 : vector<1x128xf32>
    %c0_193 = arith.constant 0 : index
    %c3_194 = arith.constant 3 : index
    %c0_195 = arith.constant 0 : index
    %c0_196 = arith.constant 0 : index
    %382 = vector.load %arg10[%c0_193, %c3_194, %c0_195, %c0_196] : memref<1x8x8x128xf32, #tpu.memory_space<vmem>>, vector<1x1x1x128xf32>
    %383 = vector.shape_cast %382 : vector<1x1x1x128xf32> to vector<1x128xf32>
    %384 = vector.shape_cast %381 : vector<1x128xf32> to vector<1x1x1x128xf32>
    tpu.vector_store %arg10[%c0_193, %c3_194, %c0_195, %c0_196], %384 {strides = array<i32>} : memref<1x8x8x128xf32, #tpu.memory_space<vmem>>, vector<1x1x1x128xf32>,
    %385 = vector.extract_strided_slice %242 {offsets = [0, 384], sizes = [3, 128], strides = [1, 1]} : vector<3x1024xf32> to vector<3x128xf32>
    %386 = vector.broadcast %381 : vector<1x128xf32> to vector<3x128xf32>
    %387 = arith.mulf %386, %385 : vector<3x128xf32>
    %388 = arith.addf %373, %387 : vector<3x128xf32>
    %cst_197 = arith.constant 3.000000e+00 : f32
    %389 = vector.broadcast %cst_197 : f32 to vector<1x128xf32>
    %390 = arith.mulf %381, %389 : vector<1x128xf32>
    %391 = arith.addf %376, %390 : vector<1x128xf32>
    %cst_198 = arith.constant 1.000000e+00 : f32
    %392 = vector.broadcast %cst_198 : f32 to vector<1x128xf32>
    %393 = arith.subf %392, %380 : vector<1x128xf32>
    %394 = arith.mulf %379, %393 : vector<1x128xf32>
    %395 = vector.extract_strided_slice %210 {offsets = [0, 512], sizes = [1, 128], strides = [1, 1]} : vector<1x1024xf32> to vector<1x128xf32>
    %396 = arith.mulf %395, %394 : vector<1x128xf32>
    %c0_199 = arith.constant 0 : index
    %c4_200 = arith.constant 4 : index
    %c0_201 = arith.constant 0 : index
    %c0_202 = arith.constant 0 : index
    %397 = vector.load %arg10[%c0_199, %c4_200, %c0_201, %c0_202] : memref<1x8x8x128xf32, #tpu.memory_space<vmem>>, vector<1x1x1x128xf32>
    %398 = vector.shape_cast %397 : vector<1x1x1x128xf32> to vector<1x128xf32>
    %399 = vector.shape_cast %396 : vector<1x128xf32> to vector<1x1x1x128xf32>
    tpu.vector_store %arg10[%c0_199, %c4_200, %c0_201, %c0_202], %399 {strides = array<i32>} : memref<1x8x8x128xf32, #tpu.memory_space<vmem>>, vector<1x1x1x128xf32>,
    %400 = vector.extract_strided_slice %242 {offsets = [0, 512], sizes = [3, 128], strides = [1, 1]} : vector<3x1024xf32> to vector<3x128xf32>
    %401 = vector.broadcast %396 : vector<1x128xf32> to vector<3x128xf32>
    %402 = arith.mulf %401, %400 : vector<3x128xf32>
    %403 = arith.addf %388, %402 : vector<3x128xf32>
    %cst_203 = arith.constant 4.000000e+00 : f32
    %404 = vector.broadcast %cst_203 : f32 to vector<1x128xf32>
    %405 = arith.mulf %396, %404 : vector<1x128xf32>
    %406 = arith.addf %391, %405 : vector<1x128xf32>
    %cst_204 = arith.constant 1.000000e+00 : f32
    %407 = vector.broadcast %cst_204 : f32 to vector<1x128xf32>
    %408 = arith.subf %407, %395 : vector<1x128xf32>
    %409 = arith.mulf %394, %408 : vector<1x128xf32>
    %410 = vector.extract_strided_slice %210 {offsets = [0, 640], sizes = [1, 128], strides = [1, 1]} : vector<1x1024xf32> to vector<1x128xf32>
    %411 = arith.mulf %410, %409 : vector<1x128xf32>
    %c0_205 = arith.constant 0 : index
    %c5_206 = arith.constant 5 : index
    %c0_207 = arith.constant 0 : index
    %c0_208 = arith.constant 0 : index
    %412 = vector.load %arg10[%c0_205, %c5_206, %c0_207, %c0_208] : memref<1x8x8x128xf32, #tpu.memory_space<vmem>>, vector<1x1x1x128xf32>
    %413 = vector.shape_cast %412 : vector<1x1x1x128xf32> to vector<1x128xf32>
    %414 = vector.shape_cast %411 : vector<1x128xf32> to vector<1x1x1x128xf32>
    tpu.vector_store %arg10[%c0_205, %c5_206, %c0_207, %c0_208], %414 {strides = array<i32>} : memref<1x8x8x128xf32, #tpu.memory_space<vmem>>, vector<1x1x1x128xf32>,
    %415 = vector.extract_strided_slice %242 {offsets = [0, 640], sizes = [3, 128], strides = [1, 1]} : vector<3x1024xf32> to vector<3x128xf32>
    %416 = vector.broadcast %411 : vector<1x128xf32> to vector<3x128xf32>
    %417 = arith.mulf %416, %415 : vector<3x128xf32>
    %418 = arith.addf %403, %417 : vector<3x128xf32>
    %cst_209 = arith.constant 5.000000e+00 : f32
    %419 = vector.broadcast %cst_209 : f32 to vector<1x128xf32>
    %420 = arith.mulf %411, %419 : vector<1x128xf32>
    %421 = arith.addf %406, %420 : vector<1x128xf32>
    %cst_210 = arith.constant 1.000000e+00 : f32
    %422 = vector.broadcast %cst_210 : f32 to vector<1x128xf32>
    %423 = arith.subf %422, %410 : vector<1x128xf32>
    %424 = arith.mulf %409, %423 : vector<1x128xf32>
    %425 = vector.extract_strided_slice %210 {offsets = [0, 768], sizes = [1, 128], strides = [1, 1]} : vector<1x1024xf32> to vector<1x128xf32>
    %426 = arith.mulf %425, %424 : vector<1x128xf32>
    %c0_211 = arith.constant 0 : index
    %c6_212 = arith.constant 6 : index
    %c0_213 = arith.constant 0 : index
    %c0_214 = arith.constant 0 : index
    %427 = vector.load %arg10[%c0_211, %c6_212, %c0_213, %c0_214] : memref<1x8x8x128xf32, #tpu.memory_space<vmem>>, vector<1x1x1x128xf32>
    %428 = vector.shape_cast %427 : vector<1x1x1x128xf32> to vector<1x128xf32>
    %429 = vector.shape_cast %426 : vector<1x128xf32> to vector<1x1x1x128xf32>
    tpu.vector_store %arg10[%c0_211, %c6_212, %c0_213, %c0_214], %429 {strides = array<i32>} : memref<1x8x8x128xf32, #tpu.memory_space<vmem>>, vector<1x1x1x128xf32>,
    %430 = vector.extract_strided_slice %242 {offsets = [0, 768], sizes = [3, 128], strides = [1, 1]} : vector<3x1024xf32> to vector<3x128xf32>
    %431 = vector.broadcast %426 : vector<1x128xf32> to vector<3x128xf32>
    %432 = arith.mulf %431, %430 : vector<3x128xf32>
    %433 = arith.addf %418, %432 : vector<3x128xf32>
    %cst_215 = arith.constant 6.000000e+00 : f32
    %434 = vector.broadcast %cst_215 : f32 to vector<1x128xf32>
    %435 = arith.mulf %426, %434 : vector<1x128xf32>
    %436 = arith.addf %421, %435 : vector<1x128xf32>
    %cst_216 = arith.constant 1.000000e+00 : f32
    %437 = vector.broadcast %cst_216 : f32 to vector<1x128xf32>
    %438 = arith.subf %437, %425 : vector<1x128xf32>
    %439 = arith.mulf %424, %438 : vector<1x128xf32>
    %440 = vector.extract_strided_slice %210 {offsets = [0, 896], sizes = [1, 128], strides = [1, 1]} : vector<1x1024xf32> to vector<1x128xf32>
    %441 = arith.mulf %440, %439 : vector<1x128xf32>
    %c0_217 = arith.constant 0 : index
    %c7_218 = arith.constant 7 : index
    %c0_219 = arith.constant 0 : index
    %c0_220 = arith.constant 0 : index
    %442 = vector.load %arg10[%c0_217, %c7_218, %c0_219, %c0_220] : memref<1x8x8x128xf32, #tpu.memory_space<vmem>>, vector<1x1x1x128xf32>
    %443 = vector.shape_cast %442 : vector<1x1x1x128xf32> to vector<1x128xf32>
    %444 = vector.shape_cast %441 : vector<1x128xf32> to vector<1x1x1x128xf32>
    tpu.vector_store %arg10[%c0_217, %c7_218, %c0_219, %c0_220], %444 {strides = array<i32>} : memref<1x8x8x128xf32, #tpu.memory_space<vmem>>, vector<1x1x1x128xf32>,
    %445 = vector.extract_strided_slice %242 {offsets = [0, 896], sizes = [3, 128], strides = [1, 1]} : vector<3x1024xf32> to vector<3x128xf32>
    %446 = vector.broadcast %441 : vector<1x128xf32> to vector<3x128xf32>
    %447 = arith.mulf %446, %445 : vector<3x128xf32>
    %448 = arith.addf %433, %447 : vector<3x128xf32>
    %cst_221 = arith.constant 7.000000e+00 : f32
    %449 = vector.broadcast %cst_221 : f32 to vector<1x128xf32>
    %450 = arith.mulf %441, %449 : vector<1x128xf32>
    %451 = arith.addf %436, %450 : vector<1x128xf32>
    %cst_222 = arith.constant 1.000000e+00 : f32
    %452 = vector.broadcast %cst_222 : f32 to vector<1x128xf32>
    %453 = arith.subf %452, %440 : vector<1x128xf32>
    %454 = arith.mulf %439, %453 : vector<1x128xf32>
    %cst_223 = arith.constant 1.000000e+00 : f32
    %455 = vector.broadcast %cst_223 : f32 to vector<1x128xf32>
    %456 = arith.mulf %454, %455 : vector<1x128xf32>
    %457 = vector.broadcast %456 : vector<1x128xf32> to vector<3x128xf32>
    %458 = arith.addf %448, %457 : vector<3x128xf32>
    %c0_224 = arith.constant 0 : index
    %c0_225 = arith.constant 0 : index
    %c0_226 = arith.constant 0 : index
    %459 = vector.load %arg11[%c0_224, %c0_225, %c0_226] : memref<1x8x128xf32, #tpu.memory_space<vmem>>, vector<1x3x128xf32>
    %460 = vector.shape_cast %459 : vector<1x3x128xf32> to vector<3x128xf32>
    %461 = vector.shape_cast %458 : vector<3x128xf32> to vector<1x3x128xf32>
    tpu.vector_store %arg11[%c0_224, %c0_225, %c0_226], %461 {strides = array<i32>} : memref<1x8x128xf32, #tpu.memory_space<vmem>>, vector<1x3x128xf32>,
    %c0_227 = arith.constant 0 : index
    %c3_228 = arith.constant 3 : index
    %c0_229 = arith.constant 0 : index
    %462 = vector.load %arg11[%c0_227, %c3_228, %c0_229] : memref<1x8x128xf32, #tpu.memory_space<vmem>>, vector<1x1x128xf32>
    %463 = vector.shape_cast %462 : vector<1x1x128xf32> to vector<1x128xf32>
    %464 = vector.shape_cast %454 : vector<1x128xf32> to vector<1x1x128xf32>
    tpu.vector_store %arg11[%c0_227, %c3_228, %c0_229], %464 {strides = array<i32>} : memref<1x8x128xf32, #tpu.memory_space<vmem>>, vector<1x1x128xf32>,
    %c0_230 = arith.constant 0 : index
    %c4_231 = arith.constant 4 : index
    %c0_232 = arith.constant 0 : index
    %465 = vector.load %arg11[%c0_230, %c4_231, %c0_232] : memref<1x8x128xf32, #tpu.memory_space<vmem>>, vector<1x1x128xf32>
    %466 = vector.shape_cast %465 : vector<1x1x128xf32> to vector<1x128xf32>
    %467 = vector.shape_cast %451 : vector<1x128xf32> to vector<1x1x128xf32>
    tpu.vector_store %arg11[%c0_230, %c4_231, %c0_232], %467 {strides = array<i32>} : memref<1x8x128xf32, #tpu.memory_space<vmem>>, vector<1x1x128xf32>,
    %c0_233 = arith.constant 0 : index
    %c5_234 = arith.constant 5 : index
    %c0_235 = arith.constant 0 : index
    %468 = vector.load %arg11[%c0_233, %c5_234, %c0_235] : memref<1x8x128xf32, #tpu.memory_space<vmem>>, vector<1x3x128xf32>
    %469 = vector.shape_cast %468 : vector<1x3x128xf32> to vector<3x128xf32>
    %470 = vector.shape_cast %243 : vector<3x128xf32> to vector<1x3x128xf32>
    tpu.vector_store %arg11[%c0_233, %c5_234, %c0_235], %470 {strides = array<i32>} : memref<1x8x128xf32, #tpu.memory_space<vmem>>, vector<1x3x128xf32>,
    return
  }
  func.func @transform_0(%arg0: i32) -> (i32, i32, i32) {
    %c0_i32 = arith.constant 0 : i32
    %c0_i32_0 = arith.constant 0 : i32
    %c0_i32_1 = arith.constant 0 : i32
    return %arg0, %c0_i32, %c0_i32_0 : i32, i32, i32
  }
  func.func @transform_1(%arg0: i32) -> (i32, i32, i32) {
    %c0_i32 = arith.constant 0 : i32
    %c0_i32_0 = arith.constant 0 : i32
    %c0_i32_1 = arith.constant 0 : i32
    return %arg0, %c0_i32, %c0_i32_0 : i32, i32, i32
  }
  func.func @transform_2(%arg0: i32) -> (i32, i32) {
    %c0_i32 = arith.constant 0 : i32
    %c0_i32_0 = arith.constant 0 : i32
    %c0_i32_1 = arith.constant 0 : i32
    return %c0_i32, %c0_i32_0 : i32, i32
  }
  func.func @transform_3(%arg0: i32) -> (i32, i32) {
    %c0_i32 = arith.constant 0 : i32
    %c0_i32_0 = arith.constant 0 : i32
    %c0_i32_1 = arith.constant 0 : i32
    return %c0_i32, %c0_i32_0 : i32, i32
  }
  func.func @transform_4(%arg0: i32) -> (i32, i32) {
    %c0_i32 = arith.constant 0 : i32
    %c0_i32_0 = arith.constant 0 : i32
    %c0_i32_1 = arith.constant 0 : i32
    return %c0_i32, %c0_i32_0 : i32, i32
  }
  func.func @transform_5(%arg0: i32) -> (i32, i32) {
    %c0_i32 = arith.constant 0 : i32
    %c0_i32_0 = arith.constant 0 : i32
    %c0_i32_1 = arith.constant 0 : i32
    return %c0_i32, %c0_i32_0 : i32, i32
  }
  func.func @transform_6(%arg0: i32) -> (i32, i32) {
    %c0_i32 = arith.constant 0 : i32
    %c0_i32_0 = arith.constant 0 : i32
    %c0_i32_1 = arith.constant 0 : i32
    return %c0_i32, %c0_i32_0 : i32, i32
  }
  func.func @transform_7(%arg0: i32) -> (i32, i32) {
    %c0_i32 = arith.constant 0 : i32
    %c0_i32_0 = arith.constant 0 : i32
    %c0_i32_1 = arith.constant 0 : i32
    return %c0_i32, %c0_i32_0 : i32, i32
  }
  func.func @transform_8(%arg0: i32) -> (i32, i32) {
    %c0_i32 = arith.constant 0 : i32
    %c0_i32_0 = arith.constant 0 : i32
    %c0_i32_1 = arith.constant 0 : i32
    return %c0_i32, %c0_i32_0 : i32, i32
  }
  func.func @transform_9(%arg0: i32) -> (i32, i32, i32, i32) {
    %c0_i32 = arith.constant 0 : i32
    %c0_i32_0 = arith.constant 0 : i32
    %c0_i32_1 = arith.constant 0 : i32
    %c0_i32_2 = arith.constant 0 : i32
    return %arg0, %c0_i32, %c0_i32_0, %c0_i32_1 : i32, i32, i32, i32
  }
  func.func @transform_10(%arg0: i32) -> (i32, i32, i32) {
    %c0_i32 = arith.constant 0 : i32
    %c0_i32_0 = arith.constant 0 : i32
    %c0_i32_1 = arith.constant 0 : i32
    return %arg0, %c0_i32, %c0_i32_0 : i32, i32, i32
  }
}

</mosaic_0001>

<llo_original>
// kernel: tpu_custom_call.1
$region0: #{tpu_custom_call.1}
  #allocation0 [shape = 'u32[]', space=smem, size = 0x4, offset = 0x4, fixed_abs, tag = 'smem constant byte address 0x4 - core index']
  #allocation1 [shape = 'u32[72,128]{1,0:T(1,128)}', space=vmem, size = 0x9000, scoped, tag = 'internal scratch']
  %s0 = inlined_call_operand.vmem [shape: f32[2,3,1024], index: 0, kind: input, shape index: {}]
  %s1 = inlined_call_operand.hbm [shape: bf16[2,32,1024], index: 1, kind: input, shape index: {}]
  %s2 = inlined_call_operand.vmem [shape: bf16[128,64], index: 2, kind: input, shape index: {}]
  %s3 = inlined_call_operand.vmem [shape: bf16[128,16], index: 3, kind: input, shape index: {}]
  %s4 = inlined_call_operand.vmem [shape: bf16[128,32], index: 4, kind: input, shape index: {}]
  %s5 = inlined_call_operand.vmem [shape: bf16[128,128], index: 5, kind: input, shape index: {}]
  %s6 = inlined_call_operand.vmem [shape: f32[128,1], index: 6, kind: input, shape index: {}]
  %s7 = inlined_call_operand.vmem [shape: bf16[3,128], index: 7, kind: input, shape index: {}]
  %s8 = inlined_call_operand.vmem [shape: f32[3,1], index: 8, kind: input, shape index: {}]
  %s9 = inlined_call_operand.hbm [shape: f32[2,8,8,128], index: 9, kind: output, shape index: {0}]
  %s10 = inlined_call_operand.hbm [shape: f32[2,8,128], index: 10, kind: output, shape index: {1}]
  %11 = xla_tuple %s9, %s10
  %s12 = sld [smem:[#allocation0]]
  $region81: #{tpu_custom_call.1} parent=0
    _
  %s14 = ssub.s32 1, %s12
  %s15 = scalar_select 0, %s14, %s12
  $region1: #{tpu_custom_call.1} parent=0
    #allocation2 [shape = 'u8[131072]{0}', space=vmem, size = 0x20000, scoped, tag = 'input window, operand 1']
    #allocation3 [shape = 's32[2]{0}', space=sflag, size = 0x8, scoped, tag = 'scoped memory for tpu_custom_call.1']
    #allocation4 [shape = 's32[2]{0}', space=sflag, size = 0x8, scoped, tag = 'scoped memory for tpu_custom_call.1']
    #allocation5 [shape = 'u8[65536]{0}', space=vmem, size = 0x10000, scoped, tag = 'output window, operand 0']
    #allocation6 [shape = 'u8[8192]{0}', space=vmem, size = 0x2000, scoped, tag = 'output window, operand 1']
    #allocation7 [shape = 's32[2]{0}', space=sflag, size = 0x8, scoped, tag = 'scoped memory for tpu_custom_call.1']
    %16 = vsyncpa [#allocation3], 0
    %s17 = scalar_lea.sflag [#allocation3], 1
    %18 = vsyncpa %s17, 0
    %19 = vsyncpa [#allocation4], 0
    %s20 = scalar_lea.sflag [#allocation4], 1
    %21 = vsyncpa %s20, 0
    %22 = vsyncpa [#allocation7], 0
    %s23 = scalar_lea.sflag [#allocation7], 1
    %24 = vsyncpa %s23, 0
    loop: start=0, step=1, limit=4
    $region2: #{tpu_custom_call.1} parent=1 // loop_pre_header
      _
    $region3: #{tpu_custom_call.1} parent=1 // loop_header
      %s26 = sphi 0, %s30
      %p27 = scmp.ge.s32.totalorder %s26, 4
      %s36 = sphi 0, %s38
      %s39 = sphi 0, %s36
      %s40 = sphi 0, %s39
      %s56 = sphi 0, %s40
      %s62 = sphi 0, %s64
      %s65 = sphi 0, %s62
      %s66 = sphi 0, %s65
      %s82 = sphi 0, %s66
      %s86 = sphi 0, %s86
      %s88 = sphi 0, %s86
      %s89 = sphi 0, %s88
      %s103 = sphi 0, %s89
      %s107 = sphi 0, %s107
      %s109 = sphi 0, %s107
      %s110 = sphi 0, %s109
      %s124 = sphi 0, %s110
      %s128 = sphi 0, %s128
      %s130 = sphi 0, %s128
      %s131 = sphi 0, %s130
      %s145 = sphi 0, %s131
      %s149 = sphi 0, %s149
      %s151 = sphi 0, %s149
      %s152 = sphi 0, %s151
      %s166 = sphi 0, %s152
      %s170 = sphi 0, %s170
      %s172 = sphi 0, %s170
      %s173 = sphi 0, %s172
      %s187 = sphi 0, %s173
      %s191 = sphi 0, %s191
      %s193 = sphi 0, %s191
      %s194 = sphi 0, %s193
      %s208 = sphi 0, %s194
      %s212 = sphi 0, %s212
      %s214 = sphi 0, %s212
      %s215 = sphi 0, %s214
      %s229 = sphi 0, %s215
      %s235 = sphi 0, %s237
      %s238 = sphi 0, %s235
      %s239 = sphi 0, %s238
      %s255 = sphi 0, %s239
      %s261 = sphi 0, %s263
      %s264 = sphi 0, %s261
      %s265 = sphi 0, %s264
      %s281 = sphi 0, %s265
    $region4: #{tpu_custom_call.1} parent=1 // loop_header_branch
      %29 = sbr.rel (%p27) target = $region8
    $region5: #{tpu_custom_call.1} parent=1 // loop_body
      %s31 = ssub.s32 %s26, 1
      %s32 = ssub.s32 %s26, 2
      %s33 = sadd.s32 %s26, 1
      %s34 = ssub.s32 %s26, %s33
      %p35 = scmp.eq.s32.totalorder %s34, 0
      %s37 = sadd.s32 %s36, 1
      %s38 = scalar_select %p35, %s36, %s37
      %p41 = pneg %p35
      %p42 = scmp.eq.s32.totalorder %s26, 1
      %p43 = por %p41, %p42
      %p44 = scmp.ne.s32.totalorder %s36, %s39
      %p45 = scmp.eq.s32.totalorder %s26, 0
      %p46 = por %p44, %p45
      %p47 = scmp.ne.s32.totalorder %s36, %s39
      %p48 = scmp.eq.s32.totalorder %s31, 1
      %p49 = por %p47, %p48
      %p50 = scmp.ne.s32.totalorder %s39, %s40
      %p51 = scmp.eq.s32.totalorder %s31, 0
      %p52 = por %p50, %p51
      %p53 = scmp.ne.s32.totalorder %s39, %s40
      %p54 = scmp.eq.s32.totalorder %s32, 1
      %p55 = por %p53, %p54
      %p57 = scmp.ne.s32.totalorder %s40, %s56
      %p58 = scmp.eq.s32.totalorder %s32, 0
      %p59 = por %p57, %p58
      %s60 = ssub.s32 %s26, %s33
      %p61 = scmp.eq.s32.totalorder %s60, 0
      %s63 = sadd.s32 %s62, 1
      %s64 = scalar_select %p61, %s62, %s63
      %p67 = pneg %p61
      %p68 = scmp.eq.s32.totalorder %s26, 1
      %p69 = por %p67, %p68
      %p70 = scmp.ne.s32.totalorder %s62, %s65
      %p71 = scmp.eq.s32.totalorder %s26, 0
      %p72 = por %p70, %p71
      %p73 = scmp.ne.s32.totalorder %s62, %s65
      %p74 = scmp.eq.s32.totalorder %s31, 1
      %p75 = por %p73, %p74
      %p76 = scmp.ne.s32.totalorder %s65, %s66
      %p77 = scmp.eq.s32.totalorder %s31, 0
      %p78 = por %p76, %p77
      %p79 = scmp.ne.s32.totalorder %s65, %s66
      %p80 = scmp.eq.s32.totalorder %s32, 1
      %p81 = por %p79, %p80
      %p83 = scmp.ne.s32.totalorder %s66, %s82
      %p84 = scmp.eq.s32.totalorder %s32, 0
      %p85 = por %p83, %p84
      %s87 = sadd.s32 %s86, 1
      %p90 = scmp.eq.s32.totalorder %s26, 1
      %p91 = scmp.ne.s32.totalorder %s86, %s88
      %p92 = scmp.eq.s32.totalorder %s26, 0
      %p93 = por %p91, %p92
      %p94 = scmp.ne.s32.totalorder %s86, %s88
      %p95 = scmp.eq.s32.totalorder %s31, 1
      %p96 = por %p94, %p95
      %p97 = scmp.ne.s32.totalorder %s88, %s89
      %p98 = scmp.eq.s32.totalorder %s31, 0
      %p99 = por %p97, %p98
      %p100 = scmp.ne.s32.totalorder %s88, %s89
      %p101 = scmp.eq.s32.totalorder %s32, 1
      %p102 = por %p100, %p101
      %p104 = scmp.ne.s32.totalorder %s89, %s103
      %p105 = scmp.eq.s32.totalorder %s32, 0
      %p106 = por %p104, %p105
      %s108 = sadd.s32 %s107, 1
      %p111 = scmp.eq.s32.totalorder %s26, 1
      %p112 = scmp.ne.s32.totalorder %s107, %s109
      %p113 = scmp.eq.s32.totalorder %s26, 0
      %p114 = por %p112, %p113
      %p115 = scmp.ne.s32.totalorder %s107, %s109
      %p116 = scmp.eq.s32.totalorder %s31, 1
      %p117 = por %p115, %p116
      %p118 = scmp.ne.s32.totalorder %s109, %s110
      %p119 = scmp.eq.s32.totalorder %s31, 0
      %p120 = por %p118, %p119
      %p121 = scmp.ne.s32.totalorder %s109, %s110
      %p122 = scmp.eq.s32.totalorder %s32, 1
      %p123 = por %p121, %p122
      %p125 = scmp.ne.s32.totalorder %s110, %s124
      %p126 = scmp.eq.s32.totalorder %s32, 0
      %p127 = por %p125, %p126
      %s129 = sadd.s32 %s128, 1
      %p132 = scmp.eq.s32.totalorder %s26, 1
      %p133 = scmp.ne.s32.totalorder %s128, %s130
      %p134 = scmp.eq.s32.totalorder %s26, 0
      %p135 = por %p133, %p134
      %p136 = scmp.ne.s32.totalorder %s128, %s130
      %p137 = scmp.eq.s32.totalorder %s31, 1
      %p138 = por %p136, %p137
      %p139 = scmp.ne.s32.totalorder %s130, %s131
      %p140 = scmp.eq.s32.totalorder %s31, 0
      %p141 = por %p139, %p140
      %p142 = scmp.ne.s32.totalorder %s130, %s131
      %p143 = scmp.eq.s32.totalorder %s32, 1
      %p144 = por %p142, %p143
      %p146 = scmp.ne.s32.totalorder %s131, %s145
      %p147 = scmp.eq.s32.totalorder %s32, 0
      %p148 = por %p146, %p147
      %s150 = sadd.s32 %s149, 1
      %p153 = scmp.eq.s32.totalorder %s26, 1
      %p154 = scmp.ne.s32.totalorder %s149, %s151
      %p155 = scmp.eq.s32.totalorder %s26, 0
      %p156 = por %p154, %p155
      %p157 = scmp.ne.s32.totalorder %s149, %s151
      %p158 = scmp.eq.s32.totalorder %s31, 1
      %p159 = por %p157, %p158
      %p160 = scmp.ne.s32.totalorder %s151, %s152
      %p161 = scmp.eq.s32.totalorder %s31, 0
      %p162 = por %p160, %p161
      %p163 = scmp.ne.s32.totalorder %s151, %s152
      %p164 = scmp.eq.s32.totalorder %s32, 1
      %p165 = por %p163, %p164
      %p167 = scmp.ne.s32.totalorder %s152, %s166
      %p168 = scmp.eq.s32.totalorder %s32, 0
      %p169 = por %p167, %p168
      %s171 = sadd.s32 %s170, 1
      %p174 = scmp.eq.s32.totalorder %s26, 1
      %p175 = scmp.ne.s32.totalorder %s170, %s172
      %p176 = scmp.eq.s32.totalorder %s26, 0
      %p177 = por %p175, %p176
      %p178 = scmp.ne.s32.totalorder %s170, %s172
      %p179 = scmp.eq.s32.totalorder %s31, 1
      %p180 = por %p178, %p179
      %p181 = scmp.ne.s32.totalorder %s172, %s173
      %p182 = scmp.eq.s32.totalorder %s31, 0
      %p183 = por %p181, %p182
      %p184 = scmp.ne.s32.totalorder %s172, %s173
      %p185 = scmp.eq.s32.totalorder %s32, 1
      %p186 = por %p184, %p185
      %p188 = scmp.ne.s32.totalorder %s173, %s187
      %p189 = scmp.eq.s32.totalorder %s32, 0
      %p190 = por %p188, %p189
      %s192 = sadd.s32 %s191, 1
      %p195 = scmp.eq.s32.totalorder %s26, 1
      %p196 = scmp.ne.s32.totalorder %s191, %s193
      %p197 = scmp.eq.s32.totalorder %s26, 0
      %p198 = por %p196, %p197
      %p199 = scmp.ne.s32.totalorder %s191, %s193
      %p200 = scmp.eq.s32.totalorder %s31, 1
      %p201 = por %p199, %p200
      %p202 = scmp.ne.s32.totalorder %s193, %s194
      %p203 = scmp.eq.s32.totalorder %s31, 0
      %p204 = por %p202, %p203
      %p205 = scmp.ne.s32.totalorder %s193, %s194
      %p206 = scmp.eq.s32.totalorder %s32, 1
      %p207 = por %p205, %p206
      %p209 = scmp.ne.s32.totalorder %s194, %s208
      %p210 = scmp.eq.s32.totalorder %s32, 0
      %p211 = por %p209, %p210
      %s213 = sadd.s32 %s212, 1
      %p216 = scmp.eq.s32.totalorder %s26, 1
      %p217 = scmp.ne.s32.totalorder %s212, %s214
      %p218 = scmp.eq.s32.totalorder %s26, 0
      %p219 = por %p217, %p218
      %p220 = scmp.ne.s32.totalorder %s212, %s214
      %p221 = scmp.eq.s32.totalorder %s31, 1
      %p222 = por %p220, %p221
      %p223 = scmp.ne.s32.totalorder %s214, %s215
      %p224 = scmp.eq.s32.totalorder %s31, 0
      %p225 = por %p223, %p224
      %p226 = scmp.ne.s32.totalorder %s214, %s215
      %p227 = scmp.eq.s32.totalorder %s32, 1
      %p228 = por %p226, %p227
      %p230 = scmp.ne.s32.totalorder %s215, %s229
      %p231 = scmp.eq.s32.totalorder %s32, 0
      %p232 = por %p230, %p231
      %s233 = ssub.s32 %s26, %s33
      %p234 = scmp.eq.s32.totalorder %s233, 0
      %s236 = sadd.s32 %s235, 1
      %s237 = scalar_select %p234, %s235, %s236
      %p240 = pneg %p234
      %p241 = scmp.eq.s32.totalorder %s26, 1
      %p242 = por %p240, %p241
      %p243 = scmp.ne.s32.totalorder %s235, %s238
      %p244 = scmp.eq.s32.totalorder %s26, 0
      %p245 = por %p243, %p244
      %p246 = scmp.ne.s32.totalorder %s235, %s238
      %p247 = scmp.eq.s32.totalorder %s31, 1
      %p248 = por %p246, %p247
      %p249 = scmp.ne.s32.totalorder %s238, %s239
      %p250 = scmp.eq.s32.totalorder %s31, 0
      %p251 = por %p249, %p250
      %p252 = scmp.ne.s32.totalorder %s238, %s239
      %p253 = scmp.eq.s32.totalorder %s32, 1
      %p254 = por %p252, %p253
      %p256 = scmp.ne.s32.totalorder %s239, %s255
      %p257 = scmp.eq.s32.totalorder %s32, 0
      %p258 = por %p256, %p257
      %s259 = ssub.s32 %s26, %s33
      %p260 = scmp.eq.s32.totalorder %s259, 0
      %s262 = sadd.s32 %s261, 1
      %s263 = scalar_select %p260, %s261, %s262
      %p266 = pneg %p260
      %p267 = scmp.eq.s32.totalorder %s26, 1
      %p268 = por %p266, %p267
      %p269 = scmp.ne.s32.totalorder %s261, %s264
      %p270 = scmp.eq.s32.totalorder %s26, 0
      %p271 = por %p269, %p270
      %p272 = scmp.ne.s32.totalorder %s261, %s264
      %p273 = scmp.eq.s32.totalorder %s31, 1
      %p274 = por %p272, %p273
      %p275 = scmp.ne.s32.totalorder %s264, %s265
      %p276 = scmp.eq.s32.totalorder %s31, 0
      %p277 = por %p275, %p276
      %p278 = scmp.ne.s32.totalorder %s264, %s265
      %p279 = scmp.eq.s32.totalorder %s32, 1
      %p280 = por %p278, %p279
      %p282 = scmp.ne.s32.totalorder %s265, %s281
      %p283 = scmp.eq.s32.totalorder %s32, 0
      %p284 = por %p282, %p283
      %p285 = scmp.le.s32.totalorder 1, %s26
      %p286 = scmp.lt.s32.totalorder %s26, 3
      %p287 = pnand %p285, %p286
      %p288 = pneg %p287
      // Predicated region
      $region9: #{tpu_custom_call.1} parent=5 // pred_check
        _
      $region10: #{tpu_custom_call.1} parent=5 // pred_check_branch
        %290 = sbr.rel (%p287) target = $region12
      $region11: #{tpu_custom_call.1} parent=5 // pred_region
        %s291 = ssub.s32 %s26, 1
        // Predicated region
        $region13: #{tpu_custom_call.1} parent=11 // pred_check
          %p292 = pneg %p99
        $region14: #{tpu_custom_call.1} parent=11 // pred_check_branch
          %294 = sbr.rel (%p292) target = $region16
        $region15: #{tpu_custom_call.1} parent=11 // pred_region
          _
        $region16: #{tpu_custom_call.1} parent=11 // pred_fallthru
          _
        // Predicated region
        $region17: #{tpu_custom_call.1} parent=11 // pred_check
          %p295 = pneg %p120
        $region18: #{tpu_custom_call.1} parent=11 // pred_check_branch
          %297 = sbr.rel (%p295) target = $region20
        $region19: #{tpu_custom_call.1} parent=11 // pred_region
          _
        $region20: #{tpu_custom_call.1} parent=11 // pred_fallthru
          _
        // Predicated region
        $region21: #{tpu_custom_call.1} parent=11 // pred_check
          %p298 = pneg %p141
        $region22: #{tpu_custom_call.1} parent=11 // pred_check_branch
          %300 = sbr.rel (%p298) target = $region24
        $region23: #{tpu_custom_call.1} parent=11 // pred_region
          _
        $region24: #{tpu_custom_call.1} parent=11 // pred_fallthru
          _
        // Predicated region
        $region25: #{tpu_custom_call.1} parent=11 // pred_check
          %p301 = pneg %p162
        $region26: #{tpu_custom_call.1} parent=11 // pred_check_branch
          %303 = sbr.rel (%p301) target = $region28
        $region27: #{tpu_custom_call.1} parent=11 // pred_region
          _
        $region28: #{tpu_custom_call.1} parent=11 // pred_fallthru
          _
        // Predicated region
        $region29: #{tpu_custom_call.1} parent=11 // pred_check
          %p304 = pneg %p183
        $region30: #{tpu_custom_call.1} parent=11 // pred_check_branch
          %306 = sbr.rel (%p304) target = $region32
        $region31: #{tpu_custom_call.1} parent=11 // pred_region
          _
        $region32: #{tpu_custom_call.1} parent=11 // pred_fallthru
          _
        // Predicated region
        $region33: #{tpu_custom_call.1} parent=11 // pred_check
          %p307 = pneg %p204
        $region34: #{tpu_custom_call.1} parent=11 // pred_check_branch
          %309 = sbr.rel (%p307) target = $region36
        $region35: #{tpu_custom_call.1} parent=11 // pred_region
          _
        $region36: #{tpu_custom_call.1} parent=11 // pred_fallthru
          _
        // Predicated region
        $region37: #{tpu_custom_call.1} parent=11 // pred_check
          %p310 = pneg %p225
        $region38: #{tpu_custom_call.1} parent=11 // pred_check_branch
          %312 = sbr.rel (%p310) target = $region40
        $region39: #{tpu_custom_call.1} parent=11 // pred_region
          _
        $region40: #{tpu_custom_call.1} parent=11 // pred_fallthru
          _
      $region12: #{tpu_custom_call.1} parent=5 // pred_fallthru
        _
      %p313 = scmp.lt.s32.totalorder %s26, 2
      // Predicated region
      $region41: #{tpu_custom_call.1} parent=5 // pred_check
        %p314 = pneg %p313
      $region42: #{tpu_custom_call.1} parent=5 // pred_check_branch
        %316 = sbr.rel (%p314) target = $region44
      $region43: #{tpu_custom_call.1} parent=5 // pred_region
        // Predicated region
        $region45: #{tpu_custom_call.1} parent=43 // pred_check
          %p317 = pneg %p46
        $region46: #{tpu_custom_call.1} parent=43 // pred_check_branch
          %319 = sbr.rel (%p317) target = $region48
        $region47: #{tpu_custom_call.1} parent=43 // pred_region
          %p320 = scmp.lt.s32.totalorder %s26, 1
          %s321 = scalar_select %p320, %s26, 1
          %s322 = smul.addr %s321, 8
          %s323 = smul.addr %s322, 4
          %s324 = scalar_lea.vmem %s0, %s323
        $region48: #{tpu_custom_call.1} parent=43 // pred_fallthru
          _
        // Predicated region
        $region49: #{tpu_custom_call.1} parent=43 // pred_check
          %p325 = pneg %p72
        $region50: #{tpu_custom_call.1} parent=43 // pred_check_branch
          %327 = sbr.rel (%p325) target = $region52
        $region51: #{tpu_custom_call.1} parent=43 // pred_region
          %s328 = sand.u32 %s62, 1
          %s329 = scalar_lea.sflag [#allocation3], %s328
          %s330 = sand.u32 %s62, 1
          %s331 = smul.addr %s330, 128
          %s332 = scalar_lea.vmem [#allocation2], %s331
          %334 = vsyncadd %s329, 0
          %s335 = smul.addr %s26, 32
          %s336 = smul.addr %s335, 4
          %s337 = scalar_lea.hbm %s1, %s336
          %s338 = sshll.u32 %s337, 4
          %s339 = int_to_ptr.hbm [resolvable:$true] %s338
          %s340 = sshll.u32 %s332, 4
          %s341 = int_to_ptr.vmem [resolvable:$true] %s340
          %346 = dma.hbm_to_vmem [thread:$0]  %s339, 2048, %s341, %s329, 512, 512, 32
        $region52: #{tpu_custom_call.1} parent=43 // pred_fallthru
          _
      $region44: #{tpu_custom_call.1} parent=5 // pred_fallthru
        _
      %p347 = scmp.le.s32.totalorder 1, %s26
      %p348 = scmp.lt.s32.totalorder %s26, 3
      %p349 = pnand %p347, %p348
      %p350 = pneg %p349
      // Predicated region
      $region53: #{tpu_custom_call.1} parent=5 // pred_check
        _
      $region54: #{tpu_custom_call.1} parent=5 // pred_check_branch
        %352 = sbr.rel (%p349) target = $region56
      $region55: #{tpu_custom_call.1} parent=5 // pred_region
        %s353 = ssub.s32 %s26, 1
        %s354 = sand.u32 %s65, 1
        %s355 = scalar_lea.sflag [#allocation3], %s354
        %s356 = sand.u32 %s65, 1
        %s357 = smul.addr %s356, 128
        %s358 = scalar_lea.vmem [#allocation2], %s357
        // Predicated region
        $region57: #{tpu_custom_call.1} parent=55 // pred_check
          %p359 = pneg %p78
        $region58: #{tpu_custom_call.1} parent=55 // pred_check_branch
          %361 = sbr.rel (%p359) target = $region60
        $region59: #{tpu_custom_call.1} parent=55 // pred_region
          %363 = dma.done %s355, 2048
        $region60: #{tpu_custom_call.1} parent=55 // pred_fallthru
          _
        %p364 = scmp.lt.s32.totalorder %s31, 1
        %s365 = scalar_select %p364, %s31, 1
        %s366 = smul.addr %s365, 8
        %s367 = smul.addr %s366, 4
        %s368 = scalar_lea.vmem %s0, %s367
        %p369 = pneg %p52
        %p370 = pneg %p49
        %s371 = sand.u32 %s65, 1
        %s372 = scalar_lea.sflag [#allocation3], %s371
        %s373 = sand.u32 %s65, 1
        %s374 = smul.addr %s373, 128
        %s375 = scalar_lea.vmem [#allocation2], %s374
        %p376 = pneg %p78
        %p377 = pneg %p75
        %p378 = pneg %p99
        %p379 = pneg %p96
        %p380 = pneg %p120
        %p381 = pneg %p117
        %p382 = pneg %p141
        %p383 = pneg %p138
        %p384 = pneg %p162
        %p385 = pneg %p159
        %p386 = pneg %p183
        %p387 = pneg %p180
        %p388 = pneg %p204
        %p389 = pneg %p201
        %p390 = pneg %p225
        %p391 = pneg %p222
        %p392 = pneg %p251
        %p393 = pneg %p248
        %s394 = sand.u32 %s238, 1
        %s395 = scalar_lea.sflag [#allocation4], %s394
        %s396 = sand.u32 %s238, 1
        %s397 = smul.addr %s396, 64
        %s398 = scalar_lea.vmem [#allocation5], %s397
        %p399 = pneg %p277
        %p400 = pneg %p274
        %s401 = sand.u32 %s264, 1
        %s402 = scalar_lea.sflag [#allocation7], %s401
        %s403 = sand.u32 %s264, 1
        %s404 = smul.addr %s403, 8
        %s405 = scalar_lea.vmem [#allocation6], %s404
        %p406 = scmp.lt.s32.totalorder %s31, 1
        %s407 = scalar_select %p406, %s31, 1
        %s408 = smul.addr %s407, 8
        %s409 = smul.addr %s408, 4
        %s410 = scalar_lea.vmem %s0, %s409
        %v412 = vld [vmem:[%s410] sm:$0x77]
        %v413 = vld [vmem:[%s410 + $0x8] sm:$0x77]
        %v414 = vld [vmem:[%s410 + $0x10] sm:$0x77]
        %v415 = vld [vmem:[%s410 + $0x18] sm:$0x77]
        %v416 = vsub.f32 %v412, -1.0
        %v417 = vsub.f32 %v413, -1.0
        %v418 = vsub.f32 %v414, -1.0
        %v419 = vsub.f32 %v415, -1.0
        %v420 = vmul.f32 %v416, 3.5
        %v421 = vmul.f32 %v417, 3.5
        %v422 = vmul.f32 %v418, 3.5
        %v423 = vmul.f32 %v419, 3.5
        %v424 = vfloor.f32 %v420
        %v425 = vfloor.f32 %v421
        %v426 = vfloor.f32 %v422
        %v427 = vfloor.f32 %v423
        %v428 = vsub.f32 %v420, %v424
        %v429 = vsub.f32 %v421, %v425
        %v430 = vsub.f32 %v422, %v426
        %v431 = vsub.f32 %v423, %v427
        %v432 = vcvt.f32.s32.to.zero.pseudo %v424
        %v433 = vcvt.f32.s32.to.zero.pseudo %v425
        %v434 = vcvt.f32.s32.to.zero.pseudo %v426
        %v435 = vcvt.f32.s32.to.zero.pseudo %v427
        %v436 = vlaneseq
        %v437 = vshrl.u32 %v436, 7
        %v438 = vadd.s32 %v437, 8
        %v439 = vadd.s32 %v437, 16
        %v440 = vadd.s32 %v437, 24
        %v441 = vadd.s32 %v437, 32
        %v442 = vadd.s32 %v437, 40
        %v443 = vadd.s32 %v437, 48
        %v444 = vadd.s32 %v437, 56
        %v445 = vshra.s32 %v437, 3
        %v446 = vshra.s32 %v438, 3
        %v447 = vshra.s32 %v439, 3
        %v448 = vshra.s32 %v440, 3
        %v449 = vshra.s32 %v441, 3
        %v450 = vshra.s32 %v442, 3
        %v451 = vshra.s32 %v443, 3
        %v452 = vshra.s32 %v444, 3
        %v453 = vperm.slane %v432, 1
        %v454 = vperm.slane %v432, 5
        %v455 = vperm.slane %v433, 1
        %v456 = vperm.slane %v433, 5
        %v457 = vperm.slane %v434, 1
        %v458 = vperm.slane %v434, 5
        %v459 = vperm.slane %v435, 1
        %v460 = vperm.slane %v435, 5
        %v461 = vperm.slane %v453, 1
        %v462 = vperm.slane %v454, 1
        %v463 = vperm.slane %v455, 1
        %v464 = vperm.slane %v456, 1
        %v465 = vperm.slane %v457, 1
        %v466 = vperm.slane %v458, 1
        %v467 = vperm.slane %v459, 1
        %v468 = vperm.slane %v460, 1
        %vm469 = vcmp.eq.s32.totalorder %v445, %v461
        %vm470 = vcmp.eq.s32.totalorder %v445, %v462
        %vm471 = vcmp.eq.s32.totalorder %v445, %v463
        %vm472 = vcmp.eq.s32.totalorder %v445, %v464
        %vm473 = vcmp.eq.s32.totalorder %v445, %v465
        %vm474 = vcmp.eq.s32.totalorder %v445, %v466
        %vm475 = vcmp.eq.s32.totalorder %v445, %v467
        %vm476 = vcmp.eq.s32.totalorder %v445, %v468
        %vm477 = vcmp.eq.s32.totalorder %v446, %v461
        %vm478 = vcmp.eq.s32.totalorder %v446, %v462
        %vm479 = vcmp.eq.s32.totalorder %v446, %v463
        %vm480 = vcmp.eq.s32.totalorder %v446, %v464
        %vm481 = vcmp.eq.s32.totalorder %v446, %v465
        %vm482 = vcmp.eq.s32.totalorder %v446, %v466
        %vm483 = vcmp.eq.s32.totalorder %v446, %v467
        %vm484 = vcmp.eq.s32.totalorder %v446, %v468
        %vm485 = vcmp.eq.s32.totalorder %v447, %v461
        %vm486 = vcmp.eq.s32.totalorder %v447, %v462
        %vm487 = vcmp.eq.s32.totalorder %v447, %v463
        %vm488 = vcmp.eq.s32.totalorder %v447, %v464
        %vm489 = vcmp.eq.s32.totalorder %v447, %v465
        %vm490 = vcmp.eq.s32.totalorder %v447, %v466
        %vm491 = vcmp.eq.s32.totalorder %v447, %v467
        %vm492 = vcmp.eq.s32.totalorder %v447, %v468
        %vm493 = vcmp.eq.s32.totalorder %v448, %v461
        %vm494 = vcmp.eq.s32.totalorder %v448, %v462
        %vm495 = vcmp.eq.s32.totalorder %v448, %v463
        %vm496 = vcmp.eq.s32.totalorder %v448, %v464
        %vm497 = vcmp.eq.s32.totalorder %v448, %v465
        %vm498 = vcmp.eq.s32.totalorder %v448, %v466
        %vm499 = vcmp.eq.s32.totalorder %v448, %v467
        %vm500 = vcmp.eq.s32.totalorder %v448, %v468
        %vm501 = vcmp.eq.s32.totalorder %v449, %v461
        %vm502 = vcmp.eq.s32.totalorder %v449, %v462
        %vm503 = vcmp.eq.s32.totalorder %v449, %v463
        %vm504 = vcmp.eq.s32.totalorder %v449, %v464
        %vm505 = vcmp.eq.s32.totalorder %v449, %v465
        %vm506 = vcmp.eq.s32.totalorder %v449, %v466
        %vm507 = vcmp.eq.s32.totalorder %v449, %v467
        %vm508 = vcmp.eq.s32.totalorder %v449, %v468
        %vm509 = vcmp.eq.s32.totalorder %v450, %v461
        %vm510 = vcmp.eq.s32.totalorder %v450, %v462
        %vm511 = vcmp.eq.s32.totalorder %v450, %v463
        %vm512 = vcmp.eq.s32.totalorder %v450, %v464
        %vm513 = vcmp.eq.s32.totalorder %v450, %v465
        %vm514 = vcmp.eq.s32.totalorder %v450, %v466
        %vm515 = vcmp.eq.s32.totalorder %v450, %v467
        %vm516 = vcmp.eq.s32.totalorder %v450, %v468
        %vm517 = vcmp.eq.s32.totalorder %v451, %v461
        %vm518 = vcmp.eq.s32.totalorder %v451, %v462
        %vm519 = vcmp.eq.s32.totalorder %v451, %v463
        %vm520 = vcmp.eq.s32.totalorder %v451, %v464
        %vm521 = vcmp.eq.s32.totalorder %v451, %v465
        %vm522 = vcmp.eq.s32.totalorder %v451, %v466
        %vm523 = vcmp.eq.s32.totalorder %v451, %v467
        %vm524 = vcmp.eq.s32.totalorder %v451, %v468
        %vm525 = vcmp.eq.s32.totalorder %v452, %v461
        %vm526 = vcmp.eq.s32.totalorder %v452, %v462
        %vm527 = vcmp.eq.s32.totalorder %v452, %v463
        %vm528 = vcmp.eq.s32.totalorder %v452, %v464
        %vm529 = vcmp.eq.s32.totalorder %v452, %v465
        %vm530 = vcmp.eq.s32.totalorder %v452, %v466
        %vm531 = vcmp.eq.s32.totalorder %v452, %v467
        %vm532 = vcmp.eq.s32.totalorder %v452, %v468
        %v533 = vsub.f32 1.0, %v428
        %v534 = vsub.f32 1.0, %v429
        %v535 = vsub.f32 1.0, %v430
        %v536 = vsub.f32 1.0, %v431
        %v541 = vperm.slane %v533, 1
        %v542 = vperm.slane %v533, 5
        %v543 = vperm.slane %v534, 1
        %v544 = vperm.slane %v534, 5
        %v545 = vperm.slane %v535, 1
        %v546 = vperm.slane %v535, 5
        %v547 = vperm.slane %v536, 1
        %v548 = vperm.slane %v536, 5
        %v557 = vperm.slane %v541, 1
        %v558 = vperm.slane %v542, 1
        %v559 = vperm.slane %v543, 1
        %v560 = vperm.slane %v544, 1
        %v561 = vperm.slane %v545, 1
        %v562 = vperm.slane %v546, 1
        %v563 = vperm.slane %v547, 1
        %v564 = vperm.slane %v548, 1
        %v565 = vsel %vm469, %v557, 0.0
        %v566 = vsel %vm470, %v558, 0.0
        %v567 = vsel %vm471, %v559, 0.0
        %v568 = vsel %vm472, %v560, 0.0
        %v569 = vsel %vm473, %v561, 0.0
        %v570 = vsel %vm474, %v562, 0.0
        %v571 = vsel %vm475, %v563, 0.0
        %v572 = vsel %vm476, %v564, 0.0
        %v573 = vsel %vm477, %v557, 0.0
        %v574 = vsel %vm478, %v558, 0.0
        %v575 = vsel %vm479, %v559, 0.0
        %v576 = vsel %vm480, %v560, 0.0
        %v577 = vsel %vm481, %v561, 0.0
        %v578 = vsel %vm482, %v562, 0.0
        %v579 = vsel %vm483, %v563, 0.0
        %v580 = vsel %vm484, %v564, 0.0
        %v581 = vsel %vm485, %v557, 0.0
        %v582 = vsel %vm486, %v558, 0.0
        %v583 = vsel %vm487, %v559, 0.0
        %v584 = vsel %vm488, %v560, 0.0
        %v585 = vsel %vm489, %v561, 0.0
        %v586 = vsel %vm490, %v562, 0.0
        %v587 = vsel %vm491, %v563, 0.0
        %v588 = vsel %vm492, %v564, 0.0
        %v589 = vsel %vm493, %v557, 0.0
        %v590 = vsel %vm494, %v558, 0.0
        %v591 = vsel %vm495, %v559, 0.0
        %v592 = vsel %vm496, %v560, 0.0
        %v593 = vsel %vm497, %v561, 0.0
        %v594 = vsel %vm498, %v562, 0.0
        %v595 = vsel %vm499, %v563, 0.0
        %v596 = vsel %vm500, %v564, 0.0
        %v597 = vsel %vm501, %v557, 0.0
        %v598 = vsel %vm502, %v558, 0.0
        %v599 = vsel %vm503, %v559, 0.0
        %v600 = vsel %vm504, %v560, 0.0
        %v601 = vsel %vm505, %v561, 0.0
        %v602 = vsel %vm506, %v562, 0.0
        %v603 = vsel %vm507, %v563, 0.0
        %v604 = vsel %vm508, %v564, 0.0
        %v605 = vsel %vm509, %v557, 0.0
        %v606 = vsel %vm510, %v558, 0.0
        %v607 = vsel %vm511, %v559, 0.0
        %v608 = vsel %vm512, %v560, 0.0
        %v609 = vsel %vm513, %v561, 0.0
        %v610 = vsel %vm514, %v562, 0.0
        %v611 = vsel %vm515, %v563, 0.0
        %v612 = vsel %vm516, %v564, 0.0
        %v613 = vsel %vm517, %v557, 0.0
        %v614 = vsel %vm518, %v558, 0.0
        %v615 = vsel %vm519, %v559, 0.0
        %v616 = vsel %vm520, %v560, 0.0
        %v617 = vsel %vm521, %v561, 0.0
        %v618 = vsel %vm522, %v562, 0.0
        %v619 = vsel %vm523, %v563, 0.0
        %v620 = vsel %vm524, %v564, 0.0
        %v621 = vsel %vm525, %v557, 0.0
        %v622 = vsel %vm526, %v558, 0.0
        %v623 = vsel %vm527, %v559, 0.0
        %v624 = vsel %vm528, %v560, 0.0
        %v625 = vsel %vm529, %v561, 0.0
        %v626 = vsel %vm530, %v562, 0.0
        %v627 = vsel %vm531, %v563, 0.0
        %v628 = vsel %vm532, %v564, 0.0
        %v629 = vadd.s32 %v432, 1
        %v630 = vadd.s32 %v433, 1
        %v631 = vadd.s32 %v434, 1
        %v632 = vadd.s32 %v435, 1
        %v633 = vperm.slane %v629, 1
        %v634 = vperm.slane %v629, 5
        %v635 = vperm.slane %v630, 1
        %v636 = vperm.slane %v630, 5
        %v637 = vperm.slane %v631, 1
        %v638 = vperm.slane %v631, 5
        %v639 = vperm.slane %v632, 1
        %v640 = vperm.slane %v632, 5
        %v641 = vperm.slane %v633, 1
        %v642 = vperm.slane %v634, 1
        %v643 = vperm.slane %v635, 1
        %v644 = vperm.slane %v636, 1
        %v645 = vperm.slane %v637, 1
        %v646 = vperm.slane %v638, 1
        %v647 = vperm.slane %v639, 1
        %v648 = vperm.slane %v640, 1
        %vm649 = vcmp.eq.s32.totalorder %v445, %v641
        %vm650 = vcmp.eq.s32.totalorder %v445, %v642
        %vm651 = vcmp.eq.s32.totalorder %v445, %v643
        %vm652 = vcmp.eq.s32.totalorder %v445, %v644
        %vm653 = vcmp.eq.s32.totalorder %v445, %v645
        %vm654 = vcmp.eq.s32.totalorder %v445, %v646
        %vm655 = vcmp.eq.s32.totalorder %v445, %v647
        %vm656 = vcmp.eq.s32.totalorder %v445, %v648
        %vm657 = vcmp.eq.s32.totalorder %v446, %v641
        %vm658 = vcmp.eq.s32.totalorder %v446, %v642
        %vm659 = vcmp.eq.s32.totalorder %v446, %v643
        %vm660 = vcmp.eq.s32.totalorder %v446, %v644
        %vm661 = vcmp.eq.s32.totalorder %v446, %v645
        %vm662 = vcmp.eq.s32.totalorder %v446, %v646
        %vm663 = vcmp.eq.s32.totalorder %v446, %v647
        %vm664 = vcmp.eq.s32.totalorder %v446, %v648
        %vm665 = vcmp.eq.s32.totalorder %v447, %v641
        %vm666 = vcmp.eq.s32.totalorder %v447, %v642
        %vm667 = vcmp.eq.s32.totalorder %v447, %v643
        %vm668 = vcmp.eq.s32.totalorder %v447, %v644
        %vm669 = vcmp.eq.s32.totalorder %v447, %v645
        %vm670 = vcmp.eq.s32.totalorder %v447, %v646
        %vm671 = vcmp.eq.s32.totalorder %v447, %v647
        %vm672 = vcmp.eq.s32.totalorder %v447, %v648
        %vm673 = vcmp.eq.s32.totalorder %v448, %v641
        %vm674 = vcmp.eq.s32.totalorder %v448, %v642
        %vm675 = vcmp.eq.s32.totalorder %v448, %v643
        %vm676 = vcmp.eq.s32.totalorder %v448, %v644
        %vm677 = vcmp.eq.s32.totalorder %v448, %v645
        %vm678 = vcmp.eq.s32.totalorder %v448, %v646
        %vm679 = vcmp.eq.s32.totalorder %v448, %v647
        %vm680 = vcmp.eq.s32.totalorder %v448, %v648
        %vm681 = vcmp.eq.s32.totalorder %v449, %v641
        %vm682 = vcmp.eq.s32.totalorder %v449, %v642
        %vm683 = vcmp.eq.s32.totalorder %v449, %v643
        %vm684 = vcmp.eq.s32.totalorder %v449, %v644
        %vm685 = vcmp.eq.s32.totalorder %v449, %v645
        %vm686 = vcmp.eq.s32.totalorder %v449, %v646
        %vm687 = vcmp.eq.s32.totalorder %v449, %v647
        %vm688 = vcmp.eq.s32.totalorder %v449, %v648
        %vm689 = vcmp.eq.s32.totalorder %v450, %v641
        %vm690 = vcmp.eq.s32.totalorder %v450, %v642
        %vm691 = vcmp.eq.s32.totalorder %v450, %v643
        %vm692 = vcmp.eq.s32.totalorder %v450, %v644
        %vm693 = vcmp.eq.s32.totalorder %v450, %v645
        %vm694 = vcmp.eq.s32.totalorder %v450, %v646
        %vm695 = vcmp.eq.s32.totalorder %v450, %v647
        %vm696 = vcmp.eq.s32.totalorder %v450, %v648
        %vm697 = vcmp.eq.s32.totalorder %v451, %v641
        %vm698 = vcmp.eq.s32.totalorder %v451, %v642
        %vm699 = vcmp.eq.s32.totalorder %v451, %v643
        %vm700 = vcmp.eq.s32.totalorder %v451, %v644
        %vm701 = vcmp.eq.s32.totalorder %v451, %v645
        %vm702 = vcmp.eq.s32.totalorder %v451, %v646
        %vm703 = vcmp.eq.s32.totalorder %v451, %v647
        %vm704 = vcmp.eq.s32.totalorder %v451, %v648
        %vm705 = vcmp.eq.s32.totalorder %v452, %v641
        %vm706 = vcmp.eq.s32.totalorder %v452, %v642
        %vm707 = vcmp.eq.s32.totalorder %v452, %v643
        %vm708 = vcmp.eq.s32.totalorder %v452, %v644
        %vm709 = vcmp.eq.s32.totalorder %v452, %v645
        %vm710 = vcmp.eq.s32.totalorder %v452, %v646
        %vm711 = vcmp.eq.s32.totalorder %v452, %v647
        %vm712 = vcmp.eq.s32.totalorder %v452, %v648
        %v717 = vperm.slane %v428, 1
        %v718 = vperm.slane %v428, 5
        %v719 = vperm.slane %v429, 1
        %v720 = vperm.slane %v429, 5
        %v721 = vperm.slane %v430, 1
        %v722 = vperm.slane %v430, 5
        %v723 = vperm.slane %v431, 1
        %v724 = vperm.slane %v431, 5
        %v733 = vperm.slane %v717, 1
        %v734 = vperm.slane %v718, 1
        %v735 = vperm.slane %v719, 1
        %v736 = vperm.slane %v720, 1
        %v737 = vperm.slane %v721, 1
        %v738 = vperm.slane %v722, 1
        %v739 = vperm.slane %v723, 1
        %v740 = vperm.slane %v724, 1
        %v741 = vsel %vm649, %v733, 0.0
        %v742 = vsel %vm650, %v734, 0.0
        %v743 = vsel %vm651, %v735, 0.0
        %v744 = vsel %vm652, %v736, 0.0
        %v745 = vsel %vm653, %v737, 0.0
        %v746 = vsel %vm654, %v738, 0.0
        %v747 = vsel %vm655, %v739, 0.0
        %v748 = vsel %vm656, %v740, 0.0
        %v749 = vsel %vm657, %v733, 0.0
        %v750 = vsel %vm658, %v734, 0.0
        %v751 = vsel %vm659, %v735, 0.0
        %v752 = vsel %vm660, %v736, 0.0
        %v753 = vsel %vm661, %v737, 0.0
        %v754 = vsel %vm662, %v738, 0.0
        %v755 = vsel %vm663, %v739, 0.0
        %v756 = vsel %vm664, %v740, 0.0
        %v757 = vsel %vm665, %v733, 0.0
        %v758 = vsel %vm666, %v734, 0.0
        %v759 = vsel %vm667, %v735, 0.0
        %v760 = vsel %vm668, %v736, 0.0
        %v761 = vsel %vm669, %v737, 0.0
        %v762 = vsel %vm670, %v738, 0.0
        %v763 = vsel %vm671, %v739, 0.0
        %v764 = vsel %vm672, %v740, 0.0
        %v765 = vsel %vm673, %v733, 0.0
        %v766 = vsel %vm674, %v734, 0.0
        %v767 = vsel %vm675, %v735, 0.0
        %v768 = vsel %vm676, %v736, 0.0
        %v769 = vsel %vm677, %v737, 0.0
        %v770 = vsel %vm678, %v738, 0.0
        %v771 = vsel %vm679, %v739, 0.0
        %v772 = vsel %vm680, %v740, 0.0
        %v773 = vsel %vm681, %v733, 0.0
        %v774 = vsel %vm682, %v734, 0.0
        %v775 = vsel %vm683, %v735, 0.0
        %v776 = vsel %vm684, %v736, 0.0
        %v777 = vsel %vm685, %v737, 0.0
        %v778 = vsel %vm686, %v738, 0.0
        %v779 = vsel %vm687, %v739, 0.0
        %v780 = vsel %vm688, %v740, 0.0
        %v781 = vsel %vm689, %v733, 0.0
        %v782 = vsel %vm690, %v734, 0.0
        %v783 = vsel %vm691, %v735, 0.0
        %v784 = vsel %vm692, %v736, 0.0
        %v785 = vsel %vm693, %v737, 0.0
        %v786 = vsel %vm694, %v738, 0.0
        %v787 = vsel %vm695, %v739, 0.0
        %v788 = vsel %vm696, %v740, 0.0
        %v789 = vsel %vm697, %v733, 0.0
        %v790 = vsel %vm698, %v734, 0.0
        %v791 = vsel %vm699, %v735, 0.0
        %v792 = vsel %vm700, %v736, 0.0
        %v793 = vsel %vm701, %v737, 0.0
        %v794 = vsel %vm702, %v738, 0.0
        %v795 = vsel %vm703, %v739, 0.0
        %v796 = vsel %vm704, %v740, 0.0
        %v797 = vsel %vm705, %v733, 0.0
        %v798 = vsel %vm706, %v734, 0.0
        %v799 = vsel %vm707, %v735, 0.0
        %v800 = vsel %vm708, %v736, 0.0
        %v801 = vsel %vm709, %v737, 0.0
        %v802 = vsel %vm710, %v738, 0.0
        %v803 = vsel %vm711, %v739, 0.0
        %v804 = vsel %vm712, %v740, 0.0
        %v805 = vadd.f32 %v565, %v741
        %v806 = vadd.f32 %v566, %v742
        %v807 = vadd.f32 %v567, %v743
        %v808 = vadd.f32 %v568, %v744
        %v809 = vadd.f32 %v569, %v745
        %v810 = vadd.f32 %v570, %v746
        %v811 = vadd.f32 %v571, %v747
        %v812 = vadd.f32 %v572, %v748
        %v813 = vadd.f32 %v573, %v749
        %v814 = vadd.f32 %v574, %v750
        %v815 = vadd.f32 %v575, %v751
        %v816 = vadd.f32 %v576, %v752
        %v817 = vadd.f32 %v577, %v753
        %v818 = vadd.f32 %v578, %v754
        %v819 = vadd.f32 %v579, %v755
        %v820 = vadd.f32 %v580, %v756
        %v821 = vadd.f32 %v581, %v757
        %v822 = vadd.f32 %v582, %v758
        %v823 = vadd.f32 %v583, %v759
        %v824 = vadd.f32 %v584, %v760
        %v825 = vadd.f32 %v585, %v761
        %v826 = vadd.f32 %v586, %v762
        %v827 = vadd.f32 %v587, %v763
        %v828 = vadd.f32 %v588, %v764
        %v829 = vadd.f32 %v589, %v765
        %v830 = vadd.f32 %v590, %v766
        %v831 = vadd.f32 %v591, %v767
        %v832 = vadd.f32 %v592, %v768
        %v833 = vadd.f32 %v593, %v769
        %v834 = vadd.f32 %v594, %v770
        %v835 = vadd.f32 %v595, %v771
        %v836 = vadd.f32 %v596, %v772
        %v837 = vadd.f32 %v597, %v773
        %v838 = vadd.f32 %v598, %v774
        %v839 = vadd.f32 %v599, %v775
        %v840 = vadd.f32 %v600, %v776
        %v841 = vadd.f32 %v601, %v777
        %v842 = vadd.f32 %v602, %v778
        %v843 = vadd.f32 %v603, %v779
        %v844 = vadd.f32 %v604, %v780
        %v845 = vadd.f32 %v605, %v781
        %v846 = vadd.f32 %v606, %v782
        %v847 = vadd.f32 %v607, %v783
        %v848 = vadd.f32 %v608, %v784
        %v849 = vadd.f32 %v609, %v785
        %v850 = vadd.f32 %v610, %v786
        %v851 = vadd.f32 %v611, %v787
        %v852 = vadd.f32 %v612, %v788
        %v853 = vadd.f32 %v613, %v789
        %v854 = vadd.f32 %v614, %v790
        %v855 = vadd.f32 %v615, %v791
        %v856 = vadd.f32 %v616, %v792
        %v857 = vadd.f32 %v617, %v793
        %v858 = vadd.f32 %v618, %v794
        %v859 = vadd.f32 %v619, %v795
        %v860 = vadd.f32 %v620, %v796
        %v861 = vadd.f32 %v621, %v797
        %v862 = vadd.f32 %v622, %v798
        %v863 = vadd.f32 %v623, %v799
        %v864 = vadd.f32 %v624, %v800
        %v865 = vadd.f32 %v625, %v801
        %v866 = vadd.f32 %v626, %v802
        %v867 = vadd.f32 %v627, %v803
        %v868 = vadd.f32 %v628, %v804
        %v869 = vperm.slane %v432, 2
        %v870 = vperm.slane %v432, 6
        %v871 = vperm.slane %v433, 2
        %v872 = vperm.slane %v433, 6
        %v873 = vperm.slane %v434, 2
        %v874 = vperm.slane %v434, 6
        %v875 = vperm.slane %v435, 2
        %v876 = vperm.slane %v435, 6
        %v877 = vperm.slane %v869, 2
        %v878 = vperm.slane %v870, 2
        %v879 = vperm.slane %v871, 2
        %v880 = vperm.slane %v872, 2
        %v881 = vperm.slane %v873, 2
        %v882 = vperm.slane %v874, 2
        %v883 = vperm.slane %v875, 2
        %v884 = vperm.slane %v876, 2
        %vm885 = vcmp.eq.s32.totalorder %v437, %v877
        %vm886 = vcmp.eq.s32.totalorder %v437, %v878
        %vm887 = vcmp.eq.s32.totalorder %v437, %v879
        %vm888 = vcmp.eq.s32.totalorder %v437, %v880
        %vm889 = vcmp.eq.s32.totalorder %v437, %v881
        %vm890 = vcmp.eq.s32.totalorder %v437, %v882
        %vm891 = vcmp.eq.s32.totalorder %v437, %v883
        %vm892 = vcmp.eq.s32.totalorder %v437, %v884
        %v893 = vperm.slane %v533, 2
        %v894 = vperm.slane %v533, 6
        %v895 = vperm.slane %v534, 2
        %v896 = vperm.slane %v534, 6
        %v897 = vperm.slane %v535, 2
        %v898 = vperm.slane %v535, 6
        %v899 = vperm.slane %v536, 2
        %v900 = vperm.slane %v536, 6
        %v909 = vperm.slane %v893, 2
        %v910 = vperm.slane %v894, 2
        %v911 = vperm.slane %v895, 2
        %v912 = vperm.slane %v896, 2
        %v913 = vperm.slane %v897, 2
        %v914 = vperm.slane %v898, 2
        %v915 = vperm.slane %v899, 2
        %v916 = vperm.slane %v900, 2
        %v917 = vsel %vm885, %v909, 0.0
        %v918 = vsel %vm886, %v910, 0.0
        %v919 = vsel %vm887, %v911, 0.0
        %v920 = vsel %vm888, %v912, 0.0
        %v921 = vsel %vm889, %v913, 0.0
        %v922 = vsel %vm890, %v914, 0.0
        %v923 = vsel %vm891, %v915, 0.0
        %v924 = vsel %vm892, %v916, 0.0
        %v925 = vperm.slane %v629, 2
        %v926 = vperm.slane %v629, 6
        %v927 = vperm.slane %v630, 2
        %v928 = vperm.slane %v630, 6
        %v929 = vperm.slane %v631, 2
        %v930 = vperm.slane %v631, 6
        %v931 = vperm.slane %v632, 2
        %v932 = vperm.slane %v632, 6
        %v933 = vperm.slane %v925, 2
        %v934 = vperm.slane %v926, 2
        %v935 = vperm.slane %v927, 2
        %v936 = vperm.slane %v928, 2
        %v937 = vperm.slane %v929, 2
        %v938 = vperm.slane %v930, 2
        %v939 = vperm.slane %v931, 2
        %v940 = vperm.slane %v932, 2
        %vm941 = vcmp.eq.s32.totalorder %v437, %v933
        %vm942 = vcmp.eq.s32.totalorder %v437, %v934
        %vm943 = vcmp.eq.s32.totalorder %v437, %v935
        %vm944 = vcmp.eq.s32.totalorder %v437, %v936
        %vm945 = vcmp.eq.s32.totalorder %v437, %v937
        %vm946 = vcmp.eq.s32.totalorder %v437, %v938
        %vm947 = vcmp.eq.s32.totalorder %v437, %v939
        %vm948 = vcmp.eq.s32.totalorder %v437, %v940
        %v949 = vperm.slane %v428, 2
        %v950 = vperm.slane %v428, 6
        %v951 = vperm.slane %v429, 2
        %v952 = vperm.slane %v429, 6
        %v953 = vperm.slane %v430, 2
        %v954 = vperm.slane %v430, 6
        %v955 = vperm.slane %v431, 2
        %v956 = vperm.slane %v431, 6
        %v965 = vperm.slane %v949, 2
        %v966 = vperm.slane %v950, 2
        %v967 = vperm.slane %v951, 2
        %v968 = vperm.slane %v952, 2
        %v969 = vperm.slane %v953, 2
        %v970 = vperm.slane %v954, 2
        %v971 = vperm.slane %v955, 2
        %v972 = vperm.slane %v956, 2
        %v973 = vsel %vm941, %v965, 0.0
        %v974 = vsel %vm942, %v966, 0.0
        %v975 = vsel %vm943, %v967, 0.0
        %v976 = vsel %vm944, %v968, 0.0
        %v977 = vsel %vm945, %v969, 0.0
        %v978 = vsel %vm946, %v970, 0.0
        %v979 = vsel %vm947, %v971, 0.0
        %v980 = vsel %vm948, %v972, 0.0
        %v981 = vadd.f32 %v917, %v973
        %v982 = vadd.f32 %v918, %v974
        %v983 = vadd.f32 %v919, %v975
        %v984 = vadd.f32 %v920, %v976
        %v985 = vadd.f32 %v921, %v977
        %v986 = vadd.f32 %v922, %v978
        %v987 = vadd.f32 %v923, %v979
        %v988 = vadd.f32 %v924, %v980
        %v989 = vmul.f32 %v805, %v981
        %v990 = vmul.f32 %v806, %v982
        %v991 = vmul.f32 %v807, %v983
        %v992 = vmul.f32 %v808, %v984
        %v993 = vmul.f32 %v809, %v985
        %v994 = vmul.f32 %v810, %v986
        %v995 = vmul.f32 %v811, %v987
        %v996 = vmul.f32 %v812, %v988
        %v997 = vmul.f32 %v813, %v981
        %v998 = vmul.f32 %v814, %v982
        %v999 = vmul.f32 %v815, %v983
        %v1000 = vmul.f32 %v816, %v984
        %v1001 = vmul.f32 %v817, %v985
        %v1002 = vmul.f32 %v818, %v986
        %v1003 = vmul.f32 %v819, %v987
        %v1004 = vmul.f32 %v820, %v988
        %v1005 = vmul.f32 %v821, %v981
        %v1006 = vmul.f32 %v822, %v982
        %v1007 = vmul.f32 %v823, %v983
        %v1008 = vmul.f32 %v824, %v984
        %v1009 = vmul.f32 %v825, %v985
        %v1010 = vmul.f32 %v826, %v986
        %v1011 = vmul.f32 %v827, %v987
        %v1012 = vmul.f32 %v828, %v988
        %v1013 = vmul.f32 %v829, %v981
        %v1014 = vmul.f32 %v830, %v982
        %v1015 = vmul.f32 %v831, %v983
        %v1016 = vmul.f32 %v832, %v984
        %v1017 = vmul.f32 %v833, %v985
        %v1018 = vmul.f32 %v834, %v986
        %v1019 = vmul.f32 %v835, %v987
        %v1020 = vmul.f32 %v836, %v988
        %v1021 = vmul.f32 %v837, %v981
        %v1022 = vmul.f32 %v838, %v982
        %v1023 = vmul.f32 %v839, %v983
        %v1024 = vmul.f32 %v840, %v984
        %v1025 = vmul.f32 %v841, %v985
        %v1026 = vmul.f32 %v842, %v986
        %v1027 = vmul.f32 %v843, %v987
        %v1028 = vmul.f32 %v844, %v988
        %v1029 = vmul.f32 %v845, %v981
        %v1030 = vmul.f32 %v846, %v982
        %v1031 = vmul.f32 %v847, %v983
        %v1032 = vmul.f32 %v848, %v984
        %v1033 = vmul.f32 %v849, %v985
        %v1034 = vmul.f32 %v850, %v986
        %v1035 = vmul.f32 %v851, %v987
        %v1036 = vmul.f32 %v852, %v988
        %v1037 = vmul.f32 %v853, %v981
        %v1038 = vmul.f32 %v854, %v982
        %v1039 = vmul.f32 %v855, %v983
        %v1040 = vmul.f32 %v856, %v984
        %v1041 = vmul.f32 %v857, %v985
        %v1042 = vmul.f32 %v858, %v986
        %v1043 = vmul.f32 %v859, %v987
        %v1044 = vmul.f32 %v860, %v988
        %v1045 = vmul.f32 %v861, %v981
        %v1046 = vmul.f32 %v862, %v982
        %v1047 = vmul.f32 %v863, %v983
        %v1048 = vmul.f32 %v864, %v984
        %v1049 = vmul.f32 %v865, %v985
        %v1050 = vmul.f32 %v866, %v986
        %v1051 = vmul.f32 %v867, %v987
        %v1052 = vmul.f32 %v868, %v988
        %v1053 = vpack.c.bf16 %v997, %v989
        %v1054 = vpack.c.bf16 %v998, %v990
        %v1055 = vpack.c.bf16 %v999, %v991
        %v1056 = vpack.c.bf16 %v1000, %v992
        %v1057 = vpack.c.bf16 %v1001, %v993
        %v1058 = vpack.c.bf16 %v1002, %v994
        %v1059 = vpack.c.bf16 %v1003, %v995
        %v1060 = vpack.c.bf16 %v1004, %v996
        %v1061 = vpack.c.bf16 %v1013, %v1005
        %v1062 = vpack.c.bf16 %v1014, %v1006
        %v1063 = vpack.c.bf16 %v1015, %v1007
        %v1064 = vpack.c.bf16 %v1016, %v1008
        %v1065 = vpack.c.bf16 %v1017, %v1009
        %v1066 = vpack.c.bf16 %v1018, %v1010
        %v1067 = vpack.c.bf16 %v1019, %v1011
        %v1068 = vpack.c.bf16 %v1020, %v1012
        %v1069 = vpack.c.bf16 %v1029, %v1021
        %v1070 = vpack.c.bf16 %v1030, %v1022
        %v1071 = vpack.c.bf16 %v1031, %v1023
        %v1072 = vpack.c.bf16 %v1032, %v1024
        %v1073 = vpack.c.bf16 %v1033, %v1025
        %v1074 = vpack.c.bf16 %v1034, %v1026
        %v1075 = vpack.c.bf16 %v1035, %v1027
        %v1076 = vpack.c.bf16 %v1036, %v1028
        %v1077 = vpack.c.bf16 %v1045, %v1037
        %v1078 = vpack.c.bf16 %v1046, %v1038
        %v1079 = vpack.c.bf16 %v1047, %v1039
        %v1080 = vpack.c.bf16 %v1048, %v1040
        %v1081 = vpack.c.bf16 %v1049, %v1041
        %v1082 = vpack.c.bf16 %v1050, %v1042
        %v1083 = vpack.c.bf16 %v1051, %v1043
        %v1084 = vpack.c.bf16 %v1052, %v1044
        %v1085 = vld [vmem:[%s2] sm:$0xf]
        %v1086 = vld [vmem:[%s2 + $0x4] sm:$0xf]
        %v1087 = vld [vmem:[%s2 + $0x8] sm:$0xf]
        %v1088 = vld [vmem:[%s2 + $0xc] sm:$0xf]
        %v1089 = vld [vmem:[%s2 + $0x10] sm:$0xf]
        %v1090 = vld [vmem:[%s2 + $0x14] sm:$0xf]
        %v1091 = vld [vmem:[%s2 + $0x18] sm:$0xf]
        %v1092 = vld [vmem:[%s2 + $0x1c] sm:$0xf]
        %v1093 = vld [vmem:[%s2 + $0x20] sm:$0xf]
        %v1094 = vld [vmem:[%s2 + $0x24] sm:$0xf]
        %v1095 = vld [vmem:[%s2 + $0x28] sm:$0xf]
        %v1096 = vld [vmem:[%s2 + $0x2c] sm:$0xf]
        %v1097 = vld [vmem:[%s2 + $0x30] sm:$0xf]
        %v1098 = vld [vmem:[%s2 + $0x34] sm:$0xf]
        %v1099 = vld [vmem:[%s2 + $0x38] sm:$0xf]
        %v1100 = vld [vmem:[%s2 + $0x3c] sm:$0xf]
        %v1117 = vunpack.c.l.b16 %v1085
        %v1118 = vunpack.c.l.b16 %v1086
        %v1119 = vunpack.c.l.b16 %v1087
        %v1120 = vunpack.c.l.b16 %v1088
        %v1121 = vunpack.c.l.b16 %v1089
        %v1122 = vunpack.c.l.b16 %v1090
        %v1123 = vunpack.c.l.b16 %v1091
        %v1124 = vunpack.c.l.b16 %v1092
        %v1125 = vunpack.c.l.b16 %v1093
        %v1126 = vunpack.c.l.b16 %v1094
        %v1127 = vunpack.c.l.b16 %v1095
        %v1128 = vunpack.c.l.b16 %v1096
        %v1129 = vunpack.c.l.b16 %v1097
        %v1130 = vunpack.c.l.b16 %v1098
        %v1131 = vunpack.c.l.b16 %v1099
        %v1132 = vunpack.c.l.b16 %v1100
        %v1133 = vpack.c.b16 %v1118, %v1117
        %v1134 = vpack.c.b16 %v1120, %v1119
        %v1135 = vpack.c.b16 %v1122, %v1121
        %v1136 = vpack.c.b16 %v1124, %v1123
        %v1137 = vpack.c.b16 %v1126, %v1125
        %v1138 = vpack.c.b16 %v1128, %v1127
        %v1139 = vpack.c.b16 %v1130, %v1129
        %v1140 = vpack.c.b16 %v1132, %v1131
        %vm1141 = vcmask 523264
        %v1143 = vsel %vm1141, %v1133, 0
        %v1146 = vsel %vm1141, %v1134, 0
        %v1149 = vsel %vm1141, %v1135, 0
        %v1152 = vsel %vm1141, %v1136, 0
        %v1155 = vsel %vm1141, %v1137, 0
        %v1158 = vsel %vm1141, %v1138, 0
        %v1161 = vsel %vm1141, %v1139, 0
        %v1164 = vsel %vm1141, %v1140, 0
        %1166 = vmatpush.bf16.msra.mxu0 0
        %1167 = vmatpush.bf16.msra.mxu0 0
        %1168 = vmatpush.bf16.msra.mxu0 0
        %1169 = vmatpush.bf16.msra.mxu0 0
        %1170 = vmatpush.bf16.msra.mxu0 %v1077
        %1171 = vmatpush.bf16.msra.mxu0 %v1069
        %1172 = vmatpush.bf16.msra.mxu0 %v1061
        %1173 = vmatpush.bf16.msra.mxu0 %v1053
        %1174 = vmatmul.bf16.gmra.mxu0 %v1143
        %v1175 = vpop.f32.mrf.mxu0
        %v1176 = vadd.f32 0.0, %v1175
        %v1177 = vpop.f32.mrf.mxu0
        %v1178 = vadd.f32 0.0, %v1177
        %1179 = vmatmul.bf16.gmra.mxu0 %v1146
        %v1180 = vpop.f32.mrf.mxu0
        %v1181 = vadd.f32 0.0, %v1180
        %v1182 = vpop.f32.mrf.mxu0
        %v1183 = vadd.f32 0.0, %v1182
        %1184 = vmatmul.bf16.gmra.mxu0 %v1149
        %v1185 = vpop.f32.mrf.mxu0
        %v1186 = vadd.f32 0.0, %v1185
        %v1187 = vpop.f32.mrf.mxu0
        %v1188 = vadd.f32 0.0, %v1187
        %1189 = vmatmul.bf16.gmra.mxu0 %v1152
        %v1190 = vpop.f32.mrf.mxu0
        %v1191 = vadd.f32 0.0, %v1190
        %v1192 = vpop.f32.mrf.mxu0
        %v1193 = vadd.f32 0.0, %v1192
        %1194 = vmatmul.bf16.gmra.mxu0 %v1155
        %v1195 = vpop.f32.mrf.mxu0
        %v1196 = vadd.f32 0.0, %v1195
        %v1197 = vpop.f32.mrf.mxu0
        %v1198 = vadd.f32 0.0, %v1197
        %1199 = vmatmul.bf16.gmra.mxu0 %v1158
        %v1200 = vpop.f32.mrf.mxu0
        %v1201 = vadd.f32 0.0, %v1200
        %v1202 = vpop.f32.mrf.mxu0
        %v1203 = vadd.f32 0.0, %v1202
        %1204 = vmatmul.bf16.gmra.mxu0 %v1161
        %v1205 = vpop.f32.mrf.mxu0
        %v1206 = vadd.f32 0.0, %v1205
        %v1207 = vpop.f32.mrf.mxu0
        %v1208 = vadd.f32 0.0, %v1207
        %1209 = vmatmul.bf16.gmra.mxu0 %v1164
        %v1210 = vpop.f32.mrf.mxu0
        %v1211 = vadd.f32 0.0, %v1210
        %v1212 = vpop.f32.mrf.mxu0
        %v1213 = vadd.f32 0.0, %v1212
        %1214 = vdwg.mxu0
        %1215 = vmatpush.bf16.msra.mxu0 0
        %1216 = vmatpush.bf16.msra.mxu0 0
        %1217 = vmatpush.bf16.msra.mxu0 0
        %1218 = vmatpush.bf16.msra.mxu0 0
        %1219 = vmatpush.bf16.msra.mxu0 %v1078
        %1220 = vmatpush.bf16.msra.mxu0 %v1070
        %1221 = vmatpush.bf16.msra.mxu0 %v1062
        %1222 = vmatpush.bf16.msra.mxu0 %v1054
        %1223 = vmatmul.bf16.gmra.mxu0 %v1143
        %v1224 = vpop.f32.mrf.mxu0
        %v1225 = vadd.f32 0.0, %v1224
        %v1226 = vpop.f32.mrf.mxu0
        %v1227 = vadd.f32 0.0, %v1226
        %1228 = vmatmul.bf16.gmra.mxu0 %v1146
        %v1229 = vpop.f32.mrf.mxu0
        %v1230 = vadd.f32 0.0, %v1229
        %v1231 = vpop.f32.mrf.mxu0
        %v1232 = vadd.f32 0.0, %v1231
        %1233 = vmatmul.bf16.gmra.mxu0 %v1149
        %v1234 = vpop.f32.mrf.mxu0
        %v1235 = vadd.f32 0.0, %v1234
        %v1236 = vpop.f32.mrf.mxu0
        %v1237 = vadd.f32 0.0, %v1236
        %1238 = vmatmul.bf16.gmra.mxu0 %v1152
        %v1239 = vpop.f32.mrf.mxu0
        %v1240 = vadd.f32 0.0, %v1239
        %v1241 = vpop.f32.mrf.mxu0
        %v1242 = vadd.f32 0.0, %v1241
        %1243 = vmatmul.bf16.gmra.mxu0 %v1155
        %v1244 = vpop.f32.mrf.mxu0
        %v1245 = vadd.f32 0.0, %v1244
        %v1246 = vpop.f32.mrf.mxu0
        %v1247 = vadd.f32 0.0, %v1246
        %1248 = vmatmul.bf16.gmra.mxu0 %v1158
        %v1249 = vpop.f32.mrf.mxu0
        %v1250 = vadd.f32 0.0, %v1249
        %v1251 = vpop.f32.mrf.mxu0
        %v1252 = vadd.f32 0.0, %v1251
        %1253 = vmatmul.bf16.gmra.mxu0 %v1161
        %v1254 = vpop.f32.mrf.mxu0
        %v1255 = vadd.f32 0.0, %v1254
        %v1256 = vpop.f32.mrf.mxu0
        %v1257 = vadd.f32 0.0, %v1256
        %1258 = vmatmul.bf16.gmra.mxu0 %v1164
        %v1259 = vpop.f32.mrf.mxu0
        %v1260 = vadd.f32 0.0, %v1259
        %v1261 = vpop.f32.mrf.mxu0
        %v1262 = vadd.f32 0.0, %v1261
        %1263 = vdwg.mxu0
        %1264 = vmatpush.bf16.msra.mxu0 0
        %1265 = vmatpush.bf16.msra.mxu0 0
        %1266 = vmatpush.bf16.msra.mxu0 0
        %1267 = vmatpush.bf16.msra.mxu0 0
        %1268 = vmatpush.bf16.msra.mxu0 %v1079
        %1269 = vmatpush.bf16.msra.mxu0 %v1071
        %1270 = vmatpush.bf16.msra.mxu0 %v1063
        %1271 = vmatpush.bf16.msra.mxu0 %v1055
        %1272 = vmatmul.bf16.gmra.mxu0 %v1143
        %v1273 = vpop.f32.mrf.mxu0
        %v1274 = vadd.f32 0.0, %v1273
        %v1275 = vpop.f32.mrf.mxu0
        %v1276 = vadd.f32 0.0, %v1275
        %1277 = vmatmul.bf16.gmra.mxu0 %v1146
        %v1278 = vpop.f32.mrf.mxu0
        %v1279 = vadd.f32 0.0, %v1278
        %v1280 = vpop.f32.mrf.mxu0
        %v1281 = vadd.f32 0.0, %v1280
        %1282 = vmatmul.bf16.gmra.mxu0 %v1149
        %v1283 = vpop.f32.mrf.mxu0
        %v1284 = vadd.f32 0.0, %v1283
        %v1285 = vpop.f32.mrf.mxu0
        %v1286 = vadd.f32 0.0, %v1285
        %1287 = vmatmul.bf16.gmra.mxu0 %v1152
        %v1288 = vpop.f32.mrf.mxu0
        %v1289 = vadd.f32 0.0, %v1288
        %v1290 = vpop.f32.mrf.mxu0
        %v1291 = vadd.f32 0.0, %v1290
        %1292 = vmatmul.bf16.gmra.mxu0 %v1155
        %v1293 = vpop.f32.mrf.mxu0
        %v1294 = vadd.f32 0.0, %v1293
        %v1295 = vpop.f32.mrf.mxu0
        %v1296 = vadd.f32 0.0, %v1295
        %1297 = vmatmul.bf16.gmra.mxu0 %v1158
        %v1298 = vpop.f32.mrf.mxu0
        %v1299 = vadd.f32 0.0, %v1298
        %v1300 = vpop.f32.mrf.mxu0
        %v1301 = vadd.f32 0.0, %v1300
        %1302 = vmatmul.bf16.gmra.mxu0 %v1161
        %v1303 = vpop.f32.mrf.mxu0
        %v1304 = vadd.f32 0.0, %v1303
        %v1305 = vpop.f32.mrf.mxu0
        %v1306 = vadd.f32 0.0, %v1305
        %1307 = vmatmul.bf16.gmra.mxu0 %v1164
        %v1308 = vpop.f32.mrf.mxu0
        %v1309 = vadd.f32 0.0, %v1308
        %v1310 = vpop.f32.mrf.mxu0
        %v1311 = vadd.f32 0.0, %v1310
        %1312 = vdwg.mxu0
        %1313 = vmatpush.bf16.msra.mxu0 0
        %1314 = vmatpush.bf16.msra.mxu0 0
        %1315 = vmatpush.bf16.msra.mxu0 0
        %1316 = vmatpush.bf16.msra.mxu0 0
        %1317 = vmatpush.bf16.msra.mxu0 %v1080
        %1318 = vmatpush.bf16.msra.mxu0 %v1072
        %1319 = vmatpush.bf16.msra.mxu0 %v1064
        %1320 = vmatpush.bf16.msra.mxu0 %v1056
        %1321 = vmatmul.bf16.gmra.mxu0 %v1143
        %v1322 = vpop.f32.mrf.mxu0
        %v1323 = vadd.f32 0.0, %v1322
        %v1324 = vpop.f32.mrf.mxu0
        %v1325 = vadd.f32 0.0, %v1324
        %1326 = vmatmul.bf16.gmra.mxu0 %v1146
        %v1327 = vpop.f32.mrf.mxu0
        %v1328 = vadd.f32 0.0, %v1327
        %v1329 = vpop.f32.mrf.mxu0
        %v1330 = vadd.f32 0.0, %v1329
        %1331 = vmatmul.bf16.gmra.mxu0 %v1149
        %v1332 = vpop.f32.mrf.mxu0
        %v1333 = vadd.f32 0.0, %v1332
        %v1334 = vpop.f32.mrf.mxu0
        %v1335 = vadd.f32 0.0, %v1334
        %1336 = vmatmul.bf16.gmra.mxu0 %v1152
        %v1337 = vpop.f32.mrf.mxu0
        %v1338 = vadd.f32 0.0, %v1337
        %v1339 = vpop.f32.mrf.mxu0
        %v1340 = vadd.f32 0.0, %v1339
        %1341 = vmatmul.bf16.gmra.mxu0 %v1155
        %v1342 = vpop.f32.mrf.mxu0
        %v1343 = vadd.f32 0.0, %v1342
        %v1344 = vpop.f32.mrf.mxu0
        %v1345 = vadd.f32 0.0, %v1344
        %1346 = vmatmul.bf16.gmra.mxu0 %v1158
        %v1347 = vpop.f32.mrf.mxu0
        %v1348 = vadd.f32 0.0, %v1347
        %v1349 = vpop.f32.mrf.mxu0
        %v1350 = vadd.f32 0.0, %v1349
        %1351 = vmatmul.bf16.gmra.mxu0 %v1161
        %v1352 = vpop.f32.mrf.mxu0
        %v1353 = vadd.f32 0.0, %v1352
        %v1354 = vpop.f32.mrf.mxu0
        %v1355 = vadd.f32 0.0, %v1354
        %1356 = vmatmul.bf16.gmra.mxu0 %v1164
        %v1357 = vpop.f32.mrf.mxu0
        %v1358 = vadd.f32 0.0, %v1357
        %v1359 = vpop.f32.mrf.mxu0
        %v1360 = vadd.f32 0.0, %v1359
        %1361 = vdwg.mxu0
        %1362 = vmatpush.bf16.msra.mxu0 0
        %1363 = vmatpush.bf16.msra.mxu0 0
        %1364 = vmatpush.bf16.msra.mxu0 0
        %1365 = vmatpush.bf16.msra.mxu0 0
        %1366 = vmatpush.bf16.msra.mxu0 %v1081
        %1367 = vmatpush.bf16.msra.mxu0 %v1073
        %1368 = vmatpush.bf16.msra.mxu0 %v1065
        %1369 = vmatpush.bf16.msra.mxu0 %v1057
        %1370 = vmatmul.bf16.gmra.mxu0 %v1143
        %v1371 = vpop.f32.mrf.mxu0
        %v1372 = vadd.f32 0.0, %v1371
        %v1373 = vpop.f32.mrf.mxu0
        %v1374 = vadd.f32 0.0, %v1373
        %1375 = vmatmul.bf16.gmra.mxu0 %v1146
        %v1376 = vpop.f32.mrf.mxu0
        %v1377 = vadd.f32 0.0, %v1376
        %v1378 = vpop.f32.mrf.mxu0
        %v1379 = vadd.f32 0.0, %v1378
        %1380 = vmatmul.bf16.gmra.mxu0 %v1149
        %v1381 = vpop.f32.mrf.mxu0
        %v1382 = vadd.f32 0.0, %v1381
        %v1383 = vpop.f32.mrf.mxu0
        %v1384 = vadd.f32 0.0, %v1383
        %1385 = vmatmul.bf16.gmra.mxu0 %v1152
        %v1386 = vpop.f32.mrf.mxu0
        %v1387 = vadd.f32 0.0, %v1386
        %v1388 = vpop.f32.mrf.mxu0
        %v1389 = vadd.f32 0.0, %v1388
        %1390 = vmatmul.bf16.gmra.mxu0 %v1155
        %v1391 = vpop.f32.mrf.mxu0
        %v1392 = vadd.f32 0.0, %v1391
        %v1393 = vpop.f32.mrf.mxu0
        %v1394 = vadd.f32 0.0, %v1393
        %1395 = vmatmul.bf16.gmra.mxu0 %v1158
        %v1396 = vpop.f32.mrf.mxu0
        %v1397 = vadd.f32 0.0, %v1396
        %v1398 = vpop.f32.mrf.mxu0
        %v1399 = vadd.f32 0.0, %v1398
        %1400 = vmatmul.bf16.gmra.mxu0 %v1161
        %v1401 = vpop.f32.mrf.mxu0
        %v1402 = vadd.f32 0.0, %v1401
        %v1403 = vpop.f32.mrf.mxu0
        %v1404 = vadd.f32 0.0, %v1403
        %1405 = vmatmul.bf16.gmra.mxu0 %v1164
        %v1406 = vpop.f32.mrf.mxu0
        %v1407 = vadd.f32 0.0, %v1406
        %v1408 = vpop.f32.mrf.mxu0
        %v1409 = vadd.f32 0.0, %v1408
        %1410 = vdwg.mxu0
        %1411 = vmatpush.bf16.msra.mxu0 0
        %1412 = vmatpush.bf16.msra.mxu0 0
        %1413 = vmatpush.bf16.msra.mxu0 0
        %1414 = vmatpush.bf16.msra.mxu0 0
        %1415 = vmatpush.bf16.msra.mxu0 %v1082
        %1416 = vmatpush.bf16.msra.mxu0 %v1074
        %1417 = vmatpush.bf16.msra.mxu0 %v1066
        %1418 = vmatpush.bf16.msra.mxu0 %v1058
        %1419 = vmatmul.bf16.gmra.mxu0 %v1143
        %v1420 = vpop.f32.mrf.mxu0
        %v1421 = vadd.f32 0.0, %v1420
        %v1422 = vpop.f32.mrf.mxu0
        %v1423 = vadd.f32 0.0, %v1422
        %1424 = vmatmul.bf16.gmra.mxu0 %v1146
        %v1425 = vpop.f32.mrf.mxu0
        %v1426 = vadd.f32 0.0, %v1425
        %v1427 = vpop.f32.mrf.mxu0
        %v1428 = vadd.f32 0.0, %v1427
        %1429 = vmatmul.bf16.gmra.mxu0 %v1149
        %v1430 = vpop.f32.mrf.mxu0
        %v1431 = vadd.f32 0.0, %v1430
        %v1432 = vpop.f32.mrf.mxu0
        %v1433 = vadd.f32 0.0, %v1432
        %1434 = vmatmul.bf16.gmra.mxu0 %v1152
        %v1435 = vpop.f32.mrf.mxu0
        %v1436 = vadd.f32 0.0, %v1435
        %v1437 = vpop.f32.mrf.mxu0
        %v1438 = vadd.f32 0.0, %v1437
        %1439 = vmatmul.bf16.gmra.mxu0 %v1155
        %v1440 = vpop.f32.mrf.mxu0
        %v1441 = vadd.f32 0.0, %v1440
        %v1442 = vpop.f32.mrf.mxu0
        %v1443 = vadd.f32 0.0, %v1442
        %1444 = vmatmul.bf16.gmra.mxu0 %v1158
        %v1445 = vpop.f32.mrf.mxu0
        %v1446 = vadd.f32 0.0, %v1445
        %v1447 = vpop.f32.mrf.mxu0
        %v1448 = vadd.f32 0.0, %v1447
        %1449 = vmatmul.bf16.gmra.mxu0 %v1161
        %v1450 = vpop.f32.mrf.mxu0
        %v1451 = vadd.f32 0.0, %v1450
        %v1452 = vpop.f32.mrf.mxu0
        %v1453 = vadd.f32 0.0, %v1452
        %1454 = vmatmul.bf16.gmra.mxu0 %v1164
        %v1455 = vpop.f32.mrf.mxu0
        %v1456 = vadd.f32 0.0, %v1455
        %v1457 = vpop.f32.mrf.mxu0
        %v1458 = vadd.f32 0.0, %v1457
        %1459 = vdwg.mxu0
        %1460 = vmatpush.bf16.msra.mxu0 0
        %1461 = vmatpush.bf16.msra.mxu0 0
        %1462 = vmatpush.bf16.msra.mxu0 0
        %1463 = vmatpush.bf16.msra.mxu0 0
        %1464 = vmatpush.bf16.msra.mxu0 %v1083
        %1465 = vmatpush.bf16.msra.mxu0 %v1075
        %1466 = vmatpush.bf16.msra.mxu0 %v1067
        %1467 = vmatpush.bf16.msra.mxu0 %v1059
        %1468 = vmatmul.bf16.gmra.mxu0 %v1143
        %v1469 = vpop.f32.mrf.mxu0
        %v1470 = vadd.f32 0.0, %v1469
        %v1471 = vpop.f32.mrf.mxu0
        %v1472 = vadd.f32 0.0, %v1471
        %1473 = vmatmul.bf16.gmra.mxu0 %v1146
        %v1474 = vpop.f32.mrf.mxu0
        %v1475 = vadd.f32 0.0, %v1474
        %v1476 = vpop.f32.mrf.mxu0
        %v1477 = vadd.f32 0.0, %v1476
        %1478 = vmatmul.bf16.gmra.mxu0 %v1149
        %v1479 = vpop.f32.mrf.mxu0
        %v1480 = vadd.f32 0.0, %v1479
        %v1481 = vpop.f32.mrf.mxu0
        %v1482 = vadd.f32 0.0, %v1481
        %1483 = vmatmul.bf16.gmra.mxu0 %v1152
        %v1484 = vpop.f32.mrf.mxu0
        %v1485 = vadd.f32 0.0, %v1484
        %v1486 = vpop.f32.mrf.mxu0
        %v1487 = vadd.f32 0.0, %v1486
        %1488 = vmatmul.bf16.gmra.mxu0 %v1155
        %v1489 = vpop.f32.mrf.mxu0
        %v1490 = vadd.f32 0.0, %v1489
        %v1491 = vpop.f32.mrf.mxu0
        %v1492 = vadd.f32 0.0, %v1491
        %1493 = vmatmul.bf16.gmra.mxu0 %v1158
        %v1494 = vpop.f32.mrf.mxu0
        %v1495 = vadd.f32 0.0, %v1494
        %v1496 = vpop.f32.mrf.mxu0
        %v1497 = vadd.f32 0.0, %v1496
        %1498 = vmatmul.bf16.gmra.mxu0 %v1161
        %v1499 = vpop.f32.mrf.mxu0
        %v1500 = vadd.f32 0.0, %v1499
        %v1501 = vpop.f32.mrf.mxu0
        %v1502 = vadd.f32 0.0, %v1501
        %1503 = vmatmul.bf16.gmra.mxu0 %v1164
        %v1504 = vpop.f32.mrf.mxu0
        %v1505 = vadd.f32 0.0, %v1504
        %v1506 = vpop.f32.mrf.mxu0
        %v1507 = vadd.f32 0.0, %v1506
        %1508 = vdwg.mxu0
        %1509 = vmatpush.bf16.msra.mxu0 0
        %1510 = vmatpush.bf16.msra.mxu0 0
        %1511 = vmatpush.bf16.msra.mxu0 0
        %1512 = vmatpush.bf16.msra.mxu0 0
        %1513 = vmatpush.bf16.msra.mxu0 %v1084
        %1514 = vmatpush.bf16.msra.mxu0 %v1076
        %1515 = vmatpush.bf16.msra.mxu0 %v1068
        %1516 = vmatpush.bf16.msra.mxu0 %v1060
        %1517 = vmatmul.bf16.gmra.mxu0 %v1143
        %v1518 = vpop.f32.mrf.mxu0
        %v1519 = vadd.f32 0.0, %v1518
        %v1520 = vpop.f32.mrf.mxu0
        %v1521 = vadd.f32 0.0, %v1520
        %1522 = vmatmul.bf16.gmra.mxu0 %v1146
        %v1523 = vpop.f32.mrf.mxu0
        %v1524 = vadd.f32 0.0, %v1523
        %v1525 = vpop.f32.mrf.mxu0
        %v1526 = vadd.f32 0.0, %v1525
        %1527 = vmatmul.bf16.gmra.mxu0 %v1149
        %v1528 = vpop.f32.mrf.mxu0
        %v1529 = vadd.f32 0.0, %v1528
        %v1530 = vpop.f32.mrf.mxu0
        %v1531 = vadd.f32 0.0, %v1530
        %1532 = vmatmul.bf16.gmra.mxu0 %v1152
        %v1533 = vpop.f32.mrf.mxu0
        %v1534 = vadd.f32 0.0, %v1533
        %v1535 = vpop.f32.mrf.mxu0
        %v1536 = vadd.f32 0.0, %v1535
        %1537 = vmatmul.bf16.gmra.mxu0 %v1155
        %v1538 = vpop.f32.mrf.mxu0
        %v1539 = vadd.f32 0.0, %v1538
        %v1540 = vpop.f32.mrf.mxu0
        %v1541 = vadd.f32 0.0, %v1540
        %1542 = vmatmul.bf16.gmra.mxu0 %v1158
        %v1543 = vpop.f32.mrf.mxu0
        %v1544 = vadd.f32 0.0, %v1543
        %v1545 = vpop.f32.mrf.mxu0
        %v1546 = vadd.f32 0.0, %v1545
        %1547 = vmatmul.bf16.gmra.mxu0 %v1161
        %v1548 = vpop.f32.mrf.mxu0
        %v1549 = vadd.f32 0.0, %v1548
        %v1550 = vpop.f32.mrf.mxu0
        %v1551 = vadd.f32 0.0, %v1550
        %1552 = vmatmul.bf16.gmra.mxu0 %v1164
        %v1553 = vpop.f32.mrf.mxu0
        %v1554 = vadd.f32 0.0, %v1553
        %v1555 = vpop.f32.mrf.mxu0
        %v1556 = vadd.f32 0.0, %v1555
        %1557 = vdwg.mxu0
        %vm1558 = vcmp.eq.s32.totalorder %v432, 0
        %vm1559 = vcmp.eq.s32.totalorder %v433, 0
        %vm1560 = vcmp.eq.s32.totalorder %v434, 0
        %vm1561 = vcmp.eq.s32.totalorder %v435, 0
        %v1562 = vsel %vm1558, %v533, 0.0
        %v1563 = vsel %vm1559, %v534, 0.0
        %v1564 = vsel %vm1560, %v535, 0.0
        %v1565 = vsel %vm1561, %v536, 0.0
        %vm1566 = vcmp.eq.s32.totalorder %v432, 4294967295
        %vm1567 = vcmp.eq.s32.totalorder %v433, 4294967295
        %vm1568 = vcmp.eq.s32.totalorder %v434, 4294967295
        %vm1569 = vcmp.eq.s32.totalorder %v435, 4294967295
        %v1570 = vsel %vm1566, %v428, 0.0
        %v1571 = vsel %vm1567, %v429, 0.0
        %v1572 = vsel %vm1568, %v430, 0.0
        %v1573 = vsel %vm1569, %v431, 0.0
        %v1574 = vadd.f32 %v1562, %v1570
        %v1575 = vadd.f32 %v1563, %v1571
        %v1576 = vadd.f32 %v1564, %v1572
        %v1577 = vadd.f32 %v1565, %v1573
        %v1582 = vperm.slane %v1574, 0
        %v1583 = vperm.slane %v1574, 4
        %v1584 = vperm.slane %v1575, 0
        %v1585 = vperm.slane %v1575, 4
        %v1586 = vperm.slane %v1576, 0
        %v1587 = vperm.slane %v1576, 4
        %v1588 = vperm.slane %v1577, 0
        %v1589 = vperm.slane %v1577, 4
        %v1598 = vperm.slane %v1582, 0
        %v1599 = vperm.slane %v1583, 0
        %v1600 = vperm.slane %v1584, 0
        %v1601 = vperm.slane %v1585, 0
        %v1602 = vperm.slane %v1586, 0
        %v1603 = vperm.slane %v1587, 0
        %v1604 = vperm.slane %v1588, 0
        %v1605 = vperm.slane %v1589, 0
        %v1606 = vmul.f32 %v1598, %v1176
        %v1607 = vmul.f32 %v1599, %v1225
        %v1608 = vmul.f32 %v1600, %v1274
        %v1609 = vmul.f32 %v1601, %v1323
        %v1610 = vmul.f32 %v1602, %v1372
        %v1611 = vmul.f32 %v1603, %v1421
        %v1612 = vmul.f32 %v1604, %v1470
        %v1613 = vmul.f32 %v1605, %v1519
        %v1614 = vmul.f32 %v1598, %v1178
        %v1615 = vmul.f32 %v1599, %v1227
        %v1616 = vmul.f32 %v1600, %v1276
        %v1617 = vmul.f32 %v1601, %v1325
        %v1618 = vmul.f32 %v1602, %v1374
        %v1619 = vmul.f32 %v1603, %v1423
        %v1620 = vmul.f32 %v1604, %v1472
        %v1621 = vmul.f32 %v1605, %v1521
        %v1622 = vadd.f32 %v1606, 0.0
        %v1623 = vadd.f32 %v1607, 0.0
        %v1624 = vadd.f32 %v1608, 0.0
        %v1625 = vadd.f32 %v1609, 0.0
        %v1626 = vadd.f32 %v1610, 0.0
        %v1627 = vadd.f32 %v1611, 0.0
        %v1628 = vadd.f32 %v1612, 0.0
        %v1629 = vadd.f32 %v1613, 0.0
        %v1630 = vadd.f32 %v1614, 0.0
        %v1631 = vadd.f32 %v1615, 0.0
        %v1632 = vadd.f32 %v1616, 0.0
        %v1633 = vadd.f32 %v1617, 0.0
        %v1634 = vadd.f32 %v1618, 0.0
        %v1635 = vadd.f32 %v1619, 0.0
        %v1636 = vadd.f32 %v1620, 0.0
        %v1637 = vadd.f32 %v1621, 0.0
        %vm1638 = vcmp.eq.s32.totalorder %v432, 1
        %vm1639 = vcmp.eq.s32.totalorder %v433, 1
        %vm1640 = vcmp.eq.s32.totalorder %v434, 1
        %vm1641 = vcmp.eq.s32.totalorder %v435, 1
        %v1642 = vsel %vm1638, %v533, 0.0
        %v1643 = vsel %vm1639, %v534, 0.0
        %v1644 = vsel %vm1640, %v535, 0.0
        %v1645 = vsel %vm1641, %v536, 0.0
        %v1646 = vsel %vm1558, %v428, 0.0
        %v1647 = vsel %vm1559, %v429, 0.0
        %v1648 = vsel %vm1560, %v430, 0.0
        %v1649 = vsel %vm1561, %v431, 0.0
        %v1650 = vadd.f32 %v1642, %v1646
        %v1651 = vadd.f32 %v1643, %v1647
        %v1652 = vadd.f32 %v1644, %v1648
        %v1653 = vadd.f32 %v1645, %v1649
        %v1658 = vperm.slane %v1650, 0
        %v1659 = vperm.slane %v1650, 4
        %v1660 = vperm.slane %v1651, 0
        %v1661 = vperm.slane %v1651, 4
        %v1662 = vperm.slane %v1652, 0
        %v1663 = vperm.slane %v1652, 4
        %v1664 = vperm.slane %v1653, 0
        %v1665 = vperm.slane %v1653, 4
        %v1674 = vperm.slane %v1658, 0
        %v1675 = vperm.slane %v1659, 0
        %v1676 = vperm.slane %v1660, 0
        %v1677 = vperm.slane %v1661, 0
        %v1678 = vperm.slane %v1662, 0
        %v1679 = vperm.slane %v1663, 0
        %v1680 = vperm.slane %v1664, 0
        %v1681 = vperm.slane %v1665, 0
        %v1682 = vmul.f32 %v1674, %v1181
        %v1683 = vmul.f32 %v1675, %v1230
        %v1684 = vmul.f32 %v1676, %v1279
        %v1685 = vmul.f32 %v1677, %v1328
        %v1686 = vmul.f32 %v1678, %v1377
        %v1687 = vmul.f32 %v1679, %v1426
        %v1688 = vmul.f32 %v1680, %v1475
        %v1689 = vmul.f32 %v1681, %v1524
        %v1690 = vmul.f32 %v1674, %v1183
        %v1691 = vmul.f32 %v1675, %v1232
        %v1692 = vmul.f32 %v1676, %v1281
        %v1693 = vmul.f32 %v1677, %v1330
        %v1694 = vmul.f32 %v1678, %v1379
        %v1695 = vmul.f32 %v1679, %v1428
        %v1696 = vmul.f32 %v1680, %v1477
        %v1697 = vmul.f32 %v1681, %v1526
        %v1698 = vadd.f32 %v1622, %v1682
        %v1699 = vadd.f32 %v1623, %v1683
        %v1700 = vadd.f32 %v1624, %v1684
        %v1701 = vadd.f32 %v1625, %v1685
        %v1702 = vadd.f32 %v1626, %v1686
        %v1703 = vadd.f32 %v1627, %v1687
        %v1704 = vadd.f32 %v1628, %v1688
        %v1705 = vadd.f32 %v1629, %v1689
        %v1706 = vadd.f32 %v1630, %v1690
        %v1707 = vadd.f32 %v1631, %v1691
        %v1708 = vadd.f32 %v1632, %v1692
        %v1709 = vadd.f32 %v1633, %v1693
        %v1710 = vadd.f32 %v1634, %v1694
        %v1711 = vadd.f32 %v1635, %v1695
        %v1712 = vadd.f32 %v1636, %v1696
        %v1713 = vadd.f32 %v1637, %v1697
        %vm1714 = vcmp.eq.s32.totalorder %v432, 2
        %vm1715 = vcmp.eq.s32.totalorder %v433, 2
        %vm1716 = vcmp.eq.s32.totalorder %v434, 2
        %vm1717 = vcmp.eq.s32.totalorder %v435, 2
        %v1718 = vsel %vm1714, %v533, 0.0
        %v1719 = vsel %vm1715, %v534, 0.0
        %v1720 = vsel %vm1716, %v535, 0.0
        %v1721 = vsel %vm1717, %v536, 0.0
        %v1722 = vsel %vm1638, %v428, 0.0
        %v1723 = vsel %vm1639, %v429, 0.0
        %v1724 = vsel %vm1640, %v430, 0.0
        %v1725 = vsel %vm1641, %v431, 0.0
        %v1726 = vadd.f32 %v1718, %v1722
        %v1727 = vadd.f32 %v1719, %v1723
        %v1728 = vadd.f32 %v1720, %v1724
        %v1729 = vadd.f32 %v1721, %v1725
        %v1734 = vperm.slane %v1726, 0
        %v1735 = vperm.slane %v1726, 4
        %v1736 = vperm.slane %v1727, 0
        %v1737 = vperm.slane %v1727, 4
        %v1738 = vperm.slane %v1728, 0
        %v1739 = vperm.slane %v1728, 4
        %v1740 = vperm.slane %v1729, 0
        %v1741 = vperm.slane %v1729, 4
        %v1750 = vperm.slane %v1734, 0
        %v1751 = vperm.slane %v1735, 0
        %v1752 = vperm.slane %v1736, 0
        %v1753 = vperm.slane %v1737, 0
        %v1754 = vperm.slane %v1738, 0
        %v1755 = vperm.slane %v1739, 0
        %v1756 = vperm.slane %v1740, 0
        %v1757 = vperm.slane %v1741, 0
        %v1758 = vmul.f32 %v1750, %v1186
        %v1759 = vmul.f32 %v1751, %v1235
        %v1760 = vmul.f32 %v1752, %v1284
        %v1761 = vmul.f32 %v1753, %v1333
        %v1762 = vmul.f32 %v1754, %v1382
        %v1763 = vmul.f32 %v1755, %v1431
        %v1764 = vmul.f32 %v1756, %v1480
        %v1765 = vmul.f32 %v1757, %v1529
        %v1766 = vmul.f32 %v1750, %v1188
        %v1767 = vmul.f32 %v1751, %v1237
        %v1768 = vmul.f32 %v1752, %v1286
        %v1769 = vmul.f32 %v1753, %v1335
        %v1770 = vmul.f32 %v1754, %v1384
        %v1771 = vmul.f32 %v1755, %v1433
        %v1772 = vmul.f32 %v1756, %v1482
        %v1773 = vmul.f32 %v1757, %v1531
        %v1774 = vadd.f32 %v1698, %v1758
        %v1775 = vadd.f32 %v1699, %v1759
        %v1776 = vadd.f32 %v1700, %v1760
        %v1777 = vadd.f32 %v1701, %v1761
        %v1778 = vadd.f32 %v1702, %v1762
        %v1779 = vadd.f32 %v1703, %v1763
        %v1780 = vadd.f32 %v1704, %v1764
        %v1781 = vadd.f32 %v1705, %v1765
        %v1782 = vadd.f32 %v1706, %v1766
        %v1783 = vadd.f32 %v1707, %v1767
        %v1784 = vadd.f32 %v1708, %v1768
        %v1785 = vadd.f32 %v1709, %v1769
        %v1786 = vadd.f32 %v1710, %v1770
        %v1787 = vadd.f32 %v1711, %v1771
        %v1788 = vadd.f32 %v1712, %v1772
        %v1789 = vadd.f32 %v1713, %v1773
        %vm1790 = vcmp.eq.s32.totalorder %v432, 3
        %vm1791 = vcmp.eq.s32.totalorder %v433, 3
        %vm1792 = vcmp.eq.s32.totalorder %v434, 3
        %vm1793 = vcmp.eq.s32.totalorder %v435, 3
        %v1794 = vsel %vm1790, %v533, 0.0
        %v1795 = vsel %vm1791, %v534, 0.0
        %v1796 = vsel %vm1792, %v535, 0.0
        %v1797 = vsel %vm1793, %v536, 0.0
        %v1798 = vsel %vm1714, %v428, 0.0
        %v1799 = vsel %vm1715, %v429, 0.0
        %v1800 = vsel %vm1716, %v430, 0.0
        %v1801 = vsel %vm1717, %v431, 0.0
        %v1802 = vadd.f32 %v1794, %v1798
        %v1803 = vadd.f32 %v1795, %v1799
        %v1804 = vadd.f32 %v1796, %v1800
        %v1805 = vadd.f32 %v1797, %v1801
        %v1810 = vperm.slane %v1802, 0
        %v1811 = vperm.slane %v1802, 4
        %v1812 = vperm.slane %v1803, 0
        %v1813 = vperm.slane %v1803, 4
        %v1814 = vperm.slane %v1804, 0
        %v1815 = vperm.slane %v1804, 4
        %v1816 = vperm.slane %v1805, 0
        %v1817 = vperm.slane %v1805, 4
        %v1826 = vperm.slane %v1810, 0
        %v1827 = vperm.slane %v1811, 0
        %v1828 = vperm.slane %v1812, 0
        %v1829 = vperm.slane %v1813, 0
        %v1830 = vperm.slane %v1814, 0
        %v1831 = vperm.slane %v1815, 0
        %v1832 = vperm.slane %v1816, 0
        %v1833 = vperm.slane %v1817, 0
        %v1834 = vmul.f32 %v1826, %v1191
        %v1835 = vmul.f32 %v1827, %v1240
        %v1836 = vmul.f32 %v1828, %v1289
        %v1837 = vmul.f32 %v1829, %v1338
        %v1838 = vmul.f32 %v1830, %v1387
        %v1839 = vmul.f32 %v1831, %v1436
        %v1840 = vmul.f32 %v1832, %v1485
        %v1841 = vmul.f32 %v1833, %v1534
        %v1842 = vmul.f32 %v1826, %v1193
        %v1843 = vmul.f32 %v1827, %v1242
        %v1844 = vmul.f32 %v1828, %v1291
        %v1845 = vmul.f32 %v1829, %v1340
        %v1846 = vmul.f32 %v1830, %v1389
        %v1847 = vmul.f32 %v1831, %v1438
        %v1848 = vmul.f32 %v1832, %v1487
        %v1849 = vmul.f32 %v1833, %v1536
        %v1850 = vadd.f32 %v1774, %v1834
        %v1851 = vadd.f32 %v1775, %v1835
        %v1852 = vadd.f32 %v1776, %v1836
        %v1853 = vadd.f32 %v1777, %v1837
        %v1854 = vadd.f32 %v1778, %v1838
        %v1855 = vadd.f32 %v1779, %v1839
        %v1856 = vadd.f32 %v1780, %v1840
        %v1857 = vadd.f32 %v1781, %v1841
        %v1858 = vadd.f32 %v1782, %v1842
        %v1859 = vadd.f32 %v1783, %v1843
        %v1860 = vadd.f32 %v1784, %v1844
        %v1861 = vadd.f32 %v1785, %v1845
        %v1862 = vadd.f32 %v1786, %v1846
        %v1863 = vadd.f32 %v1787, %v1847
        %v1864 = vadd.f32 %v1788, %v1848
        %v1865 = vadd.f32 %v1789, %v1849
        %vm1866 = vcmp.eq.s32.totalorder %v432, 4
        %vm1867 = vcmp.eq.s32.totalorder %v433, 4
        %vm1868 = vcmp.eq.s32.totalorder %v434, 4
        %vm1869 = vcmp.eq.s32.totalorder %v435, 4
        %v1870 = vsel %vm1866, %v533, 0.0
        %v1871 = vsel %vm1867, %v534, 0.0
        %v1872 = vsel %vm1868, %v535, 0.0
        %v1873 = vsel %vm1869, %v536, 0.0
        %v1874 = vsel %vm1790, %v428, 0.0
        %v1875 = vsel %vm1791, %v429, 0.0
        %v1876 = vsel %vm1792, %v430, 0.0
        %v1877 = vsel %vm1793, %v431, 0.0
        %v1878 = vadd.f32 %v1870, %v1874
        %v1879 = vadd.f32 %v1871, %v1875
        %v1880 = vadd.f32 %v1872, %v1876
        %v1881 = vadd.f32 %v1873, %v1877
        %v1886 = vperm.slane %v1878, 0
        %v1887 = vperm.slane %v1878, 4
        %v1888 = vperm.slane %v1879, 0
        %v1889 = vperm.slane %v1879, 4
        %v1890 = vperm.slane %v1880, 0
        %v1891 = vperm.slane %v1880, 4
        %v1892 = vperm.slane %v1881, 0
        %v1893 = vperm.slane %v1881, 4
        %v1902 = vperm.slane %v1886, 0
        %v1903 = vperm.slane %v1887, 0
        %v1904 = vperm.slane %v1888, 0
        %v1905 = vperm.slane %v1889, 0
        %v1906 = vperm.slane %v1890, 0
        %v1907 = vperm.slane %v1891, 0
        %v1908 = vperm.slane %v1892, 0
        %v1909 = vperm.slane %v1893, 0
        %v1910 = vmul.f32 %v1902, %v1196
        %v1911 = vmul.f32 %v1903, %v1245
        %v1912 = vmul.f32 %v1904, %v1294
        %v1913 = vmul.f32 %v1905, %v1343
        %v1914 = vmul.f32 %v1906, %v1392
        %v1915 = vmul.f32 %v1907, %v1441
        %v1916 = vmul.f32 %v1908, %v1490
        %v1917 = vmul.f32 %v1909, %v1539
        %v1918 = vmul.f32 %v1902, %v1198
        %v1919 = vmul.f32 %v1903, %v1247
        %v1920 = vmul.f32 %v1904, %v1296
        %v1921 = vmul.f32 %v1905, %v1345
        %v1922 = vmul.f32 %v1906, %v1394
        %v1923 = vmul.f32 %v1907, %v1443
        %v1924 = vmul.f32 %v1908, %v1492
        %v1925 = vmul.f32 %v1909, %v1541
        %v1926 = vadd.f32 %v1850, %v1910
        %v1927 = vadd.f32 %v1851, %v1911
        %v1928 = vadd.f32 %v1852, %v1912
        %v1929 = vadd.f32 %v1853, %v1913
        %v1930 = vadd.f32 %v1854, %v1914
        %v1931 = vadd.f32 %v1855, %v1915
        %v1932 = vadd.f32 %v1856, %v1916
        %v1933 = vadd.f32 %v1857, %v1917
        %v1934 = vadd.f32 %v1858, %v1918
        %v1935 = vadd.f32 %v1859, %v1919
        %v1936 = vadd.f32 %v1860, %v1920
        %v1937 = vadd.f32 %v1861, %v1921
        %v1938 = vadd.f32 %v1862, %v1922
        %v1939 = vadd.f32 %v1863, %v1923
        %v1940 = vadd.f32 %v1864, %v1924
        %v1941 = vadd.f32 %v1865, %v1925
        %vm1942 = vcmp.eq.s32.totalorder %v432, 5
        %vm1943 = vcmp.eq.s32.totalorder %v433, 5
        %vm1944 = vcmp.eq.s32.totalorder %v434, 5
        %vm1945 = vcmp.eq.s32.totalorder %v435, 5
        %v1946 = vsel %vm1942, %v533, 0.0
        %v1947 = vsel %vm1943, %v534, 0.0
        %v1948 = vsel %vm1944, %v535, 0.0
        %v1949 = vsel %vm1945, %v536, 0.0
        %v1950 = vsel %vm1866, %v428, 0.0
        %v1951 = vsel %vm1867, %v429, 0.0
        %v1952 = vsel %vm1868, %v430, 0.0
        %v1953 = vsel %vm1869, %v431, 0.0
        %v1954 = vadd.f32 %v1946, %v1950
        %v1955 = vadd.f32 %v1947, %v1951
        %v1956 = vadd.f32 %v1948, %v1952
        %v1957 = vadd.f32 %v1949, %v1953
        %v1962 = vperm.slane %v1954, 0
        %v1963 = vperm.slane %v1954, 4
        %v1964 = vperm.slane %v1955, 0
        %v1965 = vperm.slane %v1955, 4
        %v1966 = vperm.slane %v1956, 0
        %v1967 = vperm.slane %v1956, 4
        %v1968 = vperm.slane %v1957, 0
        %v1969 = vperm.slane %v1957, 4
        %v1978 = vperm.slane %v1962, 0
        %v1979 = vperm.slane %v1963, 0
        %v1980 = vperm.slane %v1964, 0
        %v1981 = vperm.slane %v1965, 0
        %v1982 = vperm.slane %v1966, 0
        %v1983 = vperm.slane %v1967, 0
        %v1984 = vperm.slane %v1968, 0
        %v1985 = vperm.slane %v1969, 0
        %v1986 = vmul.f32 %v1978, %v1201
        %v1987 = vmul.f32 %v1979, %v1250
        %v1988 = vmul.f32 %v1980, %v1299
        %v1989 = vmul.f32 %v1981, %v1348
        %v1990 = vmul.f32 %v1982, %v1397
        %v1991 = vmul.f32 %v1983, %v1446
        %v1992 = vmul.f32 %v1984, %v1495
        %v1993 = vmul.f32 %v1985, %v1544
        %v1994 = vmul.f32 %v1978, %v1203
        %v1995 = vmul.f32 %v1979, %v1252
        %v1996 = vmul.f32 %v1980, %v1301
        %v1997 = vmul.f32 %v1981, %v1350
        %v1998 = vmul.f32 %v1982, %v1399
        %v1999 = vmul.f32 %v1983, %v1448
        %v2000 = vmul.f32 %v1984, %v1497
        %v2001 = vmul.f32 %v1985, %v1546
        %v2002 = vadd.f32 %v1926, %v1986
        %v2003 = vadd.f32 %v1927, %v1987
        %v2004 = vadd.f32 %v1928, %v1988
        %v2005 = vadd.f32 %v1929, %v1989
        %v2006 = vadd.f32 %v1930, %v1990
        %v2007 = vadd.f32 %v1931, %v1991
        %v2008 = vadd.f32 %v1932, %v1992
        %v2009 = vadd.f32 %v1933, %v1993
        %v2010 = vadd.f32 %v1934, %v1994
        %v2011 = vadd.f32 %v1935, %v1995
        %v2012 = vadd.f32 %v1936, %v1996
        %v2013 = vadd.f32 %v1937, %v1997
        %v2014 = vadd.f32 %v1938, %v1998
        %v2015 = vadd.f32 %v1939, %v1999
        %v2016 = vadd.f32 %v1940, %v2000
        %v2017 = vadd.f32 %v1941, %v2001
        %vm2018 = vcmp.eq.s32.totalorder %v432, 6
        %vm2019 = vcmp.eq.s32.totalorder %v433, 6
        %vm2020 = vcmp.eq.s32.totalorder %v434, 6
        %vm2021 = vcmp.eq.s32.totalorder %v435, 6
        %v2022 = vsel %vm2018, %v533, 0.0
        %v2023 = vsel %vm2019, %v534, 0.0
        %v2024 = vsel %vm2020, %v535, 0.0
        %v2025 = vsel %vm2021, %v536, 0.0
        %v2026 = vsel %vm1942, %v428, 0.0
        %v2027 = vsel %vm1943, %v429, 0.0
        %v2028 = vsel %vm1944, %v430, 0.0
        %v2029 = vsel %vm1945, %v431, 0.0
        %v2030 = vadd.f32 %v2022, %v2026
        %v2031 = vadd.f32 %v2023, %v2027
        %v2032 = vadd.f32 %v2024, %v2028
        %v2033 = vadd.f32 %v2025, %v2029
        %v2038 = vperm.slane %v2030, 0
        %v2039 = vperm.slane %v2030, 4
        %v2040 = vperm.slane %v2031, 0
        %v2041 = vperm.slane %v2031, 4
        %v2042 = vperm.slane %v2032, 0
        %v2043 = vperm.slane %v2032, 4
        %v2044 = vperm.slane %v2033, 0
        %v2045 = vperm.slane %v2033, 4
        %v2054 = vperm.slane %v2038, 0
        %v2055 = vperm.slane %v2039, 0
        %v2056 = vperm.slane %v2040, 0
        %v2057 = vperm.slane %v2041, 0
        %v2058 = vperm.slane %v2042, 0
        %v2059 = vperm.slane %v2043, 0
        %v2060 = vperm.slane %v2044, 0
        %v2061 = vperm.slane %v2045, 0
        %v2062 = vmul.f32 %v2054, %v1206
        %v2063 = vmul.f32 %v2055, %v1255
        %v2064 = vmul.f32 %v2056, %v1304
        %v2065 = vmul.f32 %v2057, %v1353
        %v2066 = vmul.f32 %v2058, %v1402
        %v2067 = vmul.f32 %v2059, %v1451
        %v2068 = vmul.f32 %v2060, %v1500
        %v2069 = vmul.f32 %v2061, %v1549
        %v2070 = vmul.f32 %v2054, %v1208
        %v2071 = vmul.f32 %v2055, %v1257
        %v2072 = vmul.f32 %v2056, %v1306
        %v2073 = vmul.f32 %v2057, %v1355
        %v2074 = vmul.f32 %v2058, %v1404
        %v2075 = vmul.f32 %v2059, %v1453
        %v2076 = vmul.f32 %v2060, %v1502
        %v2077 = vmul.f32 %v2061, %v1551
        %v2078 = vadd.f32 %v2002, %v2062
        %v2079 = vadd.f32 %v2003, %v2063
        %v2080 = vadd.f32 %v2004, %v2064
        %v2081 = vadd.f32 %v2005, %v2065
        %v2082 = vadd.f32 %v2006, %v2066
        %v2083 = vadd.f32 %v2007, %v2067
        %v2084 = vadd.f32 %v2008, %v2068
        %v2085 = vadd.f32 %v2009, %v2069
        %v2086 = vadd.f32 %v2010, %v2070
        %v2087 = vadd.f32 %v2011, %v2071
        %v2088 = vadd.f32 %v2012, %v2072
        %v2089 = vadd.f32 %v2013, %v2073
        %v2090 = vadd.f32 %v2014, %v2074
        %v2091 = vadd.f32 %v2015, %v2075
        %v2092 = vadd.f32 %v2016, %v2076
        %v2093 = vadd.f32 %v2017, %v2077
        %vm2094 = vcmp.eq.s32.totalorder %v432, 7
        %vm2095 = vcmp.eq.s32.totalorder %v433, 7
        %vm2096 = vcmp.eq.s32.totalorder %v434, 7
        %vm2097 = vcmp.eq.s32.totalorder %v435, 7
        %v2098 = vsel %vm2094, %v533, 0.0
        %v2099 = vsel %vm2095, %v534, 0.0
        %v2100 = vsel %vm2096, %v535, 0.0
        %v2101 = vsel %vm2097, %v536, 0.0
        %v2102 = vsel %vm2018, %v428, 0.0
        %v2103 = vsel %vm2019, %v429, 0.0
        %v2104 = vsel %vm2020, %v430, 0.0
        %v2105 = vsel %vm2021, %v431, 0.0
        %v2106 = vadd.f32 %v2098, %v2102
        %v2107 = vadd.f32 %v2099, %v2103
        %v2108 = vadd.f32 %v2100, %v2104
        %v2109 = vadd.f32 %v2101, %v2105
        %v2114 = vperm.slane %v2106, 0
        %v2115 = vperm.slane %v2106, 4
        %v2116 = vperm.slane %v2107, 0
        %v2117 = vperm.slane %v2107, 4
        %v2118 = vperm.slane %v2108, 0
        %v2119 = vperm.slane %v2108, 4
        %v2120 = vperm.slane %v2109, 0
        %v2121 = vperm.slane %v2109, 4
        %v2130 = vperm.slane %v2114, 0
        %v2131 = vperm.slane %v2115, 0
        %v2132 = vperm.slane %v2116, 0
        %v2133 = vperm.slane %v2117, 0
        %v2134 = vperm.slane %v2118, 0
        %v2135 = vperm.slane %v2119, 0
        %v2136 = vperm.slane %v2120, 0
        %v2137 = vperm.slane %v2121, 0
        %v2138 = vmul.f32 %v2130, %v1211
        %v2139 = vmul.f32 %v2131, %v1260
        %v2140 = vmul.f32 %v2132, %v1309
        %v2141 = vmul.f32 %v2133, %v1358
        %v2142 = vmul.f32 %v2134, %v1407
        %v2143 = vmul.f32 %v2135, %v1456
        %v2144 = vmul.f32 %v2136, %v1505
        %v2145 = vmul.f32 %v2137, %v1554
        %v2146 = vmul.f32 %v2130, %v1213
        %v2147 = vmul.f32 %v2131, %v1262
        %v2148 = vmul.f32 %v2132, %v1311
        %v2149 = vmul.f32 %v2133, %v1360
        %v2150 = vmul.f32 %v2134, %v1409
        %v2151 = vmul.f32 %v2135, %v1458
        %v2152 = vmul.f32 %v2136, %v1507
        %v2153 = vmul.f32 %v2137, %v1556
        %v2154 = vadd.f32 %v2078, %v2138
        %v2155 = vadd.f32 %v2079, %v2139
        %v2156 = vadd.f32 %v2080, %v2140
        %v2157 = vadd.f32 %v2081, %v2141
        %v2158 = vadd.f32 %v2082, %v2142
        %v2159 = vadd.f32 %v2083, %v2143
        %v2160 = vadd.f32 %v2084, %v2144
        %v2161 = vadd.f32 %v2085, %v2145
        %v2162 = vadd.f32 %v2086, %v2146
        %v2163 = vadd.f32 %v2087, %v2147
        %v2164 = vadd.f32 %v2088, %v2148
        %v2165 = vadd.f32 %v2089, %v2149
        %v2166 = vadd.f32 %v2090, %v2150
        %v2167 = vadd.f32 %v2091, %v2151
        %v2168 = vadd.f32 %v2092, %v2152
        %v2169 = vadd.f32 %v2093, %v2153
        %v2170 = vadd.f32 %v2154, -4.59512
        %v2171 = vadd.f32 %v2155, -4.59512
        %v2172 = vadd.f32 %v2156, -4.59512
        %v2173 = vadd.f32 %v2157, -4.59512
        %v2174 = vadd.f32 %v2158, -4.59512
        %v2175 = vadd.f32 %v2159, -4.59512
        %v2176 = vadd.f32 %v2160, -4.59512
        %v2177 = vadd.f32 %v2161, -4.59512
        %v2178 = vmax.f32 %v2170, 0.0
        %v2179 = vmax.f32 %v2171, 0.0
        %v2180 = vmax.f32 %v2172, 0.0
        %v2181 = vmax.f32 %v2173, 0.0
        %v2182 = vmax.f32 %v2174, 0.0
        %v2183 = vmax.f32 %v2175, 0.0
        %v2184 = vmax.f32 %v2176, 0.0
        %v2185 = vmax.f32 %v2177, 0.0
        %v2186 = vand.u32 2147483647, %v2170
        %v2187 = vand.u32 2147483647, %v2171
        %v2188 = vand.u32 2147483647, %v2172
        %v2189 = vand.u32 2147483647, %v2173
        %v2190 = vand.u32 2147483647, %v2174
        %v2191 = vand.u32 2147483647, %v2175
        %v2192 = vand.u32 2147483647, %v2176
        %v2193 = vand.u32 2147483647, %v2177
        %v2194 = vsub.f32 0.0, %v2186
        %v2195 = vsub.f32 0.0, %v2187
        %v2196 = vsub.f32 0.0, %v2188
        %v2197 = vsub.f32 0.0, %v2189
        %v2198 = vsub.f32 0.0, %v2190
        %v2199 = vsub.f32 0.0, %v2191
        %v2200 = vsub.f32 0.0, %v2192
        %v2201 = vsub.f32 0.0, %v2193
        %v2202 = vmul.f32 %v2194, 1.442695
        %v2203 = vpow.pop %v2202
        %v2204 = vmul.f32 %v2195, 1.442695
        %v2205 = vpow.pop %v2204
        %v2206 = vmul.f32 %v2196, 1.442695
        %v2207 = vpow.pop %v2206
        %v2208 = vmul.f32 %v2197, 1.442695
        %v2209 = vpow.pop %v2208
        %v2210 = vmul.f32 %v2198, 1.442695
        %v2211 = vpow.pop %v2210
        %v2212 = vmul.f32 %v2199, 1.442695
        %v2213 = vpow.pop %v2212
        %v2214 = vmul.f32 %v2200, 1.442695
        %v2215 = vpow.pop %v2214
        %v2216 = vmul.f32 %v2201, 1.442695
        %v2217 = vpow.pop %v2216
        %v2218 = vadd.f32 %v2203, 1.0
        %v2219 = vadd.f32 %v2205, 1.0
        %v2220 = vadd.f32 %v2207, 1.0
        %v2221 = vadd.f32 %v2209, 1.0
        %v2222 = vadd.f32 %v2211, 1.0
        %v2223 = vadd.f32 %v2213, 1.0
        %v2224 = vadd.f32 %v2215, 1.0
        %v2225 = vadd.f32 %v2217, 1.0
        %v2226 = vlog2.pop %v2218
        %v2227 = vmul.f32 %v2226, 0.6931472
        %v2228 = vlog2.pop %v2219
        %v2229 = vmul.f32 %v2228, 0.6931472
        %v2230 = vlog2.pop %v2220
        %v2231 = vmul.f32 %v2230, 0.6931472
        %v2232 = vlog2.pop %v2221
        %v2233 = vmul.f32 %v2232, 0.6931472
        %v2234 = vlog2.pop %v2222
        %v2235 = vmul.f32 %v2234, 0.6931472
        %v2236 = vlog2.pop %v2223
        %v2237 = vmul.f32 %v2236, 0.6931472
        %v2238 = vlog2.pop %v2224
        %v2239 = vmul.f32 %v2238, 0.6931472
        %v2240 = vlog2.pop %v2225
        %v2241 = vmul.f32 %v2240, 0.6931472
        %v2242 = vadd.f32 %v2178, %v2227
        %v2243 = vadd.f32 %v2179, %v2229
        %v2244 = vadd.f32 %v2180, %v2231
        %v2245 = vadd.f32 %v2181, %v2233
        %v2246 = vadd.f32 %v2182, %v2235
        %v2247 = vadd.f32 %v2183, %v2237
        %v2248 = vadd.f32 %v2184, %v2239
        %v2249 = vadd.f32 %v2185, %v2241
        %v2250 = vsub.f32 0.0, %v2242
        %v2251 = vsub.f32 0.0, %v2243
        %v2252 = vsub.f32 0.0, %v2244
        %v2253 = vsub.f32 0.0, %v2245
        %v2254 = vsub.f32 0.0, %v2246
        %v2255 = vsub.f32 0.0, %v2247
        %v2256 = vsub.f32 0.0, %v2248
        %v2257 = vsub.f32 0.0, %v2249
        %v2258 = vmul.f32 %v2250, 0.05
        %v2259 = vmul.f32 %v2251, 0.05
        %v2260 = vmul.f32 %v2252, 0.05
        %v2261 = vmul.f32 %v2253, 0.05
        %v2262 = vmul.f32 %v2254, 0.05
        %v2263 = vmul.f32 %v2255, 0.05
        %v2264 = vmul.f32 %v2256, 0.05
        %v2265 = vmul.f32 %v2257, 0.05
        %v2266 = vmul.f32 %v2258, 1.442695
        %v2267 = vpow.pop %v2266
        %v2268 = vmul.f32 %v2259, 1.442695
        %v2269 = vpow.pop %v2268
        %v2270 = vmul.f32 %v2260, 1.442695
        %v2271 = vpow.pop %v2270
        %v2272 = vmul.f32 %v2261, 1.442695
        %v2273 = vpow.pop %v2272
        %v2274 = vmul.f32 %v2262, 1.442695
        %v2275 = vpow.pop %v2274
        %v2276 = vmul.f32 %v2263, 1.442695
        %v2277 = vpow.pop %v2276
        %v2278 = vmul.f32 %v2264, 1.442695
        %v2279 = vpow.pop %v2278
        %v2280 = vmul.f32 %v2265, 1.442695
        %v2281 = vpow.pop %v2280
        %v2282 = vsub.f32 1.0, %v2267
        %v2283 = vsub.f32 1.0, %v2269
        %v2284 = vsub.f32 1.0, %v2271
        %v2285 = vsub.f32 1.0, %v2273
        %v2286 = vsub.f32 1.0, %v2275
        %v2287 = vsub.f32 1.0, %v2277
        %v2288 = vsub.f32 1.0, %v2279
        %v2289 = vsub.f32 1.0, %v2281
        %v2290 = vld [vmem:[%s3] sm:$0xf]
        %v2291 = vld [vmem:[%s3 + $0x4] sm:$0xf]
        %v2292 = vld [vmem:[%s3 + $0x8] sm:$0xf]
        %v2293 = vld [vmem:[%s3 + $0xc] sm:$0xf]
        %v2294 = vld [vmem:[%s3 + $0x10] sm:$0xf]
        %v2295 = vld [vmem:[%s3 + $0x14] sm:$0xf]
        %v2296 = vld [vmem:[%s3 + $0x18] sm:$0xf]
        %v2297 = vld [vmem:[%s3 + $0x1c] sm:$0xf]
        %v2298 = vld [vmem:[%s3 + $0x20] sm:$0xf]
        %v2299 = vld [vmem:[%s3 + $0x24] sm:$0xf]
        %v2300 = vld [vmem:[%s3 + $0x28] sm:$0xf]
        %v2301 = vld [vmem:[%s3 + $0x2c] sm:$0xf]
        %v2302 = vld [vmem:[%s3 + $0x30] sm:$0xf]
        %v2303 = vld [vmem:[%s3 + $0x34] sm:$0xf]
        %v2304 = vld [vmem:[%s3 + $0x38] sm:$0xf]
        %v2305 = vld [vmem:[%s3 + $0x3c] sm:$0xf]
        %v2306 = vpack.c.bf16 %v2162, %v2154
        %v2307 = vpack.c.bf16 %v2163, %v2155
        %v2308 = vpack.c.bf16 %v2164, %v2156
        %v2309 = vpack.c.bf16 %v2165, %v2157
        %v2310 = vpack.c.bf16 %v2166, %v2158
        %v2311 = vpack.c.bf16 %v2167, %v2159
        %v2312 = vpack.c.bf16 %v2168, %v2160
        %v2313 = vpack.c.bf16 %v2169, %v2161
        %v2314 = vld [vmem:[%s4] sm:$0xf]
        %v2315 = vld [vmem:[%s4 + $0x4] sm:$0xf]
        %v2316 = vld [vmem:[%s4 + $0x8] sm:$0xf]
        %v2317 = vld [vmem:[%s4 + $0xc] sm:$0xf]
        %v2318 = vld [vmem:[%s4 + $0x10] sm:$0xf]
        %v2319 = vld [vmem:[%s4 + $0x14] sm:$0xf]
        %v2320 = vld [vmem:[%s4 + $0x18] sm:$0xf]
        %v2321 = vld [vmem:[%s4 + $0x1c] sm:$0xf]
        %v2322 = vld [vmem:[%s4 + $0x20] sm:$0xf]
        %v2323 = vld [vmem:[%s4 + $0x24] sm:$0xf]
        %v2324 = vld [vmem:[%s4 + $0x28] sm:$0xf]
        %v2325 = vld [vmem:[%s4 + $0x2c] sm:$0xf]
        %v2326 = vld [vmem:[%s4 + $0x30] sm:$0xf]
        %v2327 = vld [vmem:[%s4 + $0x34] sm:$0xf]
        %v2328 = vld [vmem:[%s4 + $0x38] sm:$0xf]
        %v2329 = vld [vmem:[%s4 + $0x3c] sm:$0xf]
        %v2330 = vld [vmem:[%s358] sm:$0xff]
        %v2331 = vld [vmem:[%s358 + $0x8] sm:$0xff]
        %v2332 = vld [vmem:[%s358 + $0x10] sm:$0xff]
        %v2333 = vld [vmem:[%s358 + $0x18] sm:$0xff]
        %v2334 = vld [vmem:[%s358 + $0x20] sm:$0xff]
        %v2335 = vld [vmem:[%s358 + $0x28] sm:$0xff]
        %v2336 = vld [vmem:[%s358 + $0x30] sm:$0xff]
        %v2337 = vld [vmem:[%s358 + $0x38] sm:$0xff]
        %v2338 = vld [vmem:[%s358 + $0x40] sm:$0xff]
        %v2339 = vld [vmem:[%s358 + $0x48] sm:$0xff]
        %v2340 = vld [vmem:[%s358 + $0x50] sm:$0xff]
        %v2341 = vld [vmem:[%s358 + $0x58] sm:$0xff]
        %v2342 = vld [vmem:[%s358 + $0x60] sm:$0xff]
        %v2343 = vld [vmem:[%s358 + $0x68] sm:$0xff]
        %v2344 = vld [vmem:[%s358 + $0x70] sm:$0xff]
        %v2345 = vld [vmem:[%s358 + $0x78] sm:$0xff]
        %v2362 = vunpack.c.l.b16 %v2314
        %v2363 = vunpack.c.l.b16 %v2315
        %v2364 = vunpack.c.l.b16 %v2316
        %v2365 = vunpack.c.l.b16 %v2317
        %v2366 = vunpack.c.l.b16 %v2318
        %v2367 = vunpack.c.l.b16 %v2319
        %v2368 = vunpack.c.l.b16 %v2320
        %v2369 = vunpack.c.l.b16 %v2321
        %v2370 = vunpack.c.l.b16 %v2322
        %v2371 = vunpack.c.l.b16 %v2323
        %v2372 = vunpack.c.l.b16 %v2324
        %v2373 = vunpack.c.l.b16 %v2325
        %v2374 = vunpack.c.l.b16 %v2326
        %v2375 = vunpack.c.l.b16 %v2327
        %v2376 = vunpack.c.l.b16 %v2328
        %v2377 = vunpack.c.l.b16 %v2329
        %v2378 = vpack.c.b16 %v2363, %v2362
        %v2379 = vpack.c.b16 %v2365, %v2364
        %v2380 = vpack.c.b16 %v2367, %v2366
        %v2381 = vpack.c.b16 %v2369, %v2368
        %v2382 = vpack.c.b16 %v2371, %v2370
        %v2383 = vpack.c.b16 %v2373, %v2372
        %v2384 = vpack.c.b16 %v2375, %v2374
        %v2385 = vpack.c.b16 %v2377, %v2376
        %v2402 = vunpack.c.l.b16 %v2330
        %v2403 = vunpack.c.h.b16 %v2330
        %v2404 = vunpack.c.l.b16 %v2331
        %v2405 = vunpack.c.h.b16 %v2331
        %v2406 = vunpack.c.l.b16 %v2332
        %v2407 = vunpack.c.h.b16 %v2332
        %v2408 = vunpack.c.l.b16 %v2333
        %v2409 = vunpack.c.h.b16 %v2333
        %v2410 = vunpack.c.l.b16 %v2334
        %v2411 = vunpack.c.h.b16 %v2334
        %v2412 = vunpack.c.l.b16 %v2335
        %v2413 = vunpack.c.h.b16 %v2335
        %v2414 = vunpack.c.l.b16 %v2336
        %v2415 = vunpack.c.h.b16 %v2336
        %v2416 = vunpack.c.l.b16 %v2337
        %v2417 = vunpack.c.h.b16 %v2337
        %v2418 = vunpack.c.l.b16 %v2338
        %v2419 = vunpack.c.h.b16 %v2338
        %v2420 = vunpack.c.l.b16 %v2339
        %v2421 = vunpack.c.h.b16 %v2339
        %v2422 = vunpack.c.l.b16 %v2340
        %v2423 = vunpack.c.h.b16 %v2340
        %v2424 = vunpack.c.l.b16 %v2341
        %v2425 = vunpack.c.h.b16 %v2341
        %v2426 = vunpack.c.l.b16 %v2342
        %v2427 = vunpack.c.h.b16 %v2342
        %v2428 = vunpack.c.l.b16 %v2343
        %v2429 = vunpack.c.h.b16 %v2343
        %v2430 = vunpack.c.l.b16 %v2344
        %v2431 = vunpack.c.h.b16 %v2344
        %v2432 = vunpack.c.l.b16 %v2345
        %v2433 = vunpack.c.h.b16 %v2345
        %v2434 = vpack.c.b16 %v2410, %v2402
        %v2435 = vpack.c.b16 %v2411, %v2403
        %v2436 = vpack.c.b16 %v2412, %v2404
        %v2437 = vpack.c.b16 %v2413, %v2405
        %v2438 = vpack.c.b16 %v2414, %v2406
        %v2439 = vpack.c.b16 %v2415, %v2407
        %v2440 = vpack.c.b16 %v2416, %v2408
        %v2441 = vpack.c.b16 %v2417, %v2409
        %v2442 = vpack.c.b16 %v2426, %v2418
        %v2443 = vpack.c.b16 %v2427, %v2419
        %v2444 = vpack.c.b16 %v2428, %v2420
        %v2445 = vpack.c.b16 %v2429, %v2421
        %v2446 = vpack.c.b16 %v2430, %v2422
        %v2447 = vpack.c.b16 %v2431, %v2423
        %v2448 = vpack.c.b16 %v2432, %v2424
        %v2449 = vpack.c.b16 %v2433, %v2425
        %vm2466 = vcmask 261120
        %v2468 = vsel %vm2466, %v2378, 0
        %v2471 = vsel %vm2466, %v2379, 0
        %v2474 = vsel %vm2466, %v2380, 0
        %v2477 = vsel %vm2466, %v2381, 0
        %v2480 = vsel %vm2466, %v2382, 0
        %v2483 = vsel %vm2466, %v2383, 0
        %v2486 = vsel %vm2466, %v2384, 0
        %v2489 = vsel %vm2466, %v2385, 0
        %2491 = vmatpush.bf16.msra.mxu0 0
        %2492 = vmatpush.bf16.msra.mxu0 0
        %2493 = vmatpush.bf16.msra.mxu0 0
        %2494 = vmatpush.bf16.msra.mxu0 0
        %2495 = vmatpush.bf16.msra.mxu0 0
        %2496 = vmatpush.bf16.msra.mxu0 0
        %2497 = vmatpush.bf16.msra.mxu0 %v2442
        %2498 = vmatpush.bf16.msra.mxu0 %v2434
        %2499 = vmatmul.bf16.gmra.mxu0 %v2468
        %v2500 = vpop.f32.mrf.mxu0
        %v2501 = vadd.f32 0.0, %v2500
        %v2502 = vpop.f32.mrf.mxu0
        %v2503 = vadd.f32 0.0, %v2502
        %2504 = vmatmul.bf16.gmra.mxu0 %v2471
        %v2505 = vpop.f32.mrf.mxu0
        %v2506 = vadd.f32 0.0, %v2505
        %v2507 = vpop.f32.mrf.mxu0
        %v2508 = vadd.f32 0.0, %v2507
        %2509 = vmatmul.bf16.gmra.mxu0 %v2474
        %v2510 = vpop.f32.mrf.mxu0
        %v2511 = vadd.f32 0.0, %v2510
        %v2512 = vpop.f32.mrf.mxu0
        %v2513 = vadd.f32 0.0, %v2512
        %2514 = vmatmul.bf16.gmra.mxu0 %v2477
        %v2515 = vpop.f32.mrf.mxu0
        %v2516 = vadd.f32 0.0, %v2515
        %v2517 = vpop.f32.mrf.mxu0
        %v2518 = vadd.f32 0.0, %v2517
        %2519 = vmatmul.bf16.gmra.mxu0 %v2480
        %v2520 = vpop.f32.mrf.mxu0
        %v2521 = vadd.f32 0.0, %v2520
        %v2522 = vpop.f32.mrf.mxu0
        %v2523 = vadd.f32 0.0, %v2522
        %2524 = vmatmul.bf16.gmra.mxu0 %v2483
        %v2525 = vpop.f32.mrf.mxu0
        %v2526 = vadd.f32 0.0, %v2525
        %v2527 = vpop.f32.mrf.mxu0
        %v2528 = vadd.f32 0.0, %v2527
        %2529 = vmatmul.bf16.gmra.mxu0 %v2486
        %v2530 = vpop.f32.mrf.mxu0
        %v2531 = vadd.f32 0.0, %v2530
        %v2532 = vpop.f32.mrf.mxu0
        %v2533 = vadd.f32 0.0, %v2532
        %2534 = vmatmul.bf16.gmra.mxu0 %v2489
        %v2535 = vpop.f32.mrf.mxu0
        %v2536 = vadd.f32 0.0, %v2535
        %v2537 = vpop.f32.mrf.mxu0
        %v2538 = vadd.f32 0.0, %v2537
        %2539 = vdwg.mxu0
        %2540 = vmatpush.bf16.msra.mxu0 0
        %2541 = vmatpush.bf16.msra.mxu0 0
        %2542 = vmatpush.bf16.msra.mxu0 0
        %2543 = vmatpush.bf16.msra.mxu0 0
        %2544 = vmatpush.bf16.msra.mxu0 0
        %2545 = vmatpush.bf16.msra.mxu0 0
        %2546 = vmatpush.bf16.msra.mxu0 %v2443
        %2547 = vmatpush.bf16.msra.mxu0 %v2435
        %2548 = vmatmul.bf16.gmra.mxu0 %v2468
        %v2549 = vpop.f32.mrf.mxu0
        %v2550 = vadd.f32 0.0, %v2549
        %v2551 = vpop.f32.mrf.mxu0
        %v2552 = vadd.f32 0.0, %v2551
        %2553 = vmatmul.bf16.gmra.mxu0 %v2471
        %v2554 = vpop.f32.mrf.mxu0
        %v2555 = vadd.f32 0.0, %v2554
        %v2556 = vpop.f32.mrf.mxu0
        %v2557 = vadd.f32 0.0, %v2556
        %2558 = vmatmul.bf16.gmra.mxu0 %v2474
        %v2559 = vpop.f32.mrf.mxu0
        %v2560 = vadd.f32 0.0, %v2559
        %v2561 = vpop.f32.mrf.mxu0
        %v2562 = vadd.f32 0.0, %v2561
        %2563 = vmatmul.bf16.gmra.mxu0 %v2477
        %v2564 = vpop.f32.mrf.mxu0
        %v2565 = vadd.f32 0.0, %v2564
        %v2566 = vpop.f32.mrf.mxu0
        %v2567 = vadd.f32 0.0, %v2566
        %2568 = vmatmul.bf16.gmra.mxu0 %v2480
        %v2569 = vpop.f32.mrf.mxu0
        %v2570 = vadd.f32 0.0, %v2569
        %v2571 = vpop.f32.mrf.mxu0
        %v2572 = vadd.f32 0.0, %v2571
        %2573 = vmatmul.bf16.gmra.mxu0 %v2483
        %v2574 = vpop.f32.mrf.mxu0
        %v2575 = vadd.f32 0.0, %v2574
        %v2576 = vpop.f32.mrf.mxu0
        %v2577 = vadd.f32 0.0, %v2576
        %2578 = vmatmul.bf16.gmra.mxu0 %v2486
        %v2579 = vpop.f32.mrf.mxu0
        %v2580 = vadd.f32 0.0, %v2579
        %v2581 = vpop.f32.mrf.mxu0
        %v2582 = vadd.f32 0.0, %v2581
        %2583 = vmatmul.bf16.gmra.mxu0 %v2489
        %v2584 = vpop.f32.mrf.mxu0
        %v2585 = vadd.f32 0.0, %v2584
        %v2586 = vpop.f32.mrf.mxu0
        %v2587 = vadd.f32 0.0, %v2586
        %2588 = vdwg.mxu0
        %2589 = vmatpush.bf16.msra.mxu0 0
        %2590 = vmatpush.bf16.msra.mxu0 0
        %2591 = vmatpush.bf16.msra.mxu0 0
        %2592 = vmatpush.bf16.msra.mxu0 0
        %2593 = vmatpush.bf16.msra.mxu0 0
        %2594 = vmatpush.bf16.msra.mxu0 0
        %2595 = vmatpush.bf16.msra.mxu0 %v2444
        %2596 = vmatpush.bf16.msra.mxu0 %v2436
        %2597 = vmatmul.bf16.gmra.mxu0 %v2468
        %v2598 = vpop.f32.mrf.mxu0
        %v2599 = vadd.f32 0.0, %v2598
        %v2600 = vpop.f32.mrf.mxu0
        %v2601 = vadd.f32 0.0, %v2600
        %2602 = vmatmul.bf16.gmra.mxu0 %v2471
        %v2603 = vpop.f32.mrf.mxu0
        %v2604 = vadd.f32 0.0, %v2603
        %v2605 = vpop.f32.mrf.mxu0
        %v2606 = vadd.f32 0.0, %v2605
        %2607 = vmatmul.bf16.gmra.mxu0 %v2474
        %v2608 = vpop.f32.mrf.mxu0
        %v2609 = vadd.f32 0.0, %v2608
        %v2610 = vpop.f32.mrf.mxu0
        %v2611 = vadd.f32 0.0, %v2610
        %2612 = vmatmul.bf16.gmra.mxu0 %v2477
        %v2613 = vpop.f32.mrf.mxu0
        %v2614 = vadd.f32 0.0, %v2613
        %v2615 = vpop.f32.mrf.mxu0
        %v2616 = vadd.f32 0.0, %v2615
        %2617 = vmatmul.bf16.gmra.mxu0 %v2480
        %v2618 = vpop.f32.mrf.mxu0
        %v2619 = vadd.f32 0.0, %v2618
        %v2620 = vpop.f32.mrf.mxu0
        %v2621 = vadd.f32 0.0, %v2620
        %2622 = vmatmul.bf16.gmra.mxu0 %v2483
        %v2623 = vpop.f32.mrf.mxu0
        %v2624 = vadd.f32 0.0, %v2623
        %v2625 = vpop.f32.mrf.mxu0
        %v2626 = vadd.f32 0.0, %v2625
        %2627 = vmatmul.bf16.gmra.mxu0 %v2486
        %v2628 = vpop.f32.mrf.mxu0
        %v2629 = vadd.f32 0.0, %v2628
        %v2630 = vpop.f32.mrf.mxu0
        %v2631 = vadd.f32 0.0, %v2630
        %2632 = vmatmul.bf16.gmra.mxu0 %v2489
        %v2633 = vpop.f32.mrf.mxu0
        %v2634 = vadd.f32 0.0, %v2633
        %v2635 = vpop.f32.mrf.mxu0
        %v2636 = vadd.f32 0.0, %v2635
        %2637 = vdwg.mxu0
        %2638 = vmatpush.bf16.msra.mxu0 0
        %2639 = vmatpush.bf16.msra.mxu0 0
        %2640 = vmatpush.bf16.msra.mxu0 0
        %2641 = vmatpush.bf16.msra.mxu0 0
        %2642 = vmatpush.bf16.msra.mxu0 0
        %2643 = vmatpush.bf16.msra.mxu0 0
        %2644 = vmatpush.bf16.msra.mxu0 %v2445
        %2645 = vmatpush.bf16.msra.mxu0 %v2437
        %2646 = vmatmul.bf16.gmra.mxu0 %v2468
        %v2647 = vpop.f32.mrf.mxu0
        %v2648 = vadd.f32 0.0, %v2647
        %v2649 = vpop.f32.mrf.mxu0
        %v2650 = vadd.f32 0.0, %v2649
        %2651 = vmatmul.bf16.gmra.mxu0 %v2471
        %v2652 = vpop.f32.mrf.mxu0
        %v2653 = vadd.f32 0.0, %v2652
        %v2654 = vpop.f32.mrf.mxu0
        %v2655 = vadd.f32 0.0, %v2654
        %2656 = vmatmul.bf16.gmra.mxu0 %v2474
        %v2657 = vpop.f32.mrf.mxu0
        %v2658 = vadd.f32 0.0, %v2657
        %v2659 = vpop.f32.mrf.mxu0
        %v2660 = vadd.f32 0.0, %v2659
        %2661 = vmatmul.bf16.gmra.mxu0 %v2477
        %v2662 = vpop.f32.mrf.mxu0
        %v2663 = vadd.f32 0.0, %v2662
        %v2664 = vpop.f32.mrf.mxu0
        %v2665 = vadd.f32 0.0, %v2664
        %2666 = vmatmul.bf16.gmra.mxu0 %v2480
        %v2667 = vpop.f32.mrf.mxu0
        %v2668 = vadd.f32 0.0, %v2667
        %v2669 = vpop.f32.mrf.mxu0
        %v2670 = vadd.f32 0.0, %v2669
        %2671 = vmatmul.bf16.gmra.mxu0 %v2483
        %v2672 = vpop.f32.mrf.mxu0
        %v2673 = vadd.f32 0.0, %v2672
        %v2674 = vpop.f32.mrf.mxu0
        %v2675 = vadd.f32 0.0, %v2674
        %2676 = vmatmul.bf16.gmra.mxu0 %v2486
        %v2677 = vpop.f32.mrf.mxu0
        %v2678 = vadd.f32 0.0, %v2677
        %v2679 = vpop.f32.mrf.mxu0
        %v2680 = vadd.f32 0.0, %v2679
        %2681 = vmatmul.bf16.gmra.mxu0 %v2489
        %v2682 = vpop.f32.mrf.mxu0
        %v2683 = vadd.f32 0.0, %v2682
        %v2684 = vpop.f32.mrf.mxu0
        %v2685 = vadd.f32 0.0, %v2684
        %2686 = vdwg.mxu0
        %2687 = vmatpush.bf16.msra.mxu0 0
        %2688 = vmatpush.bf16.msra.mxu0 0
        %2689 = vmatpush.bf16.msra.mxu0 0
        %2690 = vmatpush.bf16.msra.mxu0 0
        %2691 = vmatpush.bf16.msra.mxu0 0
        %2692 = vmatpush.bf16.msra.mxu0 0
        %2693 = vmatpush.bf16.msra.mxu0 %v2446
        %2694 = vmatpush.bf16.msra.mxu0 %v2438
        %2695 = vmatmul.bf16.gmra.mxu0 %v2468
        %v2696 = vpop.f32.mrf.mxu0
        %v2697 = vadd.f32 0.0, %v2696
        %v2698 = vpop.f32.mrf.mxu0
        %v2699 = vadd.f32 0.0, %v2698
        %2700 = vmatmul.bf16.gmra.mxu0 %v2471
        %v2701 = vpop.f32.mrf.mxu0
        %v2702 = vadd.f32 0.0, %v2701
        %v2703 = vpop.f32.mrf.mxu0
        %v2704 = vadd.f32 0.0, %v2703
        %2705 = vmatmul.bf16.gmra.mxu0 %v2474
        %v2706 = vpop.f32.mrf.mxu0
        %v2707 = vadd.f32 0.0, %v2706
        %v2708 = vpop.f32.mrf.mxu0
        %v2709 = vadd.f32 0.0, %v2708
        %2710 = vmatmul.bf16.gmra.mxu0 %v2477
        %v2711 = vpop.f32.mrf.mxu0
        %v2712 = vadd.f32 0.0, %v2711
        %v2713 = vpop.f32.mrf.mxu0
        %v2714 = vadd.f32 0.0, %v2713
        %2715 = vmatmul.bf16.gmra.mxu0 %v2480
        %v2716 = vpop.f32.mrf.mxu0
        %v2717 = vadd.f32 0.0, %v2716
        %v2718 = vpop.f32.mrf.mxu0
        %v2719 = vadd.f32 0.0, %v2718
        %2720 = vmatmul.bf16.gmra.mxu0 %v2483
        %v2721 = vpop.f32.mrf.mxu0
        %v2722 = vadd.f32 0.0, %v2721
        %v2723 = vpop.f32.mrf.mxu0
        %v2724 = vadd.f32 0.0, %v2723
        %2725 = vmatmul.bf16.gmra.mxu0 %v2486
        %v2726 = vpop.f32.mrf.mxu0
        %v2727 = vadd.f32 0.0, %v2726
        %v2728 = vpop.f32.mrf.mxu0
        %v2729 = vadd.f32 0.0, %v2728
        %2730 = vmatmul.bf16.gmra.mxu0 %v2489
        %v2731 = vpop.f32.mrf.mxu0
        %v2732 = vadd.f32 0.0, %v2731
        %v2733 = vpop.f32.mrf.mxu0
        %v2734 = vadd.f32 0.0, %v2733
        %2735 = vdwg.mxu0
        %2736 = vmatpush.bf16.msra.mxu0 0
        %2737 = vmatpush.bf16.msra.mxu0 0
        %2738 = vmatpush.bf16.msra.mxu0 0
        %2739 = vmatpush.bf16.msra.mxu0 0
        %2740 = vmatpush.bf16.msra.mxu0 0
        %2741 = vmatpush.bf16.msra.mxu0 0
        %2742 = vmatpush.bf16.msra.mxu0 %v2447
        %2743 = vmatpush.bf16.msra.mxu0 %v2439
        %2744 = vmatmul.bf16.gmra.mxu0 %v2468
        %v2745 = vpop.f32.mrf.mxu0
        %v2746 = vadd.f32 0.0, %v2745
        %v2747 = vpop.f32.mrf.mxu0
        %v2748 = vadd.f32 0.0, %v2747
        %2749 = vmatmul.bf16.gmra.mxu0 %v2471
        %v2750 = vpop.f32.mrf.mxu0
        %v2751 = vadd.f32 0.0, %v2750
        %v2752 = vpop.f32.mrf.mxu0
        %v2753 = vadd.f32 0.0, %v2752
        %2754 = vmatmul.bf16.gmra.mxu0 %v2474
        %v2755 = vpop.f32.mrf.mxu0
        %v2756 = vadd.f32 0.0, %v2755
        %v2757 = vpop.f32.mrf.mxu0
        %v2758 = vadd.f32 0.0, %v2757
        %2759 = vmatmul.bf16.gmra.mxu0 %v2477
        %v2760 = vpop.f32.mrf.mxu0
        %v2761 = vadd.f32 0.0, %v2760
        %v2762 = vpop.f32.mrf.mxu0
        %v2763 = vadd.f32 0.0, %v2762
        %2764 = vmatmul.bf16.gmra.mxu0 %v2480
        %v2765 = vpop.f32.mrf.mxu0
        %v2766 = vadd.f32 0.0, %v2765
        %v2767 = vpop.f32.mrf.mxu0
        %v2768 = vadd.f32 0.0, %v2767
        %2769 = vmatmul.bf16.gmra.mxu0 %v2483
        %v2770 = vpop.f32.mrf.mxu0
        %v2771 = vadd.f32 0.0, %v2770
        %v2772 = vpop.f32.mrf.mxu0
        %v2773 = vadd.f32 0.0, %v2772
        %2774 = vmatmul.bf16.gmra.mxu0 %v2486
        %v2775 = vpop.f32.mrf.mxu0
        %v2776 = vadd.f32 0.0, %v2775
        %v2777 = vpop.f32.mrf.mxu0
        %v2778 = vadd.f32 0.0, %v2777
        %2779 = vmatmul.bf16.gmra.mxu0 %v2489
        %v2780 = vpop.f32.mrf.mxu0
        %v2781 = vadd.f32 0.0, %v2780
        %v2782 = vpop.f32.mrf.mxu0
        %v2783 = vadd.f32 0.0, %v2782
        %2784 = vdwg.mxu0
        %2785 = vmatpush.bf16.msra.mxu0 0
        %2786 = vmatpush.bf16.msra.mxu0 0
        %2787 = vmatpush.bf16.msra.mxu0 0
        %2788 = vmatpush.bf16.msra.mxu0 0
        %2789 = vmatpush.bf16.msra.mxu0 0
        %2790 = vmatpush.bf16.msra.mxu0 0
        %2791 = vmatpush.bf16.msra.mxu0 %v2448
        %2792 = vmatpush.bf16.msra.mxu0 %v2440
        %2793 = vmatmul.bf16.gmra.mxu0 %v2468
        %v2794 = vpop.f32.mrf.mxu0
        %v2795 = vadd.f32 0.0, %v2794
        %v2796 = vpop.f32.mrf.mxu0
        %v2797 = vadd.f32 0.0, %v2796
        %2798 = vmatmul.bf16.gmra.mxu0 %v2471
        %v2799 = vpop.f32.mrf.mxu0
        %v2800 = vadd.f32 0.0, %v2799
        %v2801 = vpop.f32.mrf.mxu0
        %v2802 = vadd.f32 0.0, %v2801
        %2803 = vmatmul.bf16.gmra.mxu0 %v2474
        %v2804 = vpop.f32.mrf.mxu0
        %v2805 = vadd.f32 0.0, %v2804
        %v2806 = vpop.f32.mrf.mxu0
        %v2807 = vadd.f32 0.0, %v2806
        %2808 = vmatmul.bf16.gmra.mxu0 %v2477
        %v2809 = vpop.f32.mrf.mxu0
        %v2810 = vadd.f32 0.0, %v2809
        %v2811 = vpop.f32.mrf.mxu0
        %v2812 = vadd.f32 0.0, %v2811
        %2813 = vmatmul.bf16.gmra.mxu0 %v2480
        %v2814 = vpop.f32.mrf.mxu0
        %v2815 = vadd.f32 0.0, %v2814
        %v2816 = vpop.f32.mrf.mxu0
        %v2817 = vadd.f32 0.0, %v2816
        %2818 = vmatmul.bf16.gmra.mxu0 %v2483
        %v2819 = vpop.f32.mrf.mxu0
        %v2820 = vadd.f32 0.0, %v2819
        %v2821 = vpop.f32.mrf.mxu0
        %v2822 = vadd.f32 0.0, %v2821
        %2823 = vmatmul.bf16.gmra.mxu0 %v2486
        %v2824 = vpop.f32.mrf.mxu0
        %v2825 = vadd.f32 0.0, %v2824
        %v2826 = vpop.f32.mrf.mxu0
        %v2827 = vadd.f32 0.0, %v2826
        %2828 = vmatmul.bf16.gmra.mxu0 %v2489
        %v2829 = vpop.f32.mrf.mxu0
        %v2830 = vadd.f32 0.0, %v2829
        %v2831 = vpop.f32.mrf.mxu0
        %v2832 = vadd.f32 0.0, %v2831
        %2833 = vdwg.mxu0
        %2834 = vmatpush.bf16.msra.mxu0 0
        %2835 = vmatpush.bf16.msra.mxu0 0
        %2836 = vmatpush.bf16.msra.mxu0 0
        %2837 = vmatpush.bf16.msra.mxu0 0
        %2838 = vmatpush.bf16.msra.mxu0 0
        %2839 = vmatpush.bf16.msra.mxu0 0
        %2840 = vmatpush.bf16.msra.mxu0 %v2449
        %2841 = vmatpush.bf16.msra.mxu0 %v2441
        %2842 = vmatmul.bf16.gmra.mxu0 %v2468
        %v2843 = vpop.f32.mrf.mxu0
        %v2844 = vadd.f32 0.0, %v2843
        %v2845 = vpop.f32.mrf.mxu0
        %v2846 = vadd.f32 0.0, %v2845
        %2847 = vmatmul.bf16.gmra.mxu0 %v2471
        %v2848 = vpop.f32.mrf.mxu0
        %v2849 = vadd.f32 0.0, %v2848
        %v2850 = vpop.f32.mrf.mxu0
        %v2851 = vadd.f32 0.0, %v2850
        %2852 = vmatmul.bf16.gmra.mxu0 %v2474
        %v2853 = vpop.f32.mrf.mxu0
        %v2854 = vadd.f32 0.0, %v2853
        %v2855 = vpop.f32.mrf.mxu0
        %v2856 = vadd.f32 0.0, %v2855
        %2857 = vmatmul.bf16.gmra.mxu0 %v2477
        %v2858 = vpop.f32.mrf.mxu0
        %v2859 = vadd.f32 0.0, %v2858
        %v2860 = vpop.f32.mrf.mxu0
        %v2861 = vadd.f32 0.0, %v2860
        %2862 = vmatmul.bf16.gmra.mxu0 %v2480
        %v2863 = vpop.f32.mrf.mxu0
        %v2864 = vadd.f32 0.0, %v2863
        %v2865 = vpop.f32.mrf.mxu0
        %v2866 = vadd.f32 0.0, %v2865
        %2867 = vmatmul.bf16.gmra.mxu0 %v2483
        %v2868 = vpop.f32.mrf.mxu0
        %v2869 = vadd.f32 0.0, %v2868
        %v2870 = vpop.f32.mrf.mxu0
        %v2871 = vadd.f32 0.0, %v2870
        %2872 = vmatmul.bf16.gmra.mxu0 %v2486
        %v2873 = vpop.f32.mrf.mxu0
        %v2874 = vadd.f32 0.0, %v2873
        %v2875 = vpop.f32.mrf.mxu0
        %v2876 = vadd.f32 0.0, %v2875
        %2877 = vmatmul.bf16.gmra.mxu0 %v2489
        %v2878 = vpop.f32.mrf.mxu0
        %v2879 = vadd.f32 0.0, %v2878
        %v2880 = vpop.f32.mrf.mxu0
        %v2881 = vadd.f32 0.0, %v2880
        %2882 = vdwg.mxu0
        %v2899 = vunpack.c.l.b16 %v2290
        %v2900 = vunpack.c.l.b16 %v2291
        %v2901 = vunpack.c.l.b16 %v2292
        %v2902 = vunpack.c.l.b16 %v2293
        %v2903 = vunpack.c.l.b16 %v2294
        %v2904 = vunpack.c.l.b16 %v2295
        %v2905 = vunpack.c.l.b16 %v2296
        %v2906 = vunpack.c.l.b16 %v2297
        %v2907 = vunpack.c.l.b16 %v2298
        %v2908 = vunpack.c.l.b16 %v2299
        %v2909 = vunpack.c.l.b16 %v2300
        %v2910 = vunpack.c.l.b16 %v2301
        %v2911 = vunpack.c.l.b16 %v2302
        %v2912 = vunpack.c.l.b16 %v2303
        %v2913 = vunpack.c.l.b16 %v2304
        %v2914 = vunpack.c.l.b16 %v2305
        %v2915 = vpack.c.b16 %v2900, %v2899
        %v2916 = vpack.c.b16 %v2902, %v2901
        %v2917 = vpack.c.b16 %v2904, %v2903
        %v2918 = vpack.c.b16 %v2906, %v2905
        %v2919 = vpack.c.b16 %v2908, %v2907
        %v2920 = vpack.c.b16 %v2910, %v2909
        %v2921 = vpack.c.b16 %v2912, %v2911
        %v2922 = vpack.c.b16 %v2914, %v2913
        %vm2923 = vcmask 130048
        %v2925 = vsel %vm2923, %v2915, 0
        %v2928 = vsel %vm2923, %v2916, 0
        %v2931 = vsel %vm2923, %v2917, 0
        %v2934 = vsel %vm2923, %v2918, 0
        %v2937 = vsel %vm2923, %v2919, 0
        %v2940 = vsel %vm2923, %v2920, 0
        %v2943 = vsel %vm2923, %v2921, 0
        %v2946 = vsel %vm2923, %v2922, 0
        %2948 = vmatpush.bf16.msra.mxu0 0
        %2949 = vmatpush.bf16.msra.mxu0 0
        %2950 = vmatpush.bf16.msra.mxu0 0
        %2951 = vmatpush.bf16.msra.mxu0 0
        %2952 = vmatpush.bf16.msra.mxu0 0
        %2953 = vmatpush.bf16.msra.mxu0 0
        %2954 = vmatpush.bf16.msra.mxu0 0
        %2955 = vmatpush.bf16.msra.mxu0 %v2306
        %2956 = vmatmul.bf16.gmra.mxu0 %v2925
        %v2957 = vpop.f32.mrf.mxu0
        %v2958 = vadd.f32 %v2501, %v2957
        %v2959 = vpop.f32.mrf.mxu0
        %v2960 = vadd.f32 %v2503, %v2959
        %2961 = vmatmul.bf16.gmra.mxu0 %v2928
        %v2962 = vpop.f32.mrf.mxu0
        %v2963 = vadd.f32 %v2506, %v2962
        %v2964 = vpop.f32.mrf.mxu0
        %v2965 = vadd.f32 %v2508, %v2964
        %2966 = vmatmul.bf16.gmra.mxu0 %v2931
        %v2967 = vpop.f32.mrf.mxu0
        %v2968 = vadd.f32 %v2511, %v2967
        %v2969 = vpop.f32.mrf.mxu0
        %v2970 = vadd.f32 %v2513, %v2969
        %2971 = vmatmul.bf16.gmra.mxu0 %v2934
        %v2972 = vpop.f32.mrf.mxu0
        %v2973 = vadd.f32 %v2516, %v2972
        %v2974 = vpop.f32.mrf.mxu0
        %v2975 = vadd.f32 %v2518, %v2974
        %2976 = vmatmul.bf16.gmra.mxu0 %v2937
        %v2977 = vpop.f32.mrf.mxu0
        %v2978 = vadd.f32 %v2521, %v2977
        %v2979 = vpop.f32.mrf.mxu0
        %v2980 = vadd.f32 %v2523, %v2979
        %2981 = vmatmul.bf16.gmra.mxu0 %v2940
        %v2982 = vpop.f32.mrf.mxu0
        %v2983 = vadd.f32 %v2526, %v2982
        %v2984 = vpop.f32.mrf.mxu0
        %v2985 = vadd.f32 %v2528, %v2984
        %2986 = vmatmul.bf16.gmra.mxu0 %v2943
        %v2987 = vpop.f32.mrf.mxu0
        %v2988 = vadd.f32 %v2531, %v2987
        %v2989 = vpop.f32.mrf.mxu0
        %v2990 = vadd.f32 %v2533, %v2989
        %2991 = vmatmul.bf16.gmra.mxu0 %v2946
        %v2992 = vpop.f32.mrf.mxu0
        %v2993 = vadd.f32 %v2536, %v2992
        %v2994 = vpop.f32.mrf.mxu0
        %v2995 = vadd.f32 %v2538, %v2994
        %2996 = vdwg.mxu0
        %2997 = vmatpush.bf16.msra.mxu0 0
        %2998 = vmatpush.bf16.msra.mxu0 0
        %2999 = vmatpush.bf16.msra.mxu0 0
        %3000 = vmatpush.bf16.msra.mxu0 0
        %3001 = vmatpush.bf16.msra.mxu0 0
        %3002 = vmatpush.bf16.msra.mxu0 0
        %3003 = vmatpush.bf16.msra.mxu0 0
        %3004 = vmatpush.bf16.msra.mxu0 %v2307
        %3005 = vmatmul.bf16.gmra.mxu0 %v2925
        %v3006 = vpop.f32.mrf.mxu0
        %v3007 = vadd.f32 %v2550, %v3006
        %v3008 = vpop.f32.mrf.mxu0
        %v3009 = vadd.f32 %v2552, %v3008
        %3010 = vmatmul.bf16.gmra.mxu0 %v2928
        %v3011 = vpop.f32.mrf.mxu0
        %v3012 = vadd.f32 %v2555, %v3011
        %v3013 = vpop.f32.mrf.mxu0
        %v3014 = vadd.f32 %v2557, %v3013
        %3015 = vmatmul.bf16.gmra.mxu0 %v2931
        %v3016 = vpop.f32.mrf.mxu0
        %v3017 = vadd.f32 %v2560, %v3016
        %v3018 = vpop.f32.mrf.mxu0
        %v3019 = vadd.f32 %v2562, %v3018
        %3020 = vmatmul.bf16.gmra.mxu0 %v2934
        %v3021 = vpop.f32.mrf.mxu0
        %v3022 = vadd.f32 %v2565, %v3021
        %v3023 = vpop.f32.mrf.mxu0
        %v3024 = vadd.f32 %v2567, %v3023
        %3025 = vmatmul.bf16.gmra.mxu0 %v2937
        %v3026 = vpop.f32.mrf.mxu0
        %v3027 = vadd.f32 %v2570, %v3026
        %v3028 = vpop.f32.mrf.mxu0
        %v3029 = vadd.f32 %v2572, %v3028
        %3030 = vmatmul.bf16.gmra.mxu0 %v2940
        %v3031 = vpop.f32.mrf.mxu0
        %v3032 = vadd.f32 %v2575, %v3031
        %v3033 = vpop.f32.mrf.mxu0
        %v3034 = vadd.f32 %v2577, %v3033
        %3035 = vmatmul.bf16.gmra.mxu0 %v2943
        %v3036 = vpop.f32.mrf.mxu0
        %v3037 = vadd.f32 %v2580, %v3036
        %v3038 = vpop.f32.mrf.mxu0
        %v3039 = vadd.f32 %v2582, %v3038
        %3040 = vmatmul.bf16.gmra.mxu0 %v2946
        %v3041 = vpop.f32.mrf.mxu0
        %v3042 = vadd.f32 %v2585, %v3041
        %v3043 = vpop.f32.mrf.mxu0
        %v3044 = vadd.f32 %v2587, %v3043
        %3045 = vdwg.mxu0
        %3046 = vmatpush.bf16.msra.mxu0 0
        %3047 = vmatpush.bf16.msra.mxu0 0
        %3048 = vmatpush.bf16.msra.mxu0 0
        %3049 = vmatpush.bf16.msra.mxu0 0
        %3050 = vmatpush.bf16.msra.mxu0 0
        %3051 = vmatpush.bf16.msra.mxu0 0
        %3052 = vmatpush.bf16.msra.mxu0 0
        %3053 = vmatpush.bf16.msra.mxu0 %v2308
        %3054 = vmatmul.bf16.gmra.mxu0 %v2925
        %v3055 = vpop.f32.mrf.mxu0
        %v3056 = vadd.f32 %v2599, %v3055
        %v3057 = vpop.f32.mrf.mxu0
        %v3058 = vadd.f32 %v2601, %v3057
        %3059 = vmatmul.bf16.gmra.mxu0 %v2928
        %v3060 = vpop.f32.mrf.mxu0
        %v3061 = vadd.f32 %v2604, %v3060
        %v3062 = vpop.f32.mrf.mxu0
        %v3063 = vadd.f32 %v2606, %v3062
        %3064 = vmatmul.bf16.gmra.mxu0 %v2931
        %v3065 = vpop.f32.mrf.mxu0
        %v3066 = vadd.f32 %v2609, %v3065
        %v3067 = vpop.f32.mrf.mxu0
        %v3068 = vadd.f32 %v2611, %v3067
        %3069 = vmatmul.bf16.gmra.mxu0 %v2934
        %v3070 = vpop.f32.mrf.mxu0
        %v3071 = vadd.f32 %v2614, %v3070
        %v3072 = vpop.f32.mrf.mxu0
        %v3073 = vadd.f32 %v2616, %v3072
        %3074 = vmatmul.bf16.gmra.mxu0 %v2937
        %v3075 = vpop.f32.mrf.mxu0
        %v3076 = vadd.f32 %v2619, %v3075
        %v3077 = vpop.f32.mrf.mxu0
        %v3078 = vadd.f32 %v2621, %v3077
        %3079 = vmatmul.bf16.gmra.mxu0 %v2940
        %v3080 = vpop.f32.mrf.mxu0
        %v3081 = vadd.f32 %v2624, %v3080
        %v3082 = vpop.f32.mrf.mxu0
        %v3083 = vadd.f32 %v2626, %v3082
        %3084 = vmatmul.bf16.gmra.mxu0 %v2943
        %v3085 = vpop.f32.mrf.mxu0
        %v3086 = vadd.f32 %v2629, %v3085
        %v3087 = vpop.f32.mrf.mxu0
        %v3088 = vadd.f32 %v2631, %v3087
        %3089 = vmatmul.bf16.gmra.mxu0 %v2946
        %v3090 = vpop.f32.mrf.mxu0
        %v3091 = vadd.f32 %v2634, %v3090
        %v3092 = vpop.f32.mrf.mxu0
        %v3093 = vadd.f32 %v2636, %v3092
        %3094 = vdwg.mxu0
        %3095 = vmatpush.bf16.msra.mxu0 0
        %3096 = vmatpush.bf16.msra.mxu0 0
        %3097 = vmatpush.bf16.msra.mxu0 0
        %3098 = vmatpush.bf16.msra.mxu0 0
        %3099 = vmatpush.bf16.msra.mxu0 0
        %3100 = vmatpush.bf16.msra.mxu0 0
        %3101 = vmatpush.bf16.msra.mxu0 0
        %3102 = vmatpush.bf16.msra.mxu0 %v2309
        %3103 = vmatmul.bf16.gmra.mxu0 %v2925
        %v3104 = vpop.f32.mrf.mxu0
        %v3105 = vadd.f32 %v2648, %v3104
        %v3106 = vpop.f32.mrf.mxu0
        %v3107 = vadd.f32 %v2650, %v3106
        %3108 = vmatmul.bf16.gmra.mxu0 %v2928
        %v3109 = vpop.f32.mrf.mxu0
        %v3110 = vadd.f32 %v2653, %v3109
        %v3111 = vpop.f32.mrf.mxu0
        %v3112 = vadd.f32 %v2655, %v3111
        %3113 = vmatmul.bf16.gmra.mxu0 %v2931
        %v3114 = vpop.f32.mrf.mxu0
        %v3115 = vadd.f32 %v2658, %v3114
        %v3116 = vpop.f32.mrf.mxu0
        %v3117 = vadd.f32 %v2660, %v3116
        %3118 = vmatmul.bf16.gmra.mxu0 %v2934
        %v3119 = vpop.f32.mrf.mxu0
        %v3120 = vadd.f32 %v2663, %v3119
        %v3121 = vpop.f32.mrf.mxu0
        %v3122 = vadd.f32 %v2665, %v3121
        %3123 = vmatmul.bf16.gmra.mxu0 %v2937
        %v3124 = vpop.f32.mrf.mxu0
        %v3125 = vadd.f32 %v2668, %v3124
        %v3126 = vpop.f32.mrf.mxu0
        %v3127 = vadd.f32 %v2670, %v3126
        %3128 = vmatmul.bf16.gmra.mxu0 %v2940
        %v3129 = vpop.f32.mrf.mxu0
        %v3130 = vadd.f32 %v2673, %v3129
        %v3131 = vpop.f32.mrf.mxu0
        %v3132 = vadd.f32 %v2675, %v3131
        %3133 = vmatmul.bf16.gmra.mxu0 %v2943
        %v3134 = vpop.f32.mrf.mxu0
        %v3135 = vadd.f32 %v2678, %v3134
        %v3136 = vpop.f32.mrf.mxu0
        %v3137 = vadd.f32 %v2680, %v3136
        %3138 = vmatmul.bf16.gmra.mxu0 %v2946
        %v3139 = vpop.f32.mrf.mxu0
        %v3140 = vadd.f32 %v2683, %v3139
        %v3141 = vpop.f32.mrf.mxu0
        %v3142 = vadd.f32 %v2685, %v3141
        %3143 = vdwg.mxu0
        %3144 = vmatpush.bf16.msra.mxu0 0
        %3145 = vmatpush.bf16.msra.mxu0 0
        %3146 = vmatpush.bf16.msra.mxu0 0
        %3147 = vmatpush.bf16.msra.mxu0 0
        %3148 = vmatpush.bf16.msra.mxu0 0
        %3149 = vmatpush.bf16.msra.mxu0 0
        %3150 = vmatpush.bf16.msra.mxu0 0
        %3151 = vmatpush.bf16.msra.mxu0 %v2310
        %3152 = vmatmul.bf16.gmra.mxu0 %v2925
        %v3153 = vpop.f32.mrf.mxu0
        %v3154 = vadd.f32 %v2697, %v3153
        %v3155 = vpop.f32.mrf.mxu0
        %v3156 = vadd.f32 %v2699, %v3155
        %3157 = vmatmul.bf16.gmra.mxu0 %v2928
        %v3158 = vpop.f32.mrf.mxu0
        %v3159 = vadd.f32 %v2702, %v3158
        %v3160 = vpop.f32.mrf.mxu0
        %v3161 = vadd.f32 %v2704, %v3160
        %3162 = vmatmul.bf16.gmra.mxu0 %v2931
        %v3163 = vpop.f32.mrf.mxu0
        %v3164 = vadd.f32 %v2707, %v3163
        %v3165 = vpop.f32.mrf.mxu0
        %v3166 = vadd.f32 %v2709, %v3165
        %3167 = vmatmul.bf16.gmra.mxu0 %v2934
        %v3168 = vpop.f32.mrf.mxu0
        %v3169 = vadd.f32 %v2712, %v3168
        %v3170 = vpop.f32.mrf.mxu0
        %v3171 = vadd.f32 %v2714, %v3170
        %3172 = vmatmul.bf16.gmra.mxu0 %v2937
        %v3173 = vpop.f32.mrf.mxu0
        %v3174 = vadd.f32 %v2717, %v3173
        %v3175 = vpop.f32.mrf.mxu0
        %v3176 = vadd.f32 %v2719, %v3175
        %3177 = vmatmul.bf16.gmra.mxu0 %v2940
        %v3178 = vpop.f32.mrf.mxu0
        %v3179 = vadd.f32 %v2722, %v3178
        %v3180 = vpop.f32.mrf.mxu0
        %v3181 = vadd.f32 %v2724, %v3180
        %3182 = vmatmul.bf16.gmra.mxu0 %v2943
        %v3183 = vpop.f32.mrf.mxu0
        %v3184 = vadd.f32 %v2727, %v3183
        %v3185 = vpop.f32.mrf.mxu0
        %v3186 = vadd.f32 %v2729, %v3185
        %3187 = vmatmul.bf16.gmra.mxu0 %v2946
        %v3188 = vpop.f32.mrf.mxu0
        %v3189 = vadd.f32 %v2732, %v3188
        %v3190 = vpop.f32.mrf.mxu0
        %v3191 = vadd.f32 %v2734, %v3190
        %3192 = vdwg.mxu0
        %3193 = vmatpush.bf16.msra.mxu0 0
        %3194 = vmatpush.bf16.msra.mxu0 0
        %3195 = vmatpush.bf16.msra.mxu0 0
        %3196 = vmatpush.bf16.msra.mxu0 0
        %3197 = vmatpush.bf16.msra.mxu0 0
        %3198 = vmatpush.bf16.msra.mxu0 0
        %3199 = vmatpush.bf16.msra.mxu0 0
        %3200 = vmatpush.bf16.msra.mxu0 %v2311
        %3201 = vmatmul.bf16.gmra.mxu0 %v2925
        %v3202 = vpop.f32.mrf.mxu0
        %v3203 = vadd.f32 %v2746, %v3202
        %v3204 = vpop.f32.mrf.mxu0
        %v3205 = vadd.f32 %v2748, %v3204
        %3206 = vmatmul.bf16.gmra.mxu0 %v2928
        %v3207 = vpop.f32.mrf.mxu0
        %v3208 = vadd.f32 %v2751, %v3207
        %v3209 = vpop.f32.mrf.mxu0
        %v3210 = vadd.f32 %v2753, %v3209
        %3211 = vmatmul.bf16.gmra.mxu0 %v2931
        %v3212 = vpop.f32.mrf.mxu0
        %v3213 = vadd.f32 %v2756, %v3212
        %v3214 = vpop.f32.mrf.mxu0
        %v3215 = vadd.f32 %v2758, %v3214
        %3216 = vmatmul.bf16.gmra.mxu0 %v2934
        %v3217 = vpop.f32.mrf.mxu0
        %v3218 = vadd.f32 %v2761, %v3217
        %v3219 = vpop.f32.mrf.mxu0
        %v3220 = vadd.f32 %v2763, %v3219
        %3221 = vmatmul.bf16.gmra.mxu0 %v2937
        %v3222 = vpop.f32.mrf.mxu0
        %v3223 = vadd.f32 %v2766, %v3222
        %v3224 = vpop.f32.mrf.mxu0
        %v3225 = vadd.f32 %v2768, %v3224
        %3226 = vmatmul.bf16.gmra.mxu0 %v2940
        %v3227 = vpop.f32.mrf.mxu0
        %v3228 = vadd.f32 %v2771, %v3227
        %v3229 = vpop.f32.mrf.mxu0
        %v3230 = vadd.f32 %v2773, %v3229
        %3231 = vmatmul.bf16.gmra.mxu0 %v2943
        %v3232 = vpop.f32.mrf.mxu0
        %v3233 = vadd.f32 %v2776, %v3232
        %v3234 = vpop.f32.mrf.mxu0
        %v3235 = vadd.f32 %v2778, %v3234
        %3236 = vmatmul.bf16.gmra.mxu0 %v2946
        %v3237 = vpop.f32.mrf.mxu0
        %v3238 = vadd.f32 %v2781, %v3237
        %v3239 = vpop.f32.mrf.mxu0
        %v3240 = vadd.f32 %v2783, %v3239
        %3241 = vdwg.mxu0
        %3242 = vmatpush.bf16.msra.mxu0 0
        %3243 = vmatpush.bf16.msra.mxu0 0
        %3244 = vmatpush.bf16.msra.mxu0 0
        %3245 = vmatpush.bf16.msra.mxu0 0
        %3246 = vmatpush.bf16.msra.mxu0 0
        %3247 = vmatpush.bf16.msra.mxu0 0
        %3248 = vmatpush.bf16.msra.mxu0 0
        %3249 = vmatpush.bf16.msra.mxu0 %v2312
        %3250 = vmatmul.bf16.gmra.mxu0 %v2925
        %v3251 = vpop.f32.mrf.mxu0
        %v3252 = vadd.f32 %v2795, %v3251
        %v3253 = vpop.f32.mrf.mxu0
        %v3254 = vadd.f32 %v2797, %v3253
        %3255 = vmatmul.bf16.gmra.mxu0 %v2928
        %v3256 = vpop.f32.mrf.mxu0
        %v3257 = vadd.f32 %v2800, %v3256
        %v3258 = vpop.f32.mrf.mxu0
        %v3259 = vadd.f32 %v2802, %v3258
        %3260 = vmatmul.bf16.gmra.mxu0 %v2931
        %v3261 = vpop.f32.mrf.mxu0
        %v3262 = vadd.f32 %v2805, %v3261
        %v3263 = vpop.f32.mrf.mxu0
        %v3264 = vadd.f32 %v2807, %v3263
        %3265 = vmatmul.bf16.gmra.mxu0 %v2934
        %v3266 = vpop.f32.mrf.mxu0
        %v3267 = vadd.f32 %v2810, %v3266
        %v3268 = vpop.f32.mrf.mxu0
        %v3269 = vadd.f32 %v2812, %v3268
        %3270 = vmatmul.bf16.gmra.mxu0 %v2937
        %v3271 = vpop.f32.mrf.mxu0
        %v3272 = vadd.f32 %v2815, %v3271
        %v3273 = vpop.f32.mrf.mxu0
        %v3274 = vadd.f32 %v2817, %v3273
        %3275 = vmatmul.bf16.gmra.mxu0 %v2940
        %v3276 = vpop.f32.mrf.mxu0
        %v3277 = vadd.f32 %v2820, %v3276
        %v3278 = vpop.f32.mrf.mxu0
        %v3279 = vadd.f32 %v2822, %v3278
        %3280 = vmatmul.bf16.gmra.mxu0 %v2943
        %v3281 = vpop.f32.mrf.mxu0
        %v3282 = vadd.f32 %v2825, %v3281
        %v3283 = vpop.f32.mrf.mxu0
        %v3284 = vadd.f32 %v2827, %v3283
        %3285 = vmatmul.bf16.gmra.mxu0 %v2946
        %v3286 = vpop.f32.mrf.mxu0
        %v3287 = vadd.f32 %v2830, %v3286
        %v3288 = vpop.f32.mrf.mxu0
        %v3289 = vadd.f32 %v2832, %v3288
        %3290 = vdwg.mxu0
        %3291 = vmatpush.bf16.msra.mxu0 0
        %3292 = vmatpush.bf16.msra.mxu0 0
        %3293 = vmatpush.bf16.msra.mxu0 0
        %3294 = vmatpush.bf16.msra.mxu0 0
        %3295 = vmatpush.bf16.msra.mxu0 0
        %3296 = vmatpush.bf16.msra.mxu0 0
        %3297 = vmatpush.bf16.msra.mxu0 0
        %3298 = vmatpush.bf16.msra.mxu0 %v2313
        %3299 = vmatmul.bf16.gmra.mxu0 %v2925
        %v3300 = vpop.f32.mrf.mxu0
        %v3301 = vadd.f32 %v2844, %v3300
        %v3302 = vpop.f32.mrf.mxu0
        %v3303 = vadd.f32 %v2846, %v3302
        %3304 = vmatmul.bf16.gmra.mxu0 %v2928
        %v3305 = vpop.f32.mrf.mxu0
        %v3306 = vadd.f32 %v2849, %v3305
        %v3307 = vpop.f32.mrf.mxu0
        %v3308 = vadd.f32 %v2851, %v3307
        %3309 = vmatmul.bf16.gmra.mxu0 %v2931
        %v3310 = vpop.f32.mrf.mxu0
        %v3311 = vadd.f32 %v2854, %v3310
        %v3312 = vpop.f32.mrf.mxu0
        %v3313 = vadd.f32 %v2856, %v3312
        %3314 = vmatmul.bf16.gmra.mxu0 %v2934
        %v3315 = vpop.f32.mrf.mxu0
        %v3316 = vadd.f32 %v2859, %v3315
        %v3317 = vpop.f32.mrf.mxu0
        %v3318 = vadd.f32 %v2861, %v3317
        %3319 = vmatmul.bf16.gmra.mxu0 %v2937
        %v3320 = vpop.f32.mrf.mxu0
        %v3321 = vadd.f32 %v2864, %v3320
        %v3322 = vpop.f32.mrf.mxu0
        %v3323 = vadd.f32 %v2866, %v3322
        %3324 = vmatmul.bf16.gmra.mxu0 %v2940
        %v3325 = vpop.f32.mrf.mxu0
        %v3326 = vadd.f32 %v2869, %v3325
        %v3327 = vpop.f32.mrf.mxu0
        %v3328 = vadd.f32 %v2871, %v3327
        %3329 = vmatmul.bf16.gmra.mxu0 %v2943
        %v3330 = vpop.f32.mrf.mxu0
        %v3331 = vadd.f32 %v2874, %v3330
        %v3332 = vpop.f32.mrf.mxu0
        %v3333 = vadd.f32 %v2876, %v3332
        %3334 = vmatmul.bf16.gmra.mxu0 %v2946
        %v3335 = vpop.f32.mrf.mxu0
        %v3336 = vadd.f32 %v2879, %v3335
        %v3337 = vpop.f32.mrf.mxu0
        %v3338 = vadd.f32 %v2881, %v3337
        %3339 = vdwg.mxu0
        %v3340 = vmax.f32 %v2958, 0.0
        %v3341 = vmax.f32 %v3007, 0.0
        %v3342 = vmax.f32 %v3056, 0.0
        %v3343 = vmax.f32 %v3105, 0.0
        %v3344 = vmax.f32 %v3154, 0.0
        %v3345 = vmax.f32 %v3203, 0.0
        %v3346 = vmax.f32 %v3252, 0.0
        %v3347 = vmax.f32 %v3301, 0.0
        %v3348 = vmax.f32 %v2960, 0.0
        %v3349 = vmax.f32 %v3009, 0.0
        %v3350 = vmax.f32 %v3058, 0.0
        %v3351 = vmax.f32 %v3107, 0.0
        %v3352 = vmax.f32 %v3156, 0.0
        %v3353 = vmax.f32 %v3205, 0.0
        %v3354 = vmax.f32 %v3254, 0.0
        %v3355 = vmax.f32 %v3303, 0.0
        %v3356 = vmax.f32 %v2963, 0.0
        %v3357 = vmax.f32 %v3012, 0.0
        %v3358 = vmax.f32 %v3061, 0.0
        %v3359 = vmax.f32 %v3110, 0.0
        %v3360 = vmax.f32 %v3159, 0.0
        %v3361 = vmax.f32 %v3208, 0.0
        %v3362 = vmax.f32 %v3257, 0.0
        %v3363 = vmax.f32 %v3306, 0.0
        %v3364 = vmax.f32 %v2965, 0.0
        %v3365 = vmax.f32 %v3014, 0.0
        %v3366 = vmax.f32 %v3063, 0.0
        %v3367 = vmax.f32 %v3112, 0.0
        %v3368 = vmax.f32 %v3161, 0.0
        %v3369 = vmax.f32 %v3210, 0.0
        %v3370 = vmax.f32 %v3259, 0.0
        %v3371 = vmax.f32 %v3308, 0.0
        %v3372 = vmax.f32 %v2968, 0.0
        %v3373 = vmax.f32 %v3017, 0.0
        %v3374 = vmax.f32 %v3066, 0.0
        %v3375 = vmax.f32 %v3115, 0.0
        %v3376 = vmax.f32 %v3164, 0.0
        %v3377 = vmax.f32 %v3213, 0.0
        %v3378 = vmax.f32 %v3262, 0.0
        %v3379 = vmax.f32 %v3311, 0.0
        %v3380 = vmax.f32 %v2970, 0.0
        %v3381 = vmax.f32 %v3019, 0.0
        %v3382 = vmax.f32 %v3068, 0.0
        %v3383 = vmax.f32 %v3117, 0.0
        %v3384 = vmax.f32 %v3166, 0.0
        %v3385 = vmax.f32 %v3215, 0.0
        %v3386 = vmax.f32 %v3264, 0.0
        %v3387 = vmax.f32 %v3313, 0.0
        %v3388 = vmax.f32 %v2973, 0.0
        %v3389 = vmax.f32 %v3022, 0.0
        %v3390 = vmax.f32 %v3071, 0.0
        %v3391 = vmax.f32 %v3120, 0.0
        %v3392 = vmax.f32 %v3169, 0.0
        %v3393 = vmax.f32 %v3218, 0.0
        %v3394 = vmax.f32 %v3267, 0.0
        %v3395 = vmax.f32 %v3316, 0.0
        %v3396 = vmax.f32 %v2975, 0.0
        %v3397 = vmax.f32 %v3024, 0.0
        %v3398 = vmax.f32 %v3073, 0.0
        %v3399 = vmax.f32 %v3122, 0.0
        %v3400 = vmax.f32 %v3171, 0.0
        %v3401 = vmax.f32 %v3220, 0.0
        %v3402 = vmax.f32 %v3269, 0.0
        %v3403 = vmax.f32 %v3318, 0.0
        %v3404 = vmax.f32 %v2978, 0.0
        %v3405 = vmax.f32 %v3027, 0.0
        %v3406 = vmax.f32 %v3076, 0.0
        %v3407 = vmax.f32 %v3125, 0.0
        %v3408 = vmax.f32 %v3174, 0.0
        %v3409 = vmax.f32 %v3223, 0.0
        %v3410 = vmax.f32 %v3272, 0.0
        %v3411 = vmax.f32 %v3321, 0.0
        %v3412 = vmax.f32 %v2980, 0.0
        %v3413 = vmax.f32 %v3029, 0.0
        %v3414 = vmax.f32 %v3078, 0.0
        %v3415 = vmax.f32 %v3127, 0.0
        %v3416 = vmax.f32 %v3176, 0.0
        %v3417 = vmax.f32 %v3225, 0.0
        %v3418 = vmax.f32 %v3274, 0.0
        %v3419 = vmax.f32 %v3323, 0.0
        %v3420 = vmax.f32 %v2983, 0.0
        %v3421 = vmax.f32 %v3032, 0.0
        %v3422 = vmax.f32 %v3081, 0.0
        %v3423 = vmax.f32 %v3130, 0.0
        %v3424 = vmax.f32 %v3179, 0.0
        %v3425 = vmax.f32 %v3228, 0.0
        %v3426 = vmax.f32 %v3277, 0.0
        %v3427 = vmax.f32 %v3326, 0.0
        %v3428 = vmax.f32 %v2985, 0.0
        %v3429 = vmax.f32 %v3034, 0.0
        %v3430 = vmax.f32 %v3083, 0.0
        %v3431 = vmax.f32 %v3132, 0.0
        %v3432 = vmax.f32 %v3181, 0.0
        %v3433 = vmax.f32 %v3230, 0.0
        %v3434 = vmax.f32 %v3279, 0.0
        %v3435 = vmax.f32 %v3328, 0.0
        %v3436 = vmax.f32 %v2988, 0.0
        %v3437 = vmax.f32 %v3037, 0.0
        %v3438 = vmax.f32 %v3086, 0.0
        %v3439 = vmax.f32 %v3135, 0.0
        %v3440 = vmax.f32 %v3184, 0.0
        %v3441 = vmax.f32 %v3233, 0.0
        %v3442 = vmax.f32 %v3282, 0.0
        %v3443 = vmax.f32 %v3331, 0.0
        %v3444 = vmax.f32 %v2990, 0.0
        %v3445 = vmax.f32 %v3039, 0.0
        %v3446 = vmax.f32 %v3088, 0.0
        %v3447 = vmax.f32 %v3137, 0.0
        %v3448 = vmax.f32 %v3186, 0.0
        %v3449 = vmax.f32 %v3235, 0.0
        %v3450 = vmax.f32 %v3284, 0.0
        %v3451 = vmax.f32 %v3333, 0.0
        %v3452 = vmax.f32 %v2993, 0.0
        %v3453 = vmax.f32 %v3042, 0.0
        %v3454 = vmax.f32 %v3091, 0.0
        %v3455 = vmax.f32 %v3140, 0.0
        %v3456 = vmax.f32 %v3189, 0.0
        %v3457 = vmax.f32 %v3238, 0.0
        %v3458 = vmax.f32 %v3287, 0.0
        %v3459 = vmax.f32 %v3336, 0.0
        %v3460 = vmax.f32 %v2995, 0.0
        %v3461 = vmax.f32 %v3044, 0.0
        %v3462 = vmax.f32 %v3093, 0.0
        %v3463 = vmax.f32 %v3142, 0.0
        %v3464 = vmax.f32 %v3191, 0.0
        %v3465 = vmax.f32 %v3240, 0.0
        %v3466 = vmax.f32 %v3289, 0.0
        %v3467 = vmax.f32 %v3338, 0.0
        %v3468 = vld [vmem:[%s5] sm:$0xf]
        %v3469 = vld [vmem:[%s5 + $0x4] sm:$0xf]
        %v3470 = vld [vmem:[%s5 + $0x8] sm:$0xf]
        %v3471 = vld [vmem:[%s5 + $0xc] sm:$0xf]
        %v3472 = vld [vmem:[%s5 + $0x10] sm:$0xf]
        %v3473 = vld [vmem:[%s5 + $0x14] sm:$0xf]
        %v3474 = vld [vmem:[%s5 + $0x18] sm:$0xf]
        %v3475 = vld [vmem:[%s5 + $0x1c] sm:$0xf]
        %v3476 = vld [vmem:[%s5 + $0x20] sm:$0xf]
        %v3477 = vld [vmem:[%s5 + $0x24] sm:$0xf]
        %v3478 = vld [vmem:[%s5 + $0x28] sm:$0xf]
        %v3479 = vld [vmem:[%s5 + $0x2c] sm:$0xf]
        %v3480 = vld [vmem:[%s5 + $0x30] sm:$0xf]
        %v3481 = vld [vmem:[%s5 + $0x34] sm:$0xf]
        %v3482 = vld [vmem:[%s5 + $0x38] sm:$0xf]
        %v3483 = vld [vmem:[%s5 + $0x3c] sm:$0xf]
        %v3484 = vpack.c.bf16 %v3348, %v3340
        %v3485 = vpack.c.bf16 %v3349, %v3341
        %v3486 = vpack.c.bf16 %v3350, %v3342
        %v3487 = vpack.c.bf16 %v3351, %v3343
        %v3488 = vpack.c.bf16 %v3352, %v3344
        %v3489 = vpack.c.bf16 %v3353, %v3345
        %v3490 = vpack.c.bf16 %v3354, %v3346
        %v3491 = vpack.c.bf16 %v3355, %v3347
        %v3492 = vpack.c.bf16 %v3364, %v3356
        %v3493 = vpack.c.bf16 %v3365, %v3357
        %v3494 = vpack.c.bf16 %v3366, %v3358
        %v3495 = vpack.c.bf16 %v3367, %v3359
        %v3496 = vpack.c.bf16 %v3368, %v3360
        %v3497 = vpack.c.bf16 %v3369, %v3361
        %v3498 = vpack.c.bf16 %v3370, %v3362
        %v3499 = vpack.c.bf16 %v3371, %v3363
        %v3500 = vpack.c.bf16 %v3380, %v3372
        %v3501 = vpack.c.bf16 %v3381, %v3373
        %v3502 = vpack.c.bf16 %v3382, %v3374
        %v3503 = vpack.c.bf16 %v3383, %v3375
        %v3504 = vpack.c.bf16 %v3384, %v3376
        %v3505 = vpack.c.bf16 %v3385, %v3377
        %v3506 = vpack.c.bf16 %v3386, %v3378
        %v3507 = vpack.c.bf16 %v3387, %v3379
        %v3508 = vpack.c.bf16 %v3396, %v3388
        %v3509 = vpack.c.bf16 %v3397, %v3389
        %v3510 = vpack.c.bf16 %v3398, %v3390
        %v3511 = vpack.c.bf16 %v3399, %v3391
        %v3512 = vpack.c.bf16 %v3400, %v3392
        %v3513 = vpack.c.bf16 %v3401, %v3393
        %v3514 = vpack.c.bf16 %v3402, %v3394
        %v3515 = vpack.c.bf16 %v3403, %v3395
        %v3516 = vpack.c.bf16 %v3412, %v3404
        %v3517 = vpack.c.bf16 %v3413, %v3405
        %v3518 = vpack.c.bf16 %v3414, %v3406
        %v3519 = vpack.c.bf16 %v3415, %v3407
        %v3520 = vpack.c.bf16 %v3416, %v3408
        %v3521 = vpack.c.bf16 %v3417, %v3409
        %v3522 = vpack.c.bf16 %v3418, %v3410
        %v3523 = vpack.c.bf16 %v3419, %v3411
        %v3524 = vpack.c.bf16 %v3428, %v3420
        %v3525 = vpack.c.bf16 %v3429, %v3421
        %v3526 = vpack.c.bf16 %v3430, %v3422
        %v3527 = vpack.c.bf16 %v3431, %v3423
        %v3528 = vpack.c.bf16 %v3432, %v3424
        %v3529 = vpack.c.bf16 %v3433, %v3425
        %v3530 = vpack.c.bf16 %v3434, %v3426
        %v3531 = vpack.c.bf16 %v3435, %v3427
        %v3532 = vpack.c.bf16 %v3444, %v3436
        %v3533 = vpack.c.bf16 %v3445, %v3437
        %v3534 = vpack.c.bf16 %v3446, %v3438
        %v3535 = vpack.c.bf16 %v3447, %v3439
        %v3536 = vpack.c.bf16 %v3448, %v3440
        %v3537 = vpack.c.bf16 %v3449, %v3441
        %v3538 = vpack.c.bf16 %v3450, %v3442
        %v3539 = vpack.c.bf16 %v3451, %v3443
        %v3540 = vpack.c.bf16 %v3460, %v3452
        %v3541 = vpack.c.bf16 %v3461, %v3453
        %v3542 = vpack.c.bf16 %v3462, %v3454
        %v3543 = vpack.c.bf16 %v3463, %v3455
        %v3544 = vpack.c.bf16 %v3464, %v3456
        %v3545 = vpack.c.bf16 %v3465, %v3457
        %v3546 = vpack.c.bf16 %v3466, %v3458
        %v3547 = vpack.c.bf16 %v3467, %v3459
        %v3548 = vld [vmem:[%s6] sm:$0xff]
        %v3549 = vld [vmem:[%s6 + $0x8] sm:$0xff]
        %v3550 = vld [vmem:[%s6 + $0x10] sm:$0xff]
        %v3551 = vld [vmem:[%s6 + $0x18] sm:$0xff]
        %v3552 = vld [vmem:[%s6 + $0x20] sm:$0xff]
        %v3553 = vld [vmem:[%s6 + $0x28] sm:$0xff]
        %v3554 = vld [vmem:[%s6 + $0x30] sm:$0xff]
        %v3555 = vld [vmem:[%s6 + $0x38] sm:$0xff]
        %v3556 = vld [vmem:[%s6 + $0x40] sm:$0xff]
        %v3557 = vld [vmem:[%s6 + $0x48] sm:$0xff]
        %v3558 = vld [vmem:[%s6 + $0x50] sm:$0xff]
        %v3559 = vld [vmem:[%s6 + $0x58] sm:$0xff]
        %v3560 = vld [vmem:[%s6 + $0x60] sm:$0xff]
        %v3561 = vld [vmem:[%s6 + $0x68] sm:$0xff]
        %v3562 = vld [vmem:[%s6 + $0x70] sm:$0xff]
        %v3563 = vld [vmem:[%s6 + $0x78] sm:$0xff]
        %3565 = vset.pattern.permute.xlu0 0
        %3566 = vperm.xlu0 %3565, %v3548
        %v3567 = vpop.permute.xlu0 %3566
        %3570 = vset.pattern.permute.xlu0 0
        %3571 = vperm.xlu0 %3570, %v3549
        %v3572 = vpop.permute.xlu0 %3571
        %3575 = vset.pattern.permute.xlu0 0
        %3576 = vperm.xlu0 %3575, %v3550
        %v3577 = vpop.permute.xlu0 %3576
        %3580 = vset.pattern.permute.xlu0 0
        %3581 = vperm.xlu0 %3580, %v3551
        %v3582 = vpop.permute.xlu0 %3581
        %3585 = vset.pattern.permute.xlu0 0
        %3586 = vperm.xlu0 %3585, %v3552
        %v3587 = vpop.permute.xlu0 %3586
        %3590 = vset.pattern.permute.xlu0 0
        %3591 = vperm.xlu0 %3590, %v3553
        %v3592 = vpop.permute.xlu0 %3591
        %3595 = vset.pattern.permute.xlu0 0
        %3596 = vperm.xlu0 %3595, %v3554
        %v3597 = vpop.permute.xlu0 %3596
        %3600 = vset.pattern.permute.xlu0 0
        %3601 = vperm.xlu0 %3600, %v3555
        %v3602 = vpop.permute.xlu0 %3601
        %3605 = vset.pattern.permute.xlu0 0
        %3606 = vperm.xlu0 %3605, %v3556
        %v3607 = vpop.permute.xlu0 %3606
        %3610 = vset.pattern.permute.xlu0 0
        %3611 = vperm.xlu0 %3610, %v3557
        %v3612 = vpop.permute.xlu0 %3611
        %3615 = vset.pattern.permute.xlu0 0
        %3616 = vperm.xlu0 %3615, %v3558
        %v3617 = vpop.permute.xlu0 %3616
        %3620 = vset.pattern.permute.xlu0 0
        %3621 = vperm.xlu0 %3620, %v3559
        %v3622 = vpop.permute.xlu0 %3621
        %3625 = vset.pattern.permute.xlu0 0
        %3626 = vperm.xlu0 %3625, %v3560
        %v3627 = vpop.permute.xlu0 %3626
        %3630 = vset.pattern.permute.xlu0 0
        %3631 = vperm.xlu0 %3630, %v3561
        %v3632 = vpop.permute.xlu0 %3631
        %3635 = vset.pattern.permute.xlu0 0
        %3636 = vperm.xlu0 %3635, %v3562
        %v3637 = vpop.permute.xlu0 %3636
        %3640 = vset.pattern.permute.xlu0 0
        %3641 = vperm.xlu0 %3640, %v3563
        %v3642 = vpop.permute.xlu0 %3641
        %v3660 = vunpack.c.l.b16 %v3468
        %v3661 = vunpack.c.l.b16 %v3469
        %v3662 = vunpack.c.l.b16 %v3470
        %v3663 = vunpack.c.l.b16 %v3471
        %v3664 = vunpack.c.l.b16 %v3472
        %v3665 = vunpack.c.l.b16 %v3473
        %v3666 = vunpack.c.l.b16 %v3474
        %v3667 = vunpack.c.l.b16 %v3475
        %v3668 = vunpack.c.l.b16 %v3476
        %v3669 = vunpack.c.l.b16 %v3477
        %v3670 = vunpack.c.l.b16 %v3478
        %v3671 = vunpack.c.l.b16 %v3479
        %v3672 = vunpack.c.l.b16 %v3480
        %v3673 = vunpack.c.l.b16 %v3481
        %v3674 = vunpack.c.l.b16 %v3482
        %v3675 = vunpack.c.l.b16 %v3483
        %v3676 = vpack.c.b16 %v3661, %v3660
        %v3677 = vpack.c.b16 %v3663, %v3662
        %v3678 = vpack.c.b16 %v3665, %v3664
        %v3679 = vpack.c.b16 %v3667, %v3666
        %v3680 = vpack.c.b16 %v3669, %v3668
        %v3681 = vpack.c.b16 %v3671, %v3670
        %v3682 = vpack.c.b16 %v3673, %v3672
        %v3683 = vpack.c.b16 %v3675, %v3674
        %3692 = vmatpush.bf16.msra.mxu0 %v3540
        %3693 = vmatpush.bf16.msra.mxu0 %v3532
        %3694 = vmatpush.bf16.msra.mxu0 %v3524
        %3695 = vmatpush.bf16.msra.mxu0 %v3516
        %3696 = vmatpush.bf16.msra.mxu0 %v3508
        %3697 = vmatpush.bf16.msra.mxu0 %v3500
        %3698 = vmatpush.bf16.msra.mxu0 %v3492
        %3699 = vmatpush.bf16.msra.mxu0 %v3484
        %3700 = vmatmul.bf16.gmra.mxu0 %v3676
        %v3701 = vpop.f32.mrf.mxu0
        %v3702 = vadd.f32 %v3567, %v3701
        %v3703 = vpop.f32.mrf.mxu0
        %v3704 = vadd.f32 %v3572, %v3703
        %3705 = vmatmul.bf16.gmra.mxu0 %v3677
        %v3706 = vpop.f32.mrf.mxu0
        %v3707 = vadd.f32 %v3577, %v3706
        %v3708 = vpop.f32.mrf.mxu0
        %v3709 = vadd.f32 %v3582, %v3708
        %3710 = vmatmul.bf16.gmra.mxu0 %v3678
        %v3711 = vpop.f32.mrf.mxu0
        %v3712 = vadd.f32 %v3587, %v3711
        %v3713 = vpop.f32.mrf.mxu0
        %v3714 = vadd.f32 %v3592, %v3713
        %3715 = vmatmul.bf16.gmra.mxu0 %v3679
        %v3716 = vpop.f32.mrf.mxu0
        %v3717 = vadd.f32 %v3597, %v3716
        %v3718 = vpop.f32.mrf.mxu0
        %v3719 = vadd.f32 %v3602, %v3718
        %3720 = vmatmul.bf16.gmra.mxu0 %v3680
        %v3721 = vpop.f32.mrf.mxu0
        %v3722 = vadd.f32 %v3607, %v3721
        %v3723 = vpop.f32.mrf.mxu0
        %v3724 = vadd.f32 %v3612, %v3723
        %3725 = vmatmul.bf16.gmra.mxu0 %v3681
        %v3726 = vpop.f32.mrf.mxu0
        %v3727 = vadd.f32 %v3617, %v3726
        %v3728 = vpop.f32.mrf.mxu0
        %v3729 = vadd.f32 %v3622, %v3728
        %3730 = vmatmul.bf16.gmra.mxu0 %v3682
        %v3731 = vpop.f32.mrf.mxu0
        %v3732 = vadd.f32 %v3627, %v3731
        %v3733 = vpop.f32.mrf.mxu0
        %v3734 = vadd.f32 %v3632, %v3733
        %3735 = vmatmul.bf16.gmra.mxu0 %v3683
        %v3736 = vpop.f32.mrf.mxu0
        %v3737 = vadd.f32 %v3637, %v3736
        %v3738 = vpop.f32.mrf.mxu0
        %v3739 = vadd.f32 %v3642, %v3738
        %3740 = vdwg.mxu0
        %3741 = vmatpush.bf16.msra.mxu0 %v3541
        %3742 = vmatpush.bf16.msra.mxu0 %v3533
        %3743 = vmatpush.bf16.msra.mxu0 %v3525
        %3744 = vmatpush.bf16.msra.mxu0 %v3517
        %3745 = vmatpush.bf16.msra.mxu0 %v3509
        %3746 = vmatpush.bf16.msra.mxu0 %v3501
        %3747 = vmatpush.bf16.msra.mxu0 %v3493
        %3748 = vmatpush.bf16.msra.mxu0 %v3485
        %3749 = vmatmul.bf16.gmra.mxu0 %v3676
        %v3750 = vpop.f32.mrf.mxu0
        %v3751 = vadd.f32 %v3567, %v3750
        %v3752 = vpop.f32.mrf.mxu0
        %v3753 = vadd.f32 %v3572, %v3752
        %3754 = vmatmul.bf16.gmra.mxu0 %v3677
        %v3755 = vpop.f32.mrf.mxu0
        %v3756 = vadd.f32 %v3577, %v3755
        %v3757 = vpop.f32.mrf.mxu0
        %v3758 = vadd.f32 %v3582, %v3757
        %3759 = vmatmul.bf16.gmra.mxu0 %v3678
        %v3760 = vpop.f32.mrf.mxu0
        %v3761 = vadd.f32 %v3587, %v3760
        %v3762 = vpop.f32.mrf.mxu0
        %v3763 = vadd.f32 %v3592, %v3762
        %3764 = vmatmul.bf16.gmra.mxu0 %v3679
        %v3765 = vpop.f32.mrf.mxu0
        %v3766 = vadd.f32 %v3597, %v3765
        %v3767 = vpop.f32.mrf.mxu0
        %v3768 = vadd.f32 %v3602, %v3767
        %3769 = vmatmul.bf16.gmra.mxu0 %v3680
        %v3770 = vpop.f32.mrf.mxu0
        %v3771 = vadd.f32 %v3607, %v3770
        %v3772 = vpop.f32.mrf.mxu0
        %v3773 = vadd.f32 %v3612, %v3772
        %3774 = vmatmul.bf16.gmra.mxu0 %v3681
        %v3775 = vpop.f32.mrf.mxu0
        %v3776 = vadd.f32 %v3617, %v3775
        %v3777 = vpop.f32.mrf.mxu0
        %v3778 = vadd.f32 %v3622, %v3777
        %3779 = vmatmul.bf16.gmra.mxu0 %v3682
        %v3780 = vpop.f32.mrf.mxu0
        %v3781 = vadd.f32 %v3627, %v3780
        %v3782 = vpop.f32.mrf.mxu0
        %v3783 = vadd.f32 %v3632, %v3782
        %3784 = vmatmul.bf16.gmra.mxu0 %v3683
        %v3785 = vpop.f32.mrf.mxu0
        %v3786 = vadd.f32 %v3637, %v3785
        %v3787 = vpop.f32.mrf.mxu0
        %v3788 = vadd.f32 %v3642, %v3787
        %3789 = vdwg.mxu0
        %3790 = vmatpush.bf16.msra.mxu0 %v3542
        %3791 = vmatpush.bf16.msra.mxu0 %v3534
        %3792 = vmatpush.bf16.msra.mxu0 %v3526
        %3793 = vmatpush.bf16.msra.mxu0 %v3518
        %3794 = vmatpush.bf16.msra.mxu0 %v3510
        %3795 = vmatpush.bf16.msra.mxu0 %v3502
        %3796 = vmatpush.bf16.msra.mxu0 %v3494
        %3797 = vmatpush.bf16.msra.mxu0 %v3486
        %3798 = vmatmul.bf16.gmra.mxu0 %v3676
        %v3799 = vpop.f32.mrf.mxu0
        %v3800 = vadd.f32 %v3567, %v3799
        %v3801 = vpop.f32.mrf.mxu0
        %v3802 = vadd.f32 %v3572, %v3801
        %3803 = vmatmul.bf16.gmra.mxu0 %v3677
        %v3804 = vpop.f32.mrf.mxu0
        %v3805 = vadd.f32 %v3577, %v3804
        %v3806 = vpop.f32.mrf.mxu0
        %v3807 = vadd.f32 %v3582, %v3806
        %3808 = vmatmul.bf16.gmra.mxu0 %v3678
        %v3809 = vpop.f32.mrf.mxu0
        %v3810 = vadd.f32 %v3587, %v3809
        %v3811 = vpop.f32.mrf.mxu0
        %v3812 = vadd.f32 %v3592, %v3811
        %3813 = vmatmul.bf16.gmra.mxu0 %v3679
        %v3814 = vpop.f32.mrf.mxu0
        %v3815 = vadd.f32 %v3597, %v3814
        %v3816 = vpop.f32.mrf.mxu0
        %v3817 = vadd.f32 %v3602, %v3816
        %3818 = vmatmul.bf16.gmra.mxu0 %v3680
        %v3819 = vpop.f32.mrf.mxu0
        %v3820 = vadd.f32 %v3607, %v3819
        %v3821 = vpop.f32.mrf.mxu0
        %v3822 = vadd.f32 %v3612, %v3821
        %3823 = vmatmul.bf16.gmra.mxu0 %v3681
        %v3824 = vpop.f32.mrf.mxu0
        %v3825 = vadd.f32 %v3617, %v3824
        %v3826 = vpop.f32.mrf.mxu0
        %v3827 = vadd.f32 %v3622, %v3826
        %3828 = vmatmul.bf16.gmra.mxu0 %v3682
        %v3829 = vpop.f32.mrf.mxu0
        %v3830 = vadd.f32 %v3627, %v3829
        %v3831 = vpop.f32.mrf.mxu0
        %v3832 = vadd.f32 %v3632, %v3831
        %3833 = vmatmul.bf16.gmra.mxu0 %v3683
        %v3834 = vpop.f32.mrf.mxu0
        %v3835 = vadd.f32 %v3637, %v3834
        %v3836 = vpop.f32.mrf.mxu0
        %v3837 = vadd.f32 %v3642, %v3836
        %3838 = vdwg.mxu0
        %3839 = vmatpush.bf16.msra.mxu0 %v3543
        %3840 = vmatpush.bf16.msra.mxu0 %v3535
        %3841 = vmatpush.bf16.msra.mxu0 %v3527
        %3842 = vmatpush.bf16.msra.mxu0 %v3519
        %3843 = vmatpush.bf16.msra.mxu0 %v3511
        %3844 = vmatpush.bf16.msra.mxu0 %v3503
        %3845 = vmatpush.bf16.msra.mxu0 %v3495
        %3846 = vmatpush.bf16.msra.mxu0 %v3487
        %3847 = vmatmul.bf16.gmra.mxu0 %v3676
        %v3848 = vpop.f32.mrf.mxu0
        %v3849 = vadd.f32 %v3567, %v3848
        %v3850 = vpop.f32.mrf.mxu0
        %v3851 = vadd.f32 %v3572, %v3850
        %3852 = vmatmul.bf16.gmra.mxu0 %v3677
        %v3853 = vpop.f32.mrf.mxu0
        %v3854 = vadd.f32 %v3577, %v3853
        %v3855 = vpop.f32.mrf.mxu0
        %v3856 = vadd.f32 %v3582, %v3855
        %3857 = vmatmul.bf16.gmra.mxu0 %v3678
        %v3858 = vpop.f32.mrf.mxu0
        %v3859 = vadd.f32 %v3587, %v3858
        %v3860 = vpop.f32.mrf.mxu0
        %v3861 = vadd.f32 %v3592, %v3860
        %3862 = vmatmul.bf16.gmra.mxu0 %v3679
        %v3863 = vpop.f32.mrf.mxu0
        %v3864 = vadd.f32 %v3597, %v3863
        %v3865 = vpop.f32.mrf.mxu0
        %v3866 = vadd.f32 %v3602, %v3865
        %3867 = vmatmul.bf16.gmra.mxu0 %v3680
        %v3868 = vpop.f32.mrf.mxu0
        %v3869 = vadd.f32 %v3607, %v3868
        %v3870 = vpop.f32.mrf.mxu0
        %v3871 = vadd.f32 %v3612, %v3870
        %3872 = vmatmul.bf16.gmra.mxu0 %v3681
        %v3873 = vpop.f32.mrf.mxu0
        %v3874 = vadd.f32 %v3617, %v3873
        %v3875 = vpop.f32.mrf.mxu0
        %v3876 = vadd.f32 %v3622, %v3875
        %3877 = vmatmul.bf16.gmra.mxu0 %v3682
        %v3878 = vpop.f32.mrf.mxu0
        %v3879 = vadd.f32 %v3627, %v3878
        %v3880 = vpop.f32.mrf.mxu0
        %v3881 = vadd.f32 %v3632, %v3880
        %3882 = vmatmul.bf16.gmra.mxu0 %v3683
        %v3883 = vpop.f32.mrf.mxu0
        %v3884 = vadd.f32 %v3637, %v3883
        %v3885 = vpop.f32.mrf.mxu0
        %v3886 = vadd.f32 %v3642, %v3885
        %3887 = vdwg.mxu0
        %3888 = vmatpush.bf16.msra.mxu0 %v3544
        %3889 = vmatpush.bf16.msra.mxu0 %v3536
        %3890 = vmatpush.bf16.msra.mxu0 %v3528
        %3891 = vmatpush.bf16.msra.mxu0 %v3520
        %3892 = vmatpush.bf16.msra.mxu0 %v3512
        %3893 = vmatpush.bf16.msra.mxu0 %v3504
        %3894 = vmatpush.bf16.msra.mxu0 %v3496
        %3895 = vmatpush.bf16.msra.mxu0 %v3488
        %3896 = vmatmul.bf16.gmra.mxu0 %v3676
        %v3897 = vpop.f32.mrf.mxu0
        %v3898 = vadd.f32 %v3567, %v3897
        %v3899 = vpop.f32.mrf.mxu0
        %v3900 = vadd.f32 %v3572, %v3899
        %3901 = vmatmul.bf16.gmra.mxu0 %v3677
        %v3902 = vpop.f32.mrf.mxu0
        %v3903 = vadd.f32 %v3577, %v3902
        %v3904 = vpop.f32.mrf.mxu0
        %v3905 = vadd.f32 %v3582, %v3904
        %3906 = vmatmul.bf16.gmra.mxu0 %v3678
        %v3907 = vpop.f32.mrf.mxu0
        %v3908 = vadd.f32 %v3587, %v3907
        %v3909 = vpop.f32.mrf.mxu0
        %v3910 = vadd.f32 %v3592, %v3909
        %3911 = vmatmul.bf16.gmra.mxu0 %v3679
        %v3912 = vpop.f32.mrf.mxu0
        %v3913 = vadd.f32 %v3597, %v3912
        %v3914 = vpop.f32.mrf.mxu0
        %v3915 = vadd.f32 %v3602, %v3914
        %3916 = vmatmul.bf16.gmra.mxu0 %v3680
        %v3917 = vpop.f32.mrf.mxu0
        %v3918 = vadd.f32 %v3607, %v3917
        %v3919 = vpop.f32.mrf.mxu0
        %v3920 = vadd.f32 %v3612, %v3919
        %3921 = vmatmul.bf16.gmra.mxu0 %v3681
        %v3922 = vpop.f32.mrf.mxu0
        %v3923 = vadd.f32 %v3617, %v3922
        %v3924 = vpop.f32.mrf.mxu0
        %v3925 = vadd.f32 %v3622, %v3924
        %3926 = vmatmul.bf16.gmra.mxu0 %v3682
        %v3927 = vpop.f32.mrf.mxu0
        %v3928 = vadd.f32 %v3627, %v3927
        %v3929 = vpop.f32.mrf.mxu0
        %v3930 = vadd.f32 %v3632, %v3929
        %3931 = vmatmul.bf16.gmra.mxu0 %v3683
        %v3932 = vpop.f32.mrf.mxu0
        %v3933 = vadd.f32 %v3637, %v3932
        %v3934 = vpop.f32.mrf.mxu0
        %v3935 = vadd.f32 %v3642, %v3934
        %3936 = vdwg.mxu0
        %3937 = vmatpush.bf16.msra.mxu0 %v3545
        %3938 = vmatpush.bf16.msra.mxu0 %v3537
        %3939 = vmatpush.bf16.msra.mxu0 %v3529
        %3940 = vmatpush.bf16.msra.mxu0 %v3521
        %3941 = vmatpush.bf16.msra.mxu0 %v3513
        %3942 = vmatpush.bf16.msra.mxu0 %v3505
        %3943 = vmatpush.bf16.msra.mxu0 %v3497
        %3944 = vmatpush.bf16.msra.mxu0 %v3489
        %3945 = vmatmul.bf16.gmra.mxu0 %v3676
        %v3946 = vpop.f32.mrf.mxu0
        %v3947 = vadd.f32 %v3567, %v3946
        %v3948 = vpop.f32.mrf.mxu0
        %v3949 = vadd.f32 %v3572, %v3948
        %3950 = vmatmul.bf16.gmra.mxu0 %v3677
        %v3951 = vpop.f32.mrf.mxu0
        %v3952 = vadd.f32 %v3577, %v3951
        %v3953 = vpop.f32.mrf.mxu0
        %v3954 = vadd.f32 %v3582, %v3953
        %3955 = vmatmul.bf16.gmra.mxu0 %v3678
        %v3956 = vpop.f32.mrf.mxu0
        %v3957 = vadd.f32 %v3587, %v3956
        %v3958 = vpop.f32.mrf.mxu0
        %v3959 = vadd.f32 %v3592, %v3958
        %3960 = vmatmul.bf16.gmra.mxu0 %v3679
        %v3961 = vpop.f32.mrf.mxu0
        %v3962 = vadd.f32 %v3597, %v3961
        %v3963 = vpop.f32.mrf.mxu0
        %v3964 = vadd.f32 %v3602, %v3963
        %3965 = vmatmul.bf16.gmra.mxu0 %v3680
        %v3966 = vpop.f32.mrf.mxu0
        %v3967 = vadd.f32 %v3607, %v3966
        %v3968 = vpop.f32.mrf.mxu0
        %v3969 = vadd.f32 %v3612, %v3968
        %3970 = vmatmul.bf16.gmra.mxu0 %v3681
        %v3971 = vpop.f32.mrf.mxu0
        %v3972 = vadd.f32 %v3617, %v3971
        %v3973 = vpop.f32.mrf.mxu0
        %v3974 = vadd.f32 %v3622, %v3973
        %3975 = vmatmul.bf16.gmra.mxu0 %v3682
        %v3976 = vpop.f32.mrf.mxu0
        %v3977 = vadd.f32 %v3627, %v3976
        %v3978 = vpop.f32.mrf.mxu0
        %v3979 = vadd.f32 %v3632, %v3978
        %3980 = vmatmul.bf16.gmra.mxu0 %v3683
        %v3981 = vpop.f32.mrf.mxu0
        %v3982 = vadd.f32 %v3637, %v3981
        %v3983 = vpop.f32.mrf.mxu0
        %v3984 = vadd.f32 %v3642, %v3983
        %3985 = vdwg.mxu0
        %3986 = vmatpush.bf16.msra.mxu0 %v3546
        %3987 = vmatpush.bf16.msra.mxu0 %v3538
        %3988 = vmatpush.bf16.msra.mxu0 %v3530
        %3989 = vmatpush.bf16.msra.mxu0 %v3522
        %3990 = vmatpush.bf16.msra.mxu0 %v3514
        %3991 = vmatpush.bf16.msra.mxu0 %v3506
        %3992 = vmatpush.bf16.msra.mxu0 %v3498
        %3993 = vmatpush.bf16.msra.mxu0 %v3490
        %3994 = vmatmul.bf16.gmra.mxu0 %v3676
        %v3995 = vpop.f32.mrf.mxu0
        %v3996 = vadd.f32 %v3567, %v3995
        %v3997 = vpop.f32.mrf.mxu0
        %v3998 = vadd.f32 %v3572, %v3997
        %3999 = vmatmul.bf16.gmra.mxu0 %v3677
        %v4000 = vpop.f32.mrf.mxu0
        %v4001 = vadd.f32 %v3577, %v4000
        %v4002 = vpop.f32.mrf.mxu0
        %v4003 = vadd.f32 %v3582, %v4002
        %4004 = vmatmul.bf16.gmra.mxu0 %v3678
        %v4005 = vpop.f32.mrf.mxu0
        %v4006 = vadd.f32 %v3587, %v4005
        %v4007 = vpop.f32.mrf.mxu0
        %v4008 = vadd.f32 %v3592, %v4007
        %4009 = vmatmul.bf16.gmra.mxu0 %v3679
        %v4010 = vpop.f32.mrf.mxu0
        %v4011 = vadd.f32 %v3597, %v4010
        %v4012 = vpop.f32.mrf.mxu0
        %v4013 = vadd.f32 %v3602, %v4012
        %4014 = vmatmul.bf16.gmra.mxu0 %v3680
        %v4015 = vpop.f32.mrf.mxu0
        %v4016 = vadd.f32 %v3607, %v4015
        %v4017 = vpop.f32.mrf.mxu0
        %v4018 = vadd.f32 %v3612, %v4017
        %4019 = vmatmul.bf16.gmra.mxu0 %v3681
        %v4020 = vpop.f32.mrf.mxu0
        %v4021 = vadd.f32 %v3617, %v4020
        %v4022 = vpop.f32.mrf.mxu0
        %v4023 = vadd.f32 %v3622, %v4022
        %4024 = vmatmul.bf16.gmra.mxu0 %v3682
        %v4025 = vpop.f32.mrf.mxu0
        %v4026 = vadd.f32 %v3627, %v4025
        %v4027 = vpop.f32.mrf.mxu0
        %v4028 = vadd.f32 %v3632, %v4027
        %4029 = vmatmul.bf16.gmra.mxu0 %v3683
        %v4030 = vpop.f32.mrf.mxu0
        %v4031 = vadd.f32 %v3637, %v4030
        %v4032 = vpop.f32.mrf.mxu0
        %v4033 = vadd.f32 %v3642, %v4032
        %4034 = vdwg.mxu0
        %4035 = vmatpush.bf16.msra.mxu0 %v3547
        %4036 = vmatpush.bf16.msra.mxu0 %v3539
        %4037 = vmatpush.bf16.msra.mxu0 %v3531
        %4038 = vmatpush.bf16.msra.mxu0 %v3523
        %4039 = vmatpush.bf16.msra.mxu0 %v3515
        %4040 = vmatpush.bf16.msra.mxu0 %v3507
        %4041 = vmatpush.bf16.msra.mxu0 %v3499
        %4042 = vmatpush.bf16.msra.mxu0 %v3491
        %4043 = vmatmul.bf16.gmra.mxu0 %v3676
        %v4044 = vpop.f32.mrf.mxu0
        %v4045 = vadd.f32 %v3567, %v4044
        %v4046 = vpop.f32.mrf.mxu0
        %v4047 = vadd.f32 %v3572, %v4046
        %4048 = vmatmul.bf16.gmra.mxu0 %v3677
        %v4049 = vpop.f32.mrf.mxu0
        %v4050 = vadd.f32 %v3577, %v4049
        %v4051 = vpop.f32.mrf.mxu0
        %v4052 = vadd.f32 %v3582, %v4051
        %4053 = vmatmul.bf16.gmra.mxu0 %v3678
        %v4054 = vpop.f32.mrf.mxu0
        %v4055 = vadd.f32 %v3587, %v4054
        %v4056 = vpop.f32.mrf.mxu0
        %v4057 = vadd.f32 %v3592, %v4056
        %4058 = vmatmul.bf16.gmra.mxu0 %v3679
        %v4059 = vpop.f32.mrf.mxu0
        %v4060 = vadd.f32 %v3597, %v4059
        %v4061 = vpop.f32.mrf.mxu0
        %v4062 = vadd.f32 %v3602, %v4061
        %4063 = vmatmul.bf16.gmra.mxu0 %v3680
        %v4064 = vpop.f32.mrf.mxu0
        %v4065 = vadd.f32 %v3607, %v4064
        %v4066 = vpop.f32.mrf.mxu0
        %v4067 = vadd.f32 %v3612, %v4066
        %4068 = vmatmul.bf16.gmra.mxu0 %v3681
        %v4069 = vpop.f32.mrf.mxu0
        %v4070 = vadd.f32 %v3617, %v4069
        %v4071 = vpop.f32.mrf.mxu0
        %v4072 = vadd.f32 %v3622, %v4071
        %4073 = vmatmul.bf16.gmra.mxu0 %v3682
        %v4074 = vpop.f32.mrf.mxu0
        %v4075 = vadd.f32 %v3627, %v4074
        %v4076 = vpop.f32.mrf.mxu0
        %v4077 = vadd.f32 %v3632, %v4076
        %4078 = vmatmul.bf16.gmra.mxu0 %v3683
        %v4079 = vpop.f32.mrf.mxu0
        %v4080 = vadd.f32 %v3637, %v4079
        %v4081 = vpop.f32.mrf.mxu0
        %v4082 = vadd.f32 %v3642, %v4081
        %4083 = vdwg.mxu0
        %v4084 = vmax.f32 %v3702, 0.0
        %v4085 = vmax.f32 %v3751, 0.0
        %v4086 = vmax.f32 %v3800, 0.0
        %v4087 = vmax.f32 %v3849, 0.0
        %v4088 = vmax.f32 %v3898, 0.0
        %v4089 = vmax.f32 %v3947, 0.0
        %v4090 = vmax.f32 %v3996, 0.0
        %v4091 = vmax.f32 %v4045, 0.0
        %v4092 = vmax.f32 %v3704, 0.0
        %v4093 = vmax.f32 %v3753, 0.0
        %v4094 = vmax.f32 %v3802, 0.0
        %v4095 = vmax.f32 %v3851, 0.0
        %v4096 = vmax.f32 %v3900, 0.0
        %v4097 = vmax.f32 %v3949, 0.0
        %v4098 = vmax.f32 %v3998, 0.0
        %v4099 = vmax.f32 %v4047, 0.0
        %v4100 = vmax.f32 %v3707, 0.0
        %v4101 = vmax.f32 %v3756, 0.0
        %v4102 = vmax.f32 %v3805, 0.0
        %v4103 = vmax.f32 %v3854, 0.0
        %v4104 = vmax.f32 %v3903, 0.0
        %v4105 = vmax.f32 %v3952, 0.0
        %v4106 = vmax.f32 %v4001, 0.0
        %v4107 = vmax.f32 %v4050, 0.0
        %v4108 = vmax.f32 %v3709, 0.0
        %v4109 = vmax.f32 %v3758, 0.0
        %v4110 = vmax.f32 %v3807, 0.0
        %v4111 = vmax.f32 %v3856, 0.0
        %v4112 = vmax.f32 %v3905, 0.0
        %v4113 = vmax.f32 %v3954, 0.0
        %v4114 = vmax.f32 %v4003, 0.0
        %v4115 = vmax.f32 %v4052, 0.0
        %v4116 = vmax.f32 %v3712, 0.0
        %v4117 = vmax.f32 %v3761, 0.0
        %v4118 = vmax.f32 %v3810, 0.0
        %v4119 = vmax.f32 %v3859, 0.0
        %v4120 = vmax.f32 %v3908, 0.0
        %v4121 = vmax.f32 %v3957, 0.0
        %v4122 = vmax.f32 %v4006, 0.0
        %v4123 = vmax.f32 %v4055, 0.0
        %v4124 = vmax.f32 %v3714, 0.0
        %v4125 = vmax.f32 %v3763, 0.0
        %v4126 = vmax.f32 %v3812, 0.0
        %v4127 = vmax.f32 %v3861, 0.0
        %v4128 = vmax.f32 %v3910, 0.0
        %v4129 = vmax.f32 %v3959, 0.0
        %v4130 = vmax.f32 %v4008, 0.0
        %v4131 = vmax.f32 %v4057, 0.0
        %v4132 = vmax.f32 %v3717, 0.0
        %v4133 = vmax.f32 %v3766, 0.0
        %v4134 = vmax.f32 %v3815, 0.0
        %v4135 = vmax.f32 %v3864, 0.0
        %v4136 = vmax.f32 %v3913, 0.0
        %v4137 = vmax.f32 %v3962, 0.0
        %v4138 = vmax.f32 %v4011, 0.0
        %v4139 = vmax.f32 %v4060, 0.0
        %v4140 = vmax.f32 %v3719, 0.0
        %v4141 = vmax.f32 %v3768, 0.0
        %v4142 = vmax.f32 %v3817, 0.0
        %v4143 = vmax.f32 %v3866, 0.0
        %v4144 = vmax.f32 %v3915, 0.0
        %v4145 = vmax.f32 %v3964, 0.0
        %v4146 = vmax.f32 %v4013, 0.0
        %v4147 = vmax.f32 %v4062, 0.0
        %v4148 = vmax.f32 %v3722, 0.0
        %v4149 = vmax.f32 %v3771, 0.0
        %v4150 = vmax.f32 %v3820, 0.0
        %v4151 = vmax.f32 %v3869, 0.0
        %v4152 = vmax.f32 %v3918, 0.0
        %v4153 = vmax.f32 %v3967, 0.0
        %v4154 = vmax.f32 %v4016, 0.0
        %v4155 = vmax.f32 %v4065, 0.0
        %v4156 = vmax.f32 %v3724, 0.0
        %v4157 = vmax.f32 %v3773, 0.0
        %v4158 = vmax.f32 %v3822, 0.0
        %v4159 = vmax.f32 %v3871, 0.0
        %v4160 = vmax.f32 %v3920, 0.0
        %v4161 = vmax.f32 %v3969, 0.0
        %v4162 = vmax.f32 %v4018, 0.0
        %v4163 = vmax.f32 %v4067, 0.0
        %v4164 = vmax.f32 %v3727, 0.0
        %v4165 = vmax.f32 %v3776, 0.0
        %v4166 = vmax.f32 %v3825, 0.0
        %v4167 = vmax.f32 %v3874, 0.0
        %v4168 = vmax.f32 %v3923, 0.0
        %v4169 = vmax.f32 %v3972, 0.0
        %v4170 = vmax.f32 %v4021, 0.0
        %v4171 = vmax.f32 %v4070, 0.0
        %v4172 = vmax.f32 %v3729, 0.0
        %v4173 = vmax.f32 %v3778, 0.0
        %v4174 = vmax.f32 %v3827, 0.0
        %v4175 = vmax.f32 %v3876, 0.0
        %v4176 = vmax.f32 %v3925, 0.0
        %v4177 = vmax.f32 %v3974, 0.0
        %v4178 = vmax.f32 %v4023, 0.0
        %v4179 = vmax.f32 %v4072, 0.0
        %v4180 = vmax.f32 %v3732, 0.0
        %v4181 = vmax.f32 %v3781, 0.0
        %v4182 = vmax.f32 %v3830, 0.0
        %v4183 = vmax.f32 %v3879, 0.0
        %v4184 = vmax.f32 %v3928, 0.0
        %v4185 = vmax.f32 %v3977, 0.0
        %v4186 = vmax.f32 %v4026, 0.0
        %v4187 = vmax.f32 %v4075, 0.0
        %v4188 = vmax.f32 %v3734, 0.0
        %v4189 = vmax.f32 %v3783, 0.0
        %v4190 = vmax.f32 %v3832, 0.0
        %v4191 = vmax.f32 %v3881, 0.0
        %v4192 = vmax.f32 %v3930, 0.0
        %v4193 = vmax.f32 %v3979, 0.0
        %v4194 = vmax.f32 %v4028, 0.0
        %v4195 = vmax.f32 %v4077, 0.0
        %v4196 = vmax.f32 %v3737, 0.0
        %v4197 = vmax.f32 %v3786, 0.0
        %v4198 = vmax.f32 %v3835, 0.0
        %v4199 = vmax.f32 %v3884, 0.0
        %v4200 = vmax.f32 %v3933, 0.0
        %v4201 = vmax.f32 %v3982, 0.0
        %v4202 = vmax.f32 %v4031, 0.0
        %v4203 = vmax.f32 %v4080, 0.0
        %v4204 = vmax.f32 %v3739, 0.0
        %v4205 = vmax.f32 %v3788, 0.0
        %v4206 = vmax.f32 %v3837, 0.0
        %v4207 = vmax.f32 %v3886, 0.0
        %v4208 = vmax.f32 %v3935, 0.0
        %v4209 = vmax.f32 %v3984, 0.0
        %v4210 = vmax.f32 %v4033, 0.0
        %v4211 = vmax.f32 %v4082, 0.0
        %v4212 = vld [vmem:[%s7] sm:$0x3]
        %v4213 = vpack.c.bf16 %v4092, %v4084
        %v4214 = vpack.c.bf16 %v4093, %v4085
        %v4215 = vpack.c.bf16 %v4094, %v4086
        %v4216 = vpack.c.bf16 %v4095, %v4087
        %v4217 = vpack.c.bf16 %v4096, %v4088
        %v4218 = vpack.c.bf16 %v4097, %v4089
        %v4219 = vpack.c.bf16 %v4098, %v4090
        %v4220 = vpack.c.bf16 %v4099, %v4091
        %v4221 = vpack.c.bf16 %v4108, %v4100
        %v4222 = vpack.c.bf16 %v4109, %v4101
        %v4223 = vpack.c.bf16 %v4110, %v4102
        %v4224 = vpack.c.bf16 %v4111, %v4103
        %v4225 = vpack.c.bf16 %v4112, %v4104
        %v4226 = vpack.c.bf16 %v4113, %v4105
        %v4227 = vpack.c.bf16 %v4114, %v4106
        %v4228 = vpack.c.bf16 %v4115, %v4107
        %v4229 = vpack.c.bf16 %v4124, %v4116
        %v4230 = vpack.c.bf16 %v4125, %v4117
        %v4231 = vpack.c.bf16 %v4126, %v4118
        %v4232 = vpack.c.bf16 %v4127, %v4119
        %v4233 = vpack.c.bf16 %v4128, %v4120
        %v4234 = vpack.c.bf16 %v4129, %v4121
        %v4235 = vpack.c.bf16 %v4130, %v4122
        %v4236 = vpack.c.bf16 %v4131, %v4123
        %v4237 = vpack.c.bf16 %v4140, %v4132
        %v4238 = vpack.c.bf16 %v4141, %v4133
        %v4239 = vpack.c.bf16 %v4142, %v4134
        %v4240 = vpack.c.bf16 %v4143, %v4135
        %v4241 = vpack.c.bf16 %v4144, %v4136
        %v4242 = vpack.c.bf16 %v4145, %v4137
        %v4243 = vpack.c.bf16 %v4146, %v4138
        %v4244 = vpack.c.bf16 %v4147, %v4139
        %v4245 = vpack.c.bf16 %v4156, %v4148
        %v4246 = vpack.c.bf16 %v4157, %v4149
        %v4247 = vpack.c.bf16 %v4158, %v4150
        %v4248 = vpack.c.bf16 %v4159, %v4151
        %v4249 = vpack.c.bf16 %v4160, %v4152
        %v4250 = vpack.c.bf16 %v4161, %v4153
        %v4251 = vpack.c.bf16 %v4162, %v4154
        %v4252 = vpack.c.bf16 %v4163, %v4155
        %v4253 = vpack.c.bf16 %v4172, %v4164
        %v4254 = vpack.c.bf16 %v4173, %v4165
        %v4255 = vpack.c.bf16 %v4174, %v4166
        %v4256 = vpack.c.bf16 %v4175, %v4167
        %v4257 = vpack.c.bf16 %v4176, %v4168
        %v4258 = vpack.c.bf16 %v4177, %v4169
        %v4259 = vpack.c.bf16 %v4178, %v4170
        %v4260 = vpack.c.bf16 %v4179, %v4171
        %v4261 = vpack.c.bf16 %v4188, %v4180
        %v4262 = vpack.c.bf16 %v4189, %v4181
        %v4263 = vpack.c.bf16 %v4190, %v4182
        %v4264 = vpack.c.bf16 %v4191, %v4183
        %v4265 = vpack.c.bf16 %v4192, %v4184
        %v4266 = vpack.c.bf16 %v4193, %v4185
        %v4267 = vpack.c.bf16 %v4194, %v4186
        %v4268 = vpack.c.bf16 %v4195, %v4187
        %v4269 = vpack.c.bf16 %v4204, %v4196
        %v4270 = vpack.c.bf16 %v4205, %v4197
        %v4271 = vpack.c.bf16 %v4206, %v4198
        %v4272 = vpack.c.bf16 %v4207, %v4199
        %v4273 = vpack.c.bf16 %v4208, %v4200
        %v4274 = vpack.c.bf16 %v4209, %v4201
        %v4275 = vpack.c.bf16 %v4210, %v4202
        %v4276 = vpack.c.bf16 %v4211, %v4203
        %v4277 = vld [vmem:[%s8] sm:$0x7]
        %4279 = vset.pattern.permute.xlu0 0
        %4280 = vperm.xlu0 %4279, %v4277
        %v4281 = vpop.permute.xlu0 %4280
        %4283 = vmatpush.bf16.msra.mxu0 %v4269
        %4284 = vmatpush.bf16.msra.mxu0 %v4261
        %4285 = vmatpush.bf16.msra.mxu0 %v4253
        %4286 = vmatpush.bf16.msra.mxu0 %v4245
        %4287 = vmatpush.bf16.msra.mxu0 %v4237
        %4288 = vmatpush.bf16.msra.mxu0 %v4229
        %4289 = vmatpush.bf16.msra.mxu0 %v4221
        %4290 = vmatpush.bf16.msra.mxu0 %v4213
        %4291 = vmatmul.bf16.gmra.mxu0 %v4212
        %v4292 = vpop.f32.mrf.mxu0
        %v4293 = vadd.f32 %v4281, %v4292
        %v4294 = vpop.f32.mrf.mxu0
        %4295 = vdwg.mxu0
        %4296 = vmatpush.bf16.msra.mxu0 %v4270
        %4297 = vmatpush.bf16.msra.mxu0 %v4262
        %4298 = vmatpush.bf16.msra.mxu0 %v4254
        %4299 = vmatpush.bf16.msra.mxu0 %v4246
        %4300 = vmatpush.bf16.msra.mxu0 %v4238
        %4301 = vmatpush.bf16.msra.mxu0 %v4230
        %4302 = vmatpush.bf16.msra.mxu0 %v4222
        %4303 = vmatpush.bf16.msra.mxu0 %v4214
        %4304 = vmatmul.bf16.gmra.mxu0 %v4212
        %v4305 = vpop.f32.mrf.mxu0
        %v4306 = vadd.f32 %v4281, %v4305
        %v4307 = vpop.f32.mrf.mxu0
        %4308 = vdwg.mxu0
        %4309 = vmatpush.bf16.msra.mxu0 %v4271
        %4310 = vmatpush.bf16.msra.mxu0 %v4263
        %4311 = vmatpush.bf16.msra.mxu0 %v4255
        %4312 = vmatpush.bf16.msra.mxu0 %v4247
        %4313 = vmatpush.bf16.msra.mxu0 %v4239
        %4314 = vmatpush.bf16.msra.mxu0 %v4231
        %4315 = vmatpush.bf16.msra.mxu0 %v4223
        %4316 = vmatpush.bf16.msra.mxu0 %v4215
        %4317 = vmatmul.bf16.gmra.mxu0 %v4212
        %v4318 = vpop.f32.mrf.mxu0
        %v4319 = vadd.f32 %v4281, %v4318
        %v4320 = vpop.f32.mrf.mxu0
        %4321 = vdwg.mxu0
        %4322 = vmatpush.bf16.msra.mxu0 %v4272
        %4323 = vmatpush.bf16.msra.mxu0 %v4264
        %4324 = vmatpush.bf16.msra.mxu0 %v4256
        %4325 = vmatpush.bf16.msra.mxu0 %v4248
        %4326 = vmatpush.bf16.msra.mxu0 %v4240
        %4327 = vmatpush.bf16.msra.mxu0 %v4232
        %4328 = vmatpush.bf16.msra.mxu0 %v4224
        %4329 = vmatpush.bf16.msra.mxu0 %v4216
        %4330 = vmatmul.bf16.gmra.mxu0 %v4212
        %v4331 = vpop.f32.mrf.mxu0
        %v4332 = vadd.f32 %v4281, %v4331
        %v4333 = vpop.f32.mrf.mxu0
        %4334 = vdwg.mxu0
        %4335 = vmatpush.bf16.msra.mxu0 %v4273
        %4336 = vmatpush.bf16.msra.mxu0 %v4265
        %4337 = vmatpush.bf16.msra.mxu0 %v4257
        %4338 = vmatpush.bf16.msra.mxu0 %v4249
        %4339 = vmatpush.bf16.msra.mxu0 %v4241
        %4340 = vmatpush.bf16.msra.mxu0 %v4233
        %4341 = vmatpush.bf16.msra.mxu0 %v4225
        %4342 = vmatpush.bf16.msra.mxu0 %v4217
        %4343 = vmatmul.bf16.gmra.mxu0 %v4212
        %v4344 = vpop.f32.mrf.mxu0
        %v4345 = vadd.f32 %v4281, %v4344
        %v4346 = vpop.f32.mrf.mxu0
        %4347 = vdwg.mxu0
        %4348 = vmatpush.bf16.msra.mxu0 %v4274
        %4349 = vmatpush.bf16.msra.mxu0 %v4266
        %4350 = vmatpush.bf16.msra.mxu0 %v4258
        %4351 = vmatpush.bf16.msra.mxu0 %v4250
        %4352 = vmatpush.bf16.msra.mxu0 %v4242
        %4353 = vmatpush.bf16.msra.mxu0 %v4234
        %4354 = vmatpush.bf16.msra.mxu0 %v4226
        %4355 = vmatpush.bf16.msra.mxu0 %v4218
        %4356 = vmatmul.bf16.gmra.mxu0 %v4212
        %v4357 = vpop.f32.mrf.mxu0
        %v4358 = vadd.f32 %v4281, %v4357
        %v4359 = vpop.f32.mrf.mxu0
        %4360 = vdwg.mxu0
        %4361 = vmatpush.bf16.msra.mxu0 %v4275
        %4362 = vmatpush.bf16.msra.mxu0 %v4267
        %4363 = vmatpush.bf16.msra.mxu0 %v4259
        %4364 = vmatpush.bf16.msra.mxu0 %v4251
        %4365 = vmatpush.bf16.msra.mxu0 %v4243
        %4366 = vmatpush.bf16.msra.mxu0 %v4235
        %4367 = vmatpush.bf16.msra.mxu0 %v4227
        %4368 = vmatpush.bf16.msra.mxu0 %v4219
        %4369 = vmatmul.bf16.gmra.mxu0 %v4212
        %v4370 = vpop.f32.mrf.mxu0
        %v4371 = vadd.f32 %v4281, %v4370
        %v4372 = vpop.f32.mrf.mxu0
        %4373 = vdwg.mxu0
        %4374 = vmatpush.bf16.msra.mxu0 %v4276
        %4375 = vmatpush.bf16.msra.mxu0 %v4268
        %4376 = vmatpush.bf16.msra.mxu0 %v4260
        %4377 = vmatpush.bf16.msra.mxu0 %v4252
        %4378 = vmatpush.bf16.msra.mxu0 %v4244
        %4379 = vmatpush.bf16.msra.mxu0 %v4236
        %4380 = vmatpush.bf16.msra.mxu0 %v4228
        %4381 = vmatpush.bf16.msra.mxu0 %v4220
        %4382 = vmatmul.bf16.gmra.mxu0 %v4212
        %v4383 = vpop.f32.mrf.mxu0
        %v4384 = vadd.f32 %v4281, %v4383
        %v4385 = vpop.f32.mrf.mxu0
        %4386 = vdwg.mxu0
        %v4395 = vrot.slane %v2154, 1
        %v4396 = vrot.slane %v2155, 1
        %v4397 = vrot.slane %v2156, 1
        %v4398 = vrot.slane %v2157, 1
        %v4399 = vrot.slane %v2158, 1
        %v4400 = vrot.slane %v2159, 1
        %v4401 = vrot.slane %v2160, 1
        %v4402 = vrot.slane %v2161, 1
        %v4411 = vadd.f32 %v4293, %v4395
        %v4412 = vadd.f32 %v4306, %v4396
        %v4413 = vadd.f32 %v4319, %v4397
        %v4414 = vadd.f32 %v4332, %v4398
        %v4415 = vadd.f32 %v4345, %v4399
        %v4416 = vadd.f32 %v4358, %v4400
        %v4417 = vadd.f32 %v4371, %v4401
        %v4418 = vadd.f32 %v4384, %v4402
        %v4419 = vsub.f32 0.0, %v4411
        %v4420 = vsub.f32 0.0, %v4412
        %v4421 = vsub.f32 0.0, %v4413
        %v4422 = vsub.f32 0.0, %v4414
        %v4423 = vsub.f32 0.0, %v4415
        %v4424 = vsub.f32 0.0, %v4416
        %v4425 = vsub.f32 0.0, %v4417
        %v4426 = vsub.f32 0.0, %v4418
        %v4427 = vmul.f32 %v4419, 1.442695
        %v4428 = vpow.pop %v4427
        %v4429 = vmul.f32 %v4420, 1.442695
        %v4430 = vpow.pop %v4429
        %v4431 = vmul.f32 %v4421, 1.442695
        %v4432 = vpow.pop %v4431
        %v4433 = vmul.f32 %v4422, 1.442695
        %v4434 = vpow.pop %v4433
        %v4435 = vmul.f32 %v4423, 1.442695
        %v4436 = vpow.pop %v4435
        %v4437 = vmul.f32 %v4424, 1.442695
        %v4438 = vpow.pop %v4437
        %v4439 = vmul.f32 %v4425, 1.442695
        %v4440 = vpow.pop %v4439
        %v4441 = vmul.f32 %v4426, 1.442695
        %v4442 = vpow.pop %v4441
        %v4443 = vadd.f32 %v4428, 1.0
        %v4444 = vadd.f32 %v4430, 1.0
        %v4445 = vadd.f32 %v4432, 1.0
        %v4446 = vadd.f32 %v4434, 1.0
        %v4447 = vadd.f32 %v4436, 1.0
        %v4448 = vadd.f32 %v4438, 1.0
        %v4449 = vadd.f32 %v4440, 1.0
        %v4450 = vadd.f32 %v4442, 1.0
        %v4451 = vrcp.pop %v4443
        %v4452 = vmul.f32 %v4443, %v4451
        %v4453 = vsub.f32 1.0, %v4452
        %v4454 = vmul.f32 %v4451, %v4453
        %v4455 = vadd.f32 %v4451, %v4454
        %vm4456 = vweird.f32 %v4443
        %vm4457 = vweird.f32 %v4451
        %vm4458 = vmor %vm4456, %vm4457
        %v4459 = vsel %vm4458, %v4451, %v4455
        %v4460 = vand.u32 2147483647, %v4443
        %vm4461 = vcmp.eq.f32.partialorder %v4460, 8.507059e+37
        %v4462 = vand.u32 %v4443, 2147483648
        %v4463 = vor.u32 1.1754944e-38, %v4462
        %v4464 = vsel %vm4461, %v4463, %v4459
        %v4465 = vmul.f32 1.0, %v4464
        %v4466 = vrcp.pop %v4444
        %v4467 = vmul.f32 %v4444, %v4466
        %v4468 = vsub.f32 1.0, %v4467
        %v4469 = vmul.f32 %v4466, %v4468
        %v4470 = vadd.f32 %v4466, %v4469
        %vm4471 = vweird.f32 %v4444
        %vm4472 = vweird.f32 %v4466
        %vm4473 = vmor %vm4471, %vm4472
        %v4474 = vsel %vm4473, %v4466, %v4470
        %v4475 = vand.u32 2147483647, %v4444
        %vm4476 = vcmp.eq.f32.partialorder %v4475, 8.507059e+37
        %v4477 = vand.u32 %v4444, 2147483648
        %v4478 = vor.u32 1.1754944e-38, %v4477
        %v4479 = vsel %vm4476, %v4478, %v4474
        %v4480 = vmul.f32 1.0, %v4479
        %v4481 = vrcp.pop %v4445
        %v4482 = vmul.f32 %v4445, %v4481
        %v4483 = vsub.f32 1.0, %v4482
        %v4484 = vmul.f32 %v4481, %v4483
        %v4485 = vadd.f32 %v4481, %v4484
        %vm4486 = vweird.f32 %v4445
        %vm4487 = vweird.f32 %v4481
        %vm4488 = vmor %vm4486, %vm4487
        %v4489 = vsel %vm4488, %v4481, %v4485
        %v4490 = vand.u32 2147483647, %v4445
        %vm4491 = vcmp.eq.f32.partialorder %v4490, 8.507059e+37
        %v4492 = vand.u32 %v4445, 2147483648
        %v4493 = vor.u32 1.1754944e-38, %v4492
        %v4494 = vsel %vm4491, %v4493, %v4489
        %v4495 = vmul.f32 1.0, %v4494
        %v4496 = vrcp.pop %v4446
        %v4497 = vmul.f32 %v4446, %v4496
        %v4498 = vsub.f32 1.0, %v4497
        %v4499 = vmul.f32 %v4496, %v4498
        %v4500 = vadd.f32 %v4496, %v4499
        %vm4501 = vweird.f32 %v4446
        %vm4502 = vweird.f32 %v4496
        %vm4503 = vmor %vm4501, %vm4502
        %v4504 = vsel %vm4503, %v4496, %v4500
        %v4505 = vand.u32 2147483647, %v4446
        %vm4506 = vcmp.eq.f32.partialorder %v4505, 8.507059e+37
        %v4507 = vand.u32 %v4446, 2147483648
        %v4508 = vor.u32 1.1754944e-38, %v4507
        %v4509 = vsel %vm4506, %v4508, %v4504
        %v4510 = vmul.f32 1.0, %v4509
        %v4511 = vrcp.pop %v4447
        %v4512 = vmul.f32 %v4447, %v4511
        %v4513 = vsub.f32 1.0, %v4512
        %v4514 = vmul.f32 %v4511, %v4513
        %v4515 = vadd.f32 %v4511, %v4514
        %vm4516 = vweird.f32 %v4447
        %vm4517 = vweird.f32 %v4511
        %vm4518 = vmor %vm4516, %vm4517
        %v4519 = vsel %vm4518, %v4511, %v4515
        %v4520 = vand.u32 2147483647, %v4447
        %vm4521 = vcmp.eq.f32.partialorder %v4520, 8.507059e+37
        %v4522 = vand.u32 %v4447, 2147483648
        %v4523 = vor.u32 1.1754944e-38, %v4522
        %v4524 = vsel %vm4521, %v4523, %v4519
        %v4525 = vmul.f32 1.0, %v4524
        %v4526 = vrcp.pop %v4448
        %v4527 = vmul.f32 %v4448, %v4526
        %v4528 = vsub.f32 1.0, %v4527
        %v4529 = vmul.f32 %v4526, %v4528
        %v4530 = vadd.f32 %v4526, %v4529
        %vm4531 = vweird.f32 %v4448
        %vm4532 = vweird.f32 %v4526
        %vm4533 = vmor %vm4531, %vm4532
        %v4534 = vsel %vm4533, %v4526, %v4530
        %v4535 = vand.u32 2147483647, %v4448
        %vm4536 = vcmp.eq.f32.partialorder %v4535, 8.507059e+37
        %v4537 = vand.u32 %v4448, 2147483648
        %v4538 = vor.u32 1.1754944e-38, %v4537
        %v4539 = vsel %vm4536, %v4538, %v4534
        %v4540 = vmul.f32 1.0, %v4539
        %v4541 = vrcp.pop %v4449
        %v4542 = vmul.f32 %v4449, %v4541
        %v4543 = vsub.f32 1.0, %v4542
        %v4544 = vmul.f32 %v4541, %v4543
        %v4545 = vadd.f32 %v4541, %v4544
        %vm4546 = vweird.f32 %v4449
        %vm4547 = vweird.f32 %v4541
        %vm4548 = vmor %vm4546, %vm4547
        %v4549 = vsel %vm4548, %v4541, %v4545
        %v4550 = vand.u32 2147483647, %v4449
        %vm4551 = vcmp.eq.f32.partialorder %v4550, 8.507059e+37
        %v4552 = vand.u32 %v4449, 2147483648
        %v4553 = vor.u32 1.1754944e-38, %v4552
        %v4554 = vsel %vm4551, %v4553, %v4549
        %v4555 = vmul.f32 1.0, %v4554
        %v4556 = vrcp.pop %v4450
        %v4557 = vmul.f32 %v4450, %v4556
        %v4558 = vsub.f32 1.0, %v4557
        %v4559 = vmul.f32 %v4556, %v4558
        %v4560 = vadd.f32 %v4556, %v4559
        %vm4561 = vweird.f32 %v4450
        %vm4562 = vweird.f32 %v4556
        %vm4563 = vmor %vm4561, %vm4562
        %v4564 = vsel %vm4563, %v4556, %v4560
        %v4565 = vand.u32 2147483647, %v4450
        %vm4566 = vcmp.eq.f32.partialorder %v4565, 8.507059e+37
        %v4567 = vand.u32 %v4450, 2147483648
        %v4568 = vor.u32 1.1754944e-38, %v4567
        %v4569 = vsel %vm4566, %v4568, %v4564
        %v4570 = vmul.f32 1.0, %v4569
        %4571 = vst [vmem:[%s398 + $0x1] sm:$0x1] %v2282
        %4572 = vst [vmem:[%s398 + $0x2] sm:$0x7] %v4465
        %4573 = vst [vmem:[%s398 + $0x5] sm:$0x7] 0.0
        %s4574 = scalar_lea.vmem %s398, 8 [#allocation5]
        %4575 = vst [vmem:[%s4574 + $0x1] sm:$0x1] %v2283
        %4576 = vst [vmem:[%s4574 + $0x2] sm:$0x7] %v4480
        %4577 = vst [vmem:[%s4574 + $0x5] sm:$0x7] 0.0
        %s4578 = scalar_lea.vmem %s398, 16 [#allocation5]
        %4579 = vst [vmem:[%s4578 + $0x1] sm:$0x1] %v2284
        %4580 = vst [vmem:[%s4578 + $0x2] sm:$0x7] %v4495
        %4581 = vst [vmem:[%s4578 + $0x5] sm:$0x7] 0.0
        %s4582 = scalar_lea.vmem %s398, 24 [#allocation5]
        %4583 = vst [vmem:[%s4582 + $0x1] sm:$0x1] %v2285
        %4584 = vst [vmem:[%s4582 + $0x2] sm:$0x7] %v4510
        %4585 = vst [vmem:[%s4582 + $0x5] sm:$0x7] 0.0
        %s4586 = scalar_lea.vmem %s398, 32 [#allocation5]
        %4587 = vst [vmem:[%s4586 + $0x1] sm:$0x1] %v2286
        %4588 = vst [vmem:[%s4586 + $0x2] sm:$0x7] %v4525
        %4589 = vst [vmem:[%s4586 + $0x5] sm:$0x7] 0.0
        %s4590 = scalar_lea.vmem %s398, 40 [#allocation5]
        %4591 = vst [vmem:[%s4590 + $0x1] sm:$0x1] %v2287
        %4592 = vst [vmem:[%s4590 + $0x2] sm:$0x7] %v4540
        %4593 = vst [vmem:[%s4590 + $0x5] sm:$0x7] 0.0
        %s4594 = scalar_lea.vmem %s398, 48 [#allocation5]
        %4595 = vst [vmem:[%s4594 + $0x1] sm:$0x1] %v2288
        %4596 = vst [vmem:[%s4594 + $0x2] sm:$0x7] %v4555
        %4597 = vst [vmem:[%s4594 + $0x5] sm:$0x7] 0.0
        %s4598 = scalar_lea.vmem %s398, 56 [#allocation5]
        %4599 = vst [vmem:[%s4598 + $0x1] sm:$0x1] %v2289
        %4600 = vst [vmem:[%s4598 + $0x2] sm:$0x7] %v4570
        %4601 = vst [vmem:[%s4598 + $0x5] sm:$0x7] 0.0
        %4602 = vst [vmem:[%s398] sm:$0x1] %v2282
        %v4603 = vperm.slane %v2282, 0
        %v4604 = vmul.f32 %v4603, %v4465
        %v4605 = vadd.f32 %v4604, 0.0
        %v4606 = vmul.f32 %v2282, 0.0
        %v4607 = vadd.f32 %v4606, 0.0
        %v4608 = vsub.f32 1.0, %v2282
        %v4609 = vmul.f32 %v2283, %v4608
        %4610 = vst [vmem:[%s4574] sm:$0x1] %v4609
        %v4611 = vperm.slane %v4609, 0
        %v4612 = vmul.f32 %v4611, %v4480
        %v4613 = vadd.f32 %v4605, %v4612
        %v4614 = vadd.f32 %v4607, %v4609
        %v4615 = vsub.f32 1.0, %v2283
        %v4616 = vmul.f32 %v4608, %v4615
        %v4617 = vmul.f32 %v2284, %v4616
        %4618 = vst [vmem:[%s4578] sm:$0x1] %v4617
        %v4619 = vperm.slane %v4617, 0
        %v4620 = vmul.f32 %v4619, %v4495
        %v4621 = vadd.f32 %v4613, %v4620
        %v4622 = vmul.f32 %v4617, 2.0
        %v4623 = vadd.f32 %v4614, %v4622
        %v4624 = vsub.f32 1.0, %v2284
        %v4625 = vmul.f32 %v4616, %v4624
        %v4626 = vmul.f32 %v2285, %v4625
        %4627 = vst [vmem:[%s4582] sm:$0x1] %v4626
        %v4628 = vperm.slane %v4626, 0
        %v4629 = vmul.f32 %v4628, %v4510
        %v4630 = vadd.f32 %v4621, %v4629
        %v4631 = vmul.f32 %v4626, 3.0
        %v4632 = vadd.f32 %v4623, %v4631
        %v4633 = vsub.f32 1.0, %v2285
        %v4634 = vmul.f32 %v4625, %v4633
        %v4635 = vmul.f32 %v2286, %v4634
        %4636 = vst [vmem:[%s4586] sm:$0x1] %v4635
        %v4637 = vperm.slane %v4635, 0
        %v4638 = vmul.f32 %v4637, %v4525
        %v4639 = vadd.f32 %v4630, %v4638
        %v4640 = vmul.f32 %v4635, 4.0
        %v4641 = vadd.f32 %v4632, %v4640
        %v4642 = vsub.f32 1.0, %v2286
        %v4643 = vmul.f32 %v4634, %v4642
        %v4644 = vmul.f32 %v2287, %v4643
        %4645 = vst [vmem:[%s4590] sm:$0x1] %v4644
        %v4646 = vperm.slane %v4644, 0
        %v4647 = vmul.f32 %v4646, %v4540
        %v4648 = vadd.f32 %v4639, %v4647
        %v4649 = vmul.f32 %v4644, 5.0
        %v4650 = vadd.f32 %v4641, %v4649
        %v4651 = vsub.f32 1.0, %v2287
        %v4652 = vmul.f32 %v4643, %v4651
        %v4653 = vmul.f32 %v2288, %v4652
        %4654 = vst [vmem:[%s4594] sm:$0x1] %v4653
        %v4655 = vperm.slane %v4653, 0
        %v4656 = vmul.f32 %v4655, %v4555
        %v4657 = vadd.f32 %v4648, %v4656
        %v4658 = vmul.f32 %v4653, 6.0
        %v4659 = vadd.f32 %v4650, %v4658
        %v4660 = vsub.f32 1.0, %v2288
        %v4661 = vmul.f32 %v4652, %v4660
        %v4662 = vmul.f32 %v2289, %v4661
        %4663 = vst [vmem:[%s4598] sm:$0x1] %v4662
        %v4664 = vperm.slane %v4662, 0
        %v4665 = vmul.f32 %v4664, %v4570
        %v4666 = vadd.f32 %v4657, %v4665
        %v4667 = vmul.f32 %v4662, 7.0
        %v4668 = vadd.f32 %v4659, %v4667
        %v4669 = vsub.f32 1.0, %v2289
        %v4670 = vmul.f32 %v4661, %v4669
        %v4671 = vperm.slane %v4670, 0
        %v4672 = vadd.f32 %v4666, %v4671
        %4673 = vst [vmem:[%s405] sm:$0x7] %v4672
        %4674 = vst [vmem:[%s405 + $0x3] sm:$0x1] %v4670
        %4675 = vst [vmem:[%s405 + $0x4] sm:$0x1] %v4668
        %4676 = vst [vmem:[%s405 + $0x5] sm:$0x7] 0.0
        %s4677 = sand.u32 %s238, 1
        %s4678 = scalar_lea.sflag [#allocation4], %s4677
        %s4679 = sand.u32 %s238, 1
        %s4680 = smul.addr %s4679, 64
        %s4681 = scalar_lea.vmem [#allocation5], %s4680
        %s4682 = sand.u32 %s264, 1
        %s4683 = scalar_lea.sflag [#allocation7], %s4682
        %s4684 = sand.u32 %s264, 1
        %s4685 = smul.addr %s4684, 8
        %s4686 = scalar_lea.vmem [#allocation6], %s4685
        // Predicated region
        $region61: #{tpu_custom_call.1} parent=55 // pred_check
          %p4687 = pneg %p248
        $region62: #{tpu_custom_call.1} parent=55 // pred_check_branch
          %4689 = sbr.rel (%p4687) target = $region64
        $region63: #{tpu_custom_call.1} parent=55 // pred_region
          %4691 = vsyncadd %s4678, 0
          %s4692 = smul.addr %s31, 8
          %s4693 = smul.addr %s4692, 8
          %s4694 = scalar_lea.hbm %s9, %s4693
          %s4695 = sshll.u32 %s4681, 4
          %s4696 = int_to_ptr.vmem [resolvable:$true] %s4695
          %s4697 = sshll.u32 %s4694, 4
          %s4698 = int_to_ptr.hbm [resolvable:$true] %s4697
          %4703 = dma.vmem_to_hbm [thread:$0]  %s4696, 1024, %s4698, %s4678, 128, 128, 8
        $region64: #{tpu_custom_call.1} parent=55 // pred_fallthru
          _
        // Predicated region
        $region65: #{tpu_custom_call.1} parent=55 // pred_check
          %p4704 = pneg %p274
        $region66: #{tpu_custom_call.1} parent=55 // pred_check_branch
          %4706 = sbr.rel (%p4704) target = $region68
        $region67: #{tpu_custom_call.1} parent=55 // pred_region
          %4708 = vsyncadd %s4683, 0
          %s4709 = smul.addr %s31, 8
          %s4710 = scalar_lea.hbm %s10, %s4709
          %s4712 = sshll.u32 %s4686, 4
          %s4713 = int_to_ptr.vmem [resolvable:$true] %s4712
          %s4714 = sshll.u32 %s4710, 4
          %s4715 = int_to_ptr.hbm [resolvable:$true] %s4714
          %4717 = dma.vmem_to_hbm [thread:$0]  %s4713, 128, %s4715, %s4683
        $region68: #{tpu_custom_call.1} parent=55 // pred_fallthru
          _
      $region56: #{tpu_custom_call.1} parent=5 // pred_fallthru
        _
      %p4718 = scmp.le.s32.totalorder 2, %s26
      // Predicated region
      $region69: #{tpu_custom_call.1} parent=5 // pred_check
        %p4719 = pneg %p4718
      $region70: #{tpu_custom_call.1} parent=5 // pred_check_branch
        %4721 = sbr.rel (%p4719) target = $region72
      $region71: #{tpu_custom_call.1} parent=5 // pred_region
        %s4722 = ssub.s32 %s26, 2
        // Predicated region
        $region73: #{tpu_custom_call.1} parent=71 // pred_check
          %p4723 = pneg %p254
        $region74: #{tpu_custom_call.1} parent=71 // pred_check_branch
          %4725 = sbr.rel (%p4723) target = $region76
        $region75: #{tpu_custom_call.1} parent=71 // pred_region
          %s4726 = sand.u32 %s239, 1
          %s4727 = scalar_lea.sflag [#allocation4], %s4726
          %s4728 = sand.u32 %s239, 1
          %s4729 = smul.addr %s4728, 64
          %s4730 = scalar_lea.vmem [#allocation5], %s4729
          %4732 = dma.done %s4727, 1024
        $region76: #{tpu_custom_call.1} parent=71 // pred_fallthru
          _
        // Predicated region
        $region77: #{tpu_custom_call.1} parent=71 // pred_check
          %p4733 = pneg %p280
        $region78: #{tpu_custom_call.1} parent=71 // pred_check_branch
          %4735 = sbr.rel (%p4733) target = $region80
        $region79: #{tpu_custom_call.1} parent=71 // pred_region
          %s4736 = sand.u32 %s265, 1
          %s4737 = scalar_lea.sflag [#allocation7], %s4736
          %s4738 = sand.u32 %s265, 1
          %s4739 = smul.addr %s4738, 8
          %s4740 = scalar_lea.vmem [#allocation6], %s4739
          %4742 = dma.done %s4737, 128
        $region80: #{tpu_custom_call.1} parent=71 // pred_fallthru
          _
      $region72: #{tpu_custom_call.1} parent=5 // pred_fallthru
        _
    $region6: #{tpu_custom_call.1} parent=1 // loop_footer
      %s30 = sadd.s32 1, %s26
    $region7: #{tpu_custom_call.1} parent=1 // loop_footer_branch
      %25 = sbr.rel target = $region3
    $region8: #{tpu_custom_call.1} parent=1 // loop_exit
      _
    %4743 = vsyncpa [#allocation3], 1
    %s4744 = scalar_lea.sflag [#allocation3], 1
    %4745 = vsyncpa %s4744, 1
    %4746 = vsyncpa [#allocation4], 1
    %s4747 = scalar_lea.sflag [#allocation4], 1
    %4748 = vsyncpa %s4747, 1
    %4749 = vsyncpa [#allocation7], 1
    %s4750 = scalar_lea.sflag [#allocation7], 1
    %4751 = vsyncpa %s4750, 1

</llo_original>
